<compile_context>
chip_gen: v7x
topology: tpu7x:2x2x1
jax: 0.10.0
libtpu: 0.0.40
codegen_flags: <defaults>
</compile_context>

<pallas_src>
import functools

import jax
import jax.numpy as jnp
import numpy as np
from jax.experimental import pallas as pl
from jax.experimental.pallas import tpu as pltpu

EXPANSION = 4
BN_EPS = 1e-5
LANE = 128
_MiB = 1024 * 1024


def _ru(x, m):
    return (x + m - 1) // m * m


def _pad_to(a, shape):
    pads = tuple((0, s - d) for d, s in zip(a.shape, shape))
    if all(p == (0, 0) for p in pads):
        return a
    return jnp.pad(a, pads)


def _vmem_limit(nbytes):
    # Explicit scoped-VMEM request: cover what we use (+50% pipelining slack),
    # never below the common 32 MiB default, never above 48 MiB (v7x has only
    # 64 MiB physical per TC; v5e's default scoped limit is just 16 MiB so
    # being explicit matters there).
    return int(min(max(int(nbytes * 1.5), 32 * _MiB), 48 * _MiB))


# ---------------------------------------------------------------------------
# Pallas kernels
# ---------------------------------------------------------------------------
def _matmul_bias_kernel(x_ref, w_ref, b_ref, o_ref, *, relu):
    y = jnp.dot(x_ref[...], w_ref[...], preferred_element_type=jnp.float32)
    y = y + b_ref[...]
    if relu:
        y = jnp.maximum(y, 0.0)
    o_ref[...] = y.astype(o_ref.dtype)


def _matmul_bias_res_relu_kernel(x_ref, w_ref, b_ref, r_ref, o_ref):
    y = jnp.dot(x_ref[...], w_ref[...], preferred_element_type=jnp.float32)
    y = y + b_ref[...] + r_ref[...].astype(jnp.float32)
    o_ref[...] = jnp.maximum(y, 0.0).astype(o_ref.dtype)


def _dual_matmul_bias_relu_kernel(h_ref, w1_ref, x_ref, w2_ref, b_ref, o_ref):
    # conv3 + bn3 + projection-shortcut(conv+bn) + add + relu, all fused.
    y = jnp.dot(h_ref[...], w1_ref[...], preferred_element_type=jnp.float32)
    y = y + jnp.dot(x_ref[...], w2_ref[...], preferred_element_type=jnp.float32)
    y = y + b_ref[...]
    o_ref[...] = jnp.maximum(y, 0.0).astype(o_ref.dtype)


def _conv3x3_bias_relu_kernel(x_ref, w_ref, b_ref, o_ref, acc_ref, *,
                              ho, wo, stride):
    """3x3 conv (pad=1, given stride) + folded-BN bias + ReLU.

    x_ref:   (s*s, RH, RW, C)  stride-phase-decomposed, zero-padded input (bf16)
    w_ref:   (9, C, TN)        BN-scale-folded weights (bf16)
    b_ref:   (1, TN)           folded BN bias (f32)
    o_ref:   (1, ho*wo, TN)    FLAT output (bf16) -> lane-dense stores
    acc_ref: (ho*wo, TN) f32   VMEM scratch accumulator

    Each tap (dh, dw) reads a unit-stride window of phase (dh % s, dw % s).
    Width-shifted views are flattened once per (phase, width-offset) and only
    row-sliced per tap, so the expensive (ho,wo,C)->(ho*wo,C) relayout happens
    3x (stride 1) / 6x (stride 2) instead of 9x.
    """
    s = stride
    views = {}  # (phase, ow) -> (RH*wo, C) flattened width-shifted view
    for dh in range(3):
        oh, ph = dh // s, dh % s
        partial = None
        for dw in range(3):
            ow, pw = dw // s, dw % s
            p = ph * s + pw
            key = (p, ow)
            if key not in views:
                v = x_ref[p, :, ow:ow + wo, :]                     # (RH, wo, C)
                views[key] = v.reshape(v.shape[0] * wo, v.shape[-1])
            patch = views[key][oh * wo:oh * wo + ho * wo, :]       # (ho*wo, C)
            t = jnp.dot(patch, w_ref[dh * 3 + dw],
                        preferred_element_type=jnp.float32)
            partial = t if partial is None else partial + t
        if dh == 0:
            acc_ref[...] = partial
        else:
            acc_ref[...] += partial
    y = jnp.maximum(acc_ref[...] + b_ref[...], 0.0)
    o_ref[0] = y.astype(o_ref.dtype)


# ---------------------------------------------------------------------------
# Kernel wrappers
# ---------------------------------------------------------------------------
def _select_tiles(M, K, N, K2, out_bytes, budget=32 * _MiB):
    """Largest (TM, TN) whose double-buffered working set fits the budget."""
    tn_cands = [t for t in (512, 256, 128) if N % t == 0]
    tm_cands = [t for t in (1024, 512, 256, 128) if t <= max(128, _ru(M, 128))]

    def need(tm, tn):
        b = 2 * (tm * K * 2 + K * tn * 2 + tn * 4 + tm * tn * out_bytes)
        if K2:
            b += 2 * (tm * K2 * 2 + K2 * tn * 2)
        return b

    for tn in tn_cands:
        for tm in tm_cands:
            if need(tm, tn) <= budget:
                return tm, tn, need(tm, tn)
    return 128, tn_cands[-1], need(128, tn_cands[-1])


def fused_matmul_bias(x, w, bias, *, x2=None, w2=None, residual=None,
                      relu=True, out_dtype=jnp.bfloat16):
    """act(x @ w + bias [+ x2 @ w2] [+ residual]).

    x: (M, K) bf16, w: (K, N) bf16, bias: (1, N) f32.  K and N must already be
    padded to multiples of 128 (zero-padded weights keep the math exact).
    M is padded internally to the row-tile size and sliced back afterwards.
    """
    M, K = x.shape
    N = w.shape[1]
    assert K % LANE == 0 and N % LANE == 0
    K2 = x2.shape[1] if x2 is not None else 0
    TM, TN, vneed = _select_tiles(M, K, N, K2, jnp.dtype(out_dtype).itemsize)
    Mp = _ru(M, TM)

    def pad_rows(a):
        return a if a.shape[0] == Mp else jnp.pad(a, ((0, Mp - a.shape[0]), (0, 0)))

    grid = (Mp // TM, N // TN)
    x_spec = pl.BlockSpec((TM, K), lambda i, j: (i, 0))
    w_spec = pl.BlockSpec((K, TN), lambda i, j: (0, j))
    b_spec = pl.BlockSpec((1, TN), lambda i, j: (0, j))
    o_spec = pl.BlockSpec((TM, TN), lambda i, j: (i, j))

    flops = 2 * Mp * K * N + 2 * Mp * N
    nbytes = (Mp * K + K * N) * 2 + N * 4 + Mp * N * jnp.dtype(out_dtype).itemsize

    if x2 is not None:
        assert K2 % LANE == 0 and w2.shape == (K2, N)
        kern = _dual_matmul_bias_relu_kernel
        in_specs = [x_spec, w_spec,
                    pl.BlockSpec((TM, K2), lambda i, j: (i, 0)),
                    pl.BlockSpec((K2, TN), lambda i, j: (0, j)),
                    b_spec]
        args = (pad_rows(x), w, pad_rows(x2), w2, bias)
        flops += 2 * Mp * K2 * N
        nbytes += (Mp * K2 + K2 * N) * 2
    elif residual is not None:
        kern = _matmul_bias_res_relu_kernel
        in_specs = [x_spec, w_spec, b_spec, o_spec]
        args = (pad_rows(x), w, bias, pad_rows(residual))
        nbytes += Mp * N * 2
    else:
        kern = functools.partial(_matmul_bias_kernel, relu=relu)
        in_specs = [x_spec, w_spec, b_spec]
        args = (pad_rows(x), w, bias)

    out = pl.pallas_call(
        kern,
        out_shape=jax.ShapeDtypeStruct((Mp, N), out_dtype),
        grid_spec=pltpu.PrefetchScalarGridSpec(
            num_scalar_prefetch=0, grid=grid,
            in_specs=in_specs, out_specs=o_spec),
        compiler_params=pltpu.CompilerParams(
            dimension_semantics=("parallel", "parallel"),
            vmem_limit_bytes=_vmem_limit(vneed)),
        cost_estimate=pl.CostEstimate(flops=int(flops), transcendentals=0,
                                      bytes_accessed=int(nbytes)),
    )(*args)
    return out if Mp == M else out[:M]


def _phase_split(x_nhwc, stride):
    """Zero-pad by 1 and split into stride**2 spatial phases.

    Returns (N*s*s, RH, RW, C); tap (dh, dw) of the 3x3/stride-s conv reads the
    *unit-stride* window [dh//s : dh//s+Ho, dw//s : dw//s+Wo] of phase
    (dh % s, dw % s).  For stride==1 the padded array itself is the single
    phase (no extra copy pass).
    """
    N, H, W, C = x_nhwc.shape
    s = stride
    assert s in (1, 2), "Bottleneck only uses stride 1 or 2"
    ho = (H - 1) // s + 1
    wo = (W - 1) // s + 1
    rh = ho + (2 // s)
    rw = wo + (2 // s)
    xp = jnp.pad(x_nhwc, ((0, 0), (1, 1), (1, 1), (0, 0)))
    if s == 1:
        return xp, ho, wo                       # (N, H+2, W+2, C), single phase
    phases = []
    for a in range(s):
        for b in range(s):
            ph = xp[:, a::s, b::s, :][:, :rh, :rw, :]
            ph = jnp.pad(ph, ((0, 0), (0, rh - ph.shape[1]),
                              (0, rw - ph.shape[2]), (0, 0)))
            phases.append(ph)
    xph = jnp.stack(phases, axis=1).reshape(N * s * s, rh, rw, C)
    return xph, ho, wo


def conv3x3_bn_relu(x_nhwc, w9, bias, stride):
    """x_nhwc: (N,H,W,Cp) bf16 (channels pre-padded to 128-multiples),
    w9: (9, Cp, Np) bf16 BN-scaled weights, bias: (1, Np) f32.
    Returns FLAT (N, Ho*Wo, Np) bf16 plus (Ho, Wo)."""
    N = x_nhwc.shape[0]
    C = x_nhwc.shape[3]
    s = stride
    xph, ho, wo = _phase_split(x_nhwc, s)
    rh, rw = xph.shape[-3], xph.shape[-2]
    Nc = w9.shape[2]
    TN = 512 if Nc % 512 == 0 else (256 if Nc % 256 == 0 else 128)
    grid = (N, Nc // TN)

    kern = functools.partial(_conv3x3_bias_relu_kernel, ho=ho, wo=wo, stride=s)

    vneed = (2 * (s * s * rh * rw * C * 2) + 2 * (9 * C * TN * 2)
             + 2 * TN * 4 + ho * wo * TN * 4 + 2 * (ho * wo * TN * 2))

    out = pl.pallas_call(
        kern,
        out_shape=jax.ShapeDtypeStruct((N, ho * wo, Nc), jnp.bfloat16),
        grid_spec=pltpu.PrefetchScalarGridSpec(
            num_scalar_prefetch=0,
            grid=grid,
            in_specs=[
                pl.BlockSpec((s * s, rh, rw, C), lambda n, j: (n, 0, 0, 0)),
                pl.BlockSpec((9, C, TN), lambda n, j: (0, 0, j)),
                pl.BlockSpec((1, TN), lambda n, j: (0, j)),
            ],
            out_specs=pl.BlockSpec((1, ho * wo, TN), lambda n, j: (n, 0, j)),
            scratch_shapes=[pltpu.VMEM((ho * wo, TN), jnp.float32)]),
        compiler_params=pltpu.CompilerParams(
            dimension_semantics=("parallel", "parallel"),
            vmem_limit_bytes=_vmem_limit(vneed)),
        cost_estimate=pl.CostEstimate(
            flops=int(2 * N * ho * wo * 9 * C * Nc),
            transcendentals=0,
            bytes_accessed=int(xph.size * 2 + w9.size * 2 + bias.size * 4
                               + N * ho * wo * Nc * 2)),
    )(xph, w9, bias)
    return out, ho, wo


# ---------------------------------------------------------------------------
# Bottleneck forward (eval-mode BN folded into weights + bias)
# ---------------------------------------------------------------------------
def _fold_bn(bn_params):
    gamma, beta, mean, var = bn_params
    scale = gamma / jnp.sqrt(var + BN_EPS)
    bias = beta - mean * scale
    return scale, bias


def bottleneck_forward(x_nchw, params, stride=1):
    """Pallas implementation of Bottleneck.forward (inference-mode BN)."""
    N, Cin, H, W = x_nchw.shape
    planes = params["conv1"].shape[0]
    Cout = params["conv3"].shape[0]
    cin_p, pln_p, cout_p = _ru(Cin, LANE), _ru(planes, LANE), _ru(Cout, LANE)

    # NHWC + bf16 straight away (halves every subsequent wrapper HBM pass).
    x = jnp.transpose(x_nchw, (0, 2, 3, 1)).astype(jnp.bfloat16)

    s1, b1 = _fold_bn(params["bn1"])
    s2, b2 = _fold_bn(params["bn2"])
    s3, b3 = _fold_bn(params["bn3"])

    # Fold BN scale into the weights once; kernels only add the bias.
    w1 = params["conv1"][:, :, 0, 0].T * s1[None, :]              # (Cin, planes)
    w1 = _pad_to(w1, (cin_p, pln_p)).astype(jnp.bfloat16)
    b1p = _pad_to(b1.reshape(1, -1), (1, pln_p))                  # f32

    w2 = jnp.transpose(params["conv2"], (2, 3, 1, 0)) * s2[None, None, None, :]
    w2 = _pad_to(w2.reshape(9, planes, planes), (9, pln_p, pln_p)).astype(jnp.bfloat16)
    b2p = _pad_to(b2.reshape(1, -1), (1, pln_p))

    w3 = params["conv3"][:, :, 0, 0].T * s3[None, :]              # (planes, Cout)
    w3 = _pad_to(w3, (pln_p, cout_p)).astype(jnp.bfloat16)

    # ---- stage 1: conv1 (1x1) + bn1 + relu -------------------------------
    x2d = _pad_to(x.reshape(N * H * W, Cin), (N * H * W, cin_p))
    h = fused_matmul_bias(x2d, w1, b1p, relu=True, out_dtype=jnp.bfloat16)
    h = h.reshape(N, H, W, pln_p)

    # ---- stage 2: conv2 (3x3, stride, pad=1) + bn2 + relu (in-kernel taps)
    h_flat, ho, wo = conv3x3_bn_relu(h, w2, b2p, stride)          # (N, ho*wo, pln_p)
    h2d = h_flat.reshape(N * ho * wo, pln_p)

    # ---- stage 3: conv3 (1x1) + bn3 + shortcut + relu, single fused kernel
    if stride != 1 or Cin != Cout:
        ss, bs = _fold_bn(params["sc_bn"])
        ws = params["sc_conv"][:, :, 0, 0].T * ss[None, :]        # (Cin, Cout)
        ws = _pad_to(ws, (cin_p, cout_p)).astype(jnp.bfloat16)
        b_tot = _pad_to((b3 + bs).reshape(1, -1), (1, cout_p))
        xs = x[:, ::stride, ::stride, :].reshape(N * ho * wo, Cin)
        xs = _pad_to(xs, (N * ho * wo, cin_p))
        out2d = fused_matmul_bias(h2d, w3, b_tot, x2=xs, w2=ws,
                                  relu=True, out_dtype=jnp.bfloat16)
    else:
        b3p = _pad_to(b3.reshape(1, -1), (1, cout_p))
        out2d = fused_matmul_bias(h2d, w3, b3p, residual=x2d,     # identity shortcut
                                  relu=True, out_dtype=jnp.bfloat16)

    out = out2d[:, :Cout].reshape(N, ho, wo, Cout)
    return jnp.transpose(out, (0, 3, 1, 2)).astype(jnp.float32)   # back to NCHW


# ---------------------------------------------------------------------------
# Deterministic parameter init + pure-JAX reference
# ---------------------------------------------------------------------------
def init_params(key, in_planes, planes):
    cout = EXPANSION * planes
    keys = jax.random.split(key, 32)                              # 20 needed
    k = iter(keys)

    def conv_w(o, i, kh, kw):
        return 0.1 * jax.random.normal(next(k), (o, i, kh, kw), jnp.float32)

    def bn_p(c):
        gamma = 1.0 + 0.1 * jax.random.normal(next(k), (c,), jnp.float32)
        beta = 0.1 * jax.random.normal(next(k), (c,), jnp.float32)
        mean = 0.05 * jax.random.normal(next(k), (c,), jnp.float32)
        var = 0.5 + jnp.abs(jax.random.normal(next(k), (c,), jnp.float32)) * 0.1
        return (gamma, beta, mean, var)

    return {
        "conv1": conv_w(planes, in_planes, 1, 1), "bn1": bn_p(planes),
        "conv2": conv_w(planes, planes, 3, 3),    "bn2": bn_p(planes),
        "conv3": conv_w(cout, planes, 1, 1),      "bn3": bn_p(cout),
        "sc_conv": conv_w(cout, in_planes, 1, 1), "sc_bn": bn_p(cout),
    }


def reference_forward(x_nchw, params, stride=1):
    def bn(x, p):
        gamma, beta, mean, var = p
        inv = gamma / jnp.sqrt(var + BN_EPS)
        return x * inv[None, :, None, None] + (beta - mean * inv)[None, :, None, None]

    def conv(x, w, s=1, pad=0):
        return jax.lax.conv_general_dilated(
            x, w, (s, s), [(pad, pad), (pad, pad)],
            dimension_numbers=("NCHW", "OIHW", "NCHW"))

    Cin = x_nchw.shape[1]
    Cout = params["conv3"].shape[0]
    out = jax.nn.relu(bn(conv(x_nchw, params["conv1"]), params["bn1"]))
    out = jax.nn.relu(bn(conv(out, params["conv2"], stride, 1), params["bn2"]))
    out = bn(conv(out, params["conv3"]), params["bn3"])
    if stride != 1 or Cin != Cout:
        sc = bn(conv(x_nchw, params["sc_conv"], stride), params["sc_bn"])
    else:
        sc = x_nchw
    return jax.nn.relu(out + sc)


# ---------------------------------------------------------------------------
if __name__ == "__main__":
    key = jax.random.PRNGKey(0)
    k_x1, k_p1, k_x2, k_p2 = jax.random.split(key, 4)

    fwd = jax.jit(bottleneck_forward, static_argnames=("stride",))

    # Projection-shortcut configs (stride 1 and 2).
    x = jax.random.normal(k_x1, (2, 4, 16, 16), jnp.float32)      # NCHW, like torch
    params = init_params(k_p1, 4, 4)                              # cout = 16
    for stride in (1, 2):
        out = jax.block_until_ready(fwd(x, params, stride=stride))
        ref = jax.block_until_ready(reference_forward(x, params, stride=stride))
        assert out.shape == ref.shape, (out.shape, ref.shape)
        np.testing.assert_allclose(np.asarray(out), np.asarray(ref),
                                   rtol=2e-2, atol=2e-2)           # bf16 activations

    # Identity-shortcut config (in_planes == expansion * planes, stride 1).
    x_id = jax.random.normal(k_x2, (2, 16, 8, 8), jnp.float32)
    params_id = init_params(k_p2, 16, 4)
    out = jax.block_until_ready(fwd(x_id, params_id, stride=1))
    ref = jax.block_until_ready(reference_forward(x_id, params_id, stride=1))
    assert out.shape == ref.shape, (out.shape, ref.shape)
    np.testing.assert_allclose(np.asarray(out), np.asarray(ref),
                               rtol=2e-2, atol=2e-2)

    print("KERNEL_OK")
</pallas_src>

<mosaic_0001>
module attributes {stable_mosaic.version = 11 : i64} {
  func.func @_matmul_bias_kernel(%arg0: i32, %arg1: i32, %arg2: memref<512x128xbf16, #tpu.memory_space<vmem>>, %arg3: memref<128x128xbf16, #tpu.memory_space<vmem>>, %arg4: memref<1x128xf32, #tpu.memory_space<vmem>>, %arg5: memref<512x128xbf16, #tpu.memory_space<vmem>>) attributes {dimension_semantics = [#tpu.dimension_semantics<parallel>, #tpu.dimension_semantics<parallel>], iteration_bounds = array<i64: 1, 1>, scalar_prefetch = 0 : i64, scratch_operands = 0 : i64, tpu.core_type = #tpu.core_type<tc>, window_params = [{transform_indices = @transform_0, window_bounds = array<i64: 512, 128>}, {transform_indices = @transform_1, window_bounds = array<i64: 128, 128>}, {transform_indices = @transform_2, window_bounds = array<i64: 1, 128>}, {transform_indices = @transform_3, window_bounds = array<i64: 512, 128>}]} {
    %c0 = arith.constant 0 : index
    %c0_0 = arith.constant 0 : index
    %0 = vector.load %arg2[%c0, %c0_0] : memref<512x128xbf16, #tpu.memory_space<vmem>>, vector<512x128xbf16>
    %c0_1 = arith.constant 0 : index
    %c0_2 = arith.constant 0 : index
    %1 = vector.load %arg3[%c0_1, %c0_2] : memref<128x128xbf16, #tpu.memory_space<vmem>>, vector<128x128xbf16>
    %cst = arith.constant dense<0.000000e+00> : vector<512x128xf32>
    %2 = tpu.matmul %0, %1, %cst {dimension_numbers = #tpu.dot_dimension_numbers<[1], [0], [0], [1], [0, 0, 1, 1], [], []>} : vector<512x128xbf16>, vector<128x128xbf16>, vector<512x128xf32> -> vector<512x128xf32>
    %c0_3 = arith.constant 0 : index
    %c0_4 = arith.constant 0 : index
    %3 = vector.load %arg4[%c0_3, %c0_4] : memref<1x128xf32, #tpu.memory_space<vmem>>, vector<1x128xf32>
    %4 = vector.broadcast %3 : vector<1x128xf32> to vector<512x128xf32>
    %5 = arith.addf %2, %4 : vector<512x128xf32>
    %cst_5 = arith.constant 0.000000e+00 : f32
    %6 = vector.broadcast %cst_5 : f32 to vector<512x128xf32>
    %7 = arith.maximumf %5, %6 : vector<512x128xf32>
    %8 = arith.truncf %7 : vector<512x128xf32> to vector<512x128xbf16>
    %c0_6 = arith.constant 0 : index
    %c0_7 = arith.constant 0 : index
    %9 = vector.load %arg5[%c0_6, %c0_7] : memref<512x128xbf16, #tpu.memory_space<vmem>>, vector<512x128xbf16>
    tpu.vector_store %arg5[%c0_6, %c0_7], %8 {strides = array<i32>} : memref<512x128xbf16, #tpu.memory_space<vmem>>, vector<512x128xbf16>,
    return
  }
  func.func @transform_0(%arg0: i32, %arg1: i32) -> (i32, i32) {
    %c0_i32 = arith.constant 0 : i32
    %c0_i32_0 = arith.constant 0 : i32
    return %arg0, %c0_i32 : i32, i32
  }
  func.func @transform_1(%arg0: i32, %arg1: i32) -> (i32, i32) {
    %c0_i32 = arith.constant 0 : i32
    %c0_i32_0 = arith.constant 0 : i32
    return %c0_i32, %arg1 : i32, i32
  }
  func.func @transform_2(%arg0: i32, %arg1: i32) -> (i32, i32) {
    %c0_i32 = arith.constant 0 : i32
    %c0_i32_0 = arith.constant 0 : i32
    return %c0_i32, %arg1 : i32, i32
  }
  func.func @transform_3(%arg0: i32, %arg1: i32) -> (i32, i32) {
    %c0_i32 = arith.constant 0 : i32
    return %arg0, %arg1 : i32, i32
  }
}

module attributes {stable_mosaic.version = 11 : i64} {
  func.func @_conv3x3_bias_relu_kernel(%arg0: i32, %arg1: i32, %arg2: memref<1x18x18x128xbf16, #tpu.memory_space<vmem>>, %arg3: memref<9x128x128xbf16, #tpu.memory_space<vmem>>, %arg4: memref<1x128xf32, #tpu.memory_space<vmem>>, %arg5: memref<1x256x128xbf16, #tpu.memory_space<vmem>>, %arg6: memref<256x128xf32, #tpu.memory_space<vmem>>) attributes {dimension_semantics = [#tpu.dimension_semantics<parallel>, #tpu.dimension_semantics<parallel>], iteration_bounds = array<i64: 2, 1>, scalar_prefetch = 0 : i64, scratch_operands = 1 : i64, tpu.core_type = #tpu.core_type<tc>, window_params = [{transform_indices = @transform_0, window_bounds = array<i64: 1, 18, 18, 128>}, {transform_indices = @transform_1, window_bounds = array<i64: 9, 128, 128>}, {transform_indices = @transform_2, window_bounds = array<i64: 1, 128>}, {transform_indices = @transform_3, window_bounds = array<i64: 1, 256, 128>}]} {
    %c0 = arith.constant 0 : index
    %c0_0 = arith.constant 0 : index
    %c0_1 = arith.constant 0 : index
    %c0_2 = arith.constant 0 : index
    %0 = vector.load %arg2[%c0, %c0_0, %c0_1, %c0_2] : memref<1x18x18x128xbf16, #tpu.memory_space<vmem>>, vector<1x18x16x128xbf16>
    %1 = vector.shape_cast %0 : vector<1x18x16x128xbf16> to vector<18x16x128xbf16>
    %2 = vector.shape_cast %1 : vector<18x16x128xbf16> to vector<288x128xbf16>
    %3 = vector.extract_strided_slice %2 {offsets = [0, 0], sizes = [256, 128], strides = [1, 1]} : vector<288x128xbf16> to vector<256x128xbf16>
    %c0_3 = arith.constant 0 : index
    %c0_4 = arith.constant 0 : index
    %c0_5 = arith.constant 0 : index
    %4 = vector.load %arg3[%c0_3, %c0_4, %c0_5] : memref<9x128x128xbf16, #tpu.memory_space<vmem>>, vector<1x128x128xbf16>
    %5 = vector.shape_cast %4 : vector<1x128x128xbf16> to vector<128x128xbf16>
    %cst = arith.constant dense<0.000000e+00> : vector<256x128xf32>
    %6 = tpu.matmul %3, %5, %cst {dimension_numbers = #tpu.dot_dimension_numbers<[1], [0], [0], [1], [0, 0, 1, 1], [], []>} : vector<256x128xbf16>, vector<128x128xbf16>, vector<256x128xf32> -> vector<256x128xf32>
    %c0_6 = arith.constant 0 : index
    %c0_7 = arith.constant 0 : index
    %c1 = arith.constant 1 : index
    %c0_8 = arith.constant 0 : index
    %7 = vector.load %arg2[%c0_6, %c0_7, %c1, %c0_8] : memref<1x18x18x128xbf16, #tpu.memory_space<vmem>>, vector<1x18x16x128xbf16>
    %8 = vector.shape_cast %7 : vector<1x18x16x128xbf16> to vector<18x16x128xbf16>
    %9 = vector.shape_cast %8 : vector<18x16x128xbf16> to vector<288x128xbf16>
    %10 = vector.extract_strided_slice %9 {offsets = [0, 0], sizes = [256, 128], strides = [1, 1]} : vector<288x128xbf16> to vector<256x128xbf16>
    %c1_9 = arith.constant 1 : index
    %c0_10 = arith.constant 0 : index
    %c0_11 = arith.constant 0 : index
    %11 = vector.load %arg3[%c1_9, %c0_10, %c0_11] : memref<9x128x128xbf16, #tpu.memory_space<vmem>>, vector<1x128x128xbf16>
    %12 = vector.shape_cast %11 : vector<1x128x128xbf16> to vector<128x128xbf16>
    %cst_12 = arith.constant dense<0.000000e+00> : vector<256x128xf32>
    %13 = tpu.matmul %10, %12, %cst_12 {dimension_numbers = #tpu.dot_dimension_numbers<[1], [0], [0], [1], [0, 0, 1, 1], [], []>} : vector<256x128xbf16>, vector<128x128xbf16>, vector<256x128xf32> -> vector<256x128xf32>
    %14 = arith.addf %6, %13 : vector<256x128xf32>
    %c0_13 = arith.constant 0 : index
    %c0_14 = arith.constant 0 : index
    %c2 = arith.constant 2 : index
    %c0_15 = arith.constant 0 : index
    %15 = vector.load %arg2[%c0_13, %c0_14, %c2, %c0_15] : memref<1x18x18x128xbf16, #tpu.memory_space<vmem>>, vector<1x18x16x128xbf16>
    %16 = vector.shape_cast %15 : vector<1x18x16x128xbf16> to vector<18x16x128xbf16>
    %17 = vector.shape_cast %16 : vector<18x16x128xbf16> to vector<288x128xbf16>
    %18 = vector.extract_strided_slice %17 {offsets = [0, 0], sizes = [256, 128], strides = [1, 1]} : vector<288x128xbf16> to vector<256x128xbf16>
    %c2_16 = arith.constant 2 : index
    %c0_17 = arith.constant 0 : index
    %c0_18 = arith.constant 0 : index
    %19 = vector.load %arg3[%c2_16, %c0_17, %c0_18] : memref<9x128x128xbf16, #tpu.memory_space<vmem>>, vector<1x128x128xbf16>
    %20 = vector.shape_cast %19 : vector<1x128x128xbf16> to vector<128x128xbf16>
    %cst_19 = arith.constant dense<0.000000e+00> : vector<256x128xf32>
    %21 = tpu.matmul %18, %20, %cst_19 {dimension_numbers = #tpu.dot_dimension_numbers<[1], [0], [0], [1], [0, 0, 1, 1], [], []>} : vector<256x128xbf16>, vector<128x128xbf16>, vector<256x128xf32> -> vector<256x128xf32>
    %22 = arith.addf %14, %21 : vector<256x128xf32>
    %c0_20 = arith.constant 0 : index
    %c0_21 = arith.constant 0 : index
    %23 = vector.load %arg6[%c0_20, %c0_21] : memref<256x128xf32, #tpu.memory_space<vmem>>, vector<256x128xf32>
    tpu.vector_store %arg6[%c0_20, %c0_21], %22 {strides = array<i32>} : memref<256x128xf32, #tpu.memory_space<vmem>>, vector<256x128xf32>,
    %24 = vector.extract_strided_slice %2 {offsets = [16, 0], sizes = [256, 128], strides = [1, 1]} : vector<288x128xbf16> to vector<256x128xbf16>
    %c3 = arith.constant 3 : index
    %c0_22 = arith.constant 0 : index
    %c0_23 = arith.constant 0 : index
    %25 = vector.load %arg3[%c3, %c0_22, %c0_23] : memref<9x128x128xbf16, #tpu.memory_space<vmem>>, vector<1x128x128xbf16>
    %26 = vector.shape_cast %25 : vector<1x128x128xbf16> to vector<128x128xbf16>
    %cst_24 = arith.constant dense<0.000000e+00> : vector<256x128xf32>
    %27 = tpu.matmul %24, %26, %cst_24 {dimension_numbers = #tpu.dot_dimension_numbers<[1], [0], [0], [1], [0, 0, 1, 1], [], []>} : vector<256x128xbf16>, vector<128x128xbf16>, vector<256x128xf32> -> vector<256x128xf32>
    %28 = vector.extract_strided_slice %9 {offsets = [16, 0], sizes = [256, 128], strides = [1, 1]} : vector<288x128xbf16> to vector<256x128xbf16>
    %c4 = arith.constant 4 : index
    %c0_25 = arith.constant 0 : index
    %c0_26 = arith.constant 0 : index
    %29 = vector.load %arg3[%c4, %c0_25, %c0_26] : memref<9x128x128xbf16, #tpu.memory_space<vmem>>, vector<1x128x128xbf16>
    %30 = vector.shape_cast %29 : vector<1x128x128xbf16> to vector<128x128xbf16>
    %cst_27 = arith.constant dense<0.000000e+00> : vector<256x128xf32>
    %31 = tpu.matmul %28, %30, %cst_27 {dimension_numbers = #tpu.dot_dimension_numbers<[1], [0], [0], [1], [0, 0, 1, 1], [], []>} : vector<256x128xbf16>, vector<128x128xbf16>, vector<256x128xf32> -> vector<256x128xf32>
    %32 = arith.addf %27, %31 : vector<256x128xf32>
    %33 = vector.extract_strided_slice %17 {offsets = [16, 0], sizes = [256, 128], strides = [1, 1]} : vector<288x128xbf16> to vector<256x128xbf16>
    %c5 = arith.constant 5 : index
    %c0_28 = arith.constant 0 : index
    %c0_29 = arith.constant 0 : index
    %34 = vector.load %arg3[%c5, %c0_28, %c0_29] : memref<9x128x128xbf16, #tpu.memory_space<vmem>>, vector<1x128x128xbf16>
    %35 = vector.shape_cast %34 : vector<1x128x128xbf16> to vector<128x128xbf16>
    %cst_30 = arith.constant dense<0.000000e+00> : vector<256x128xf32>
    %36 = tpu.matmul %33, %35, %cst_30 {dimension_numbers = #tpu.dot_dimension_numbers<[1], [0], [0], [1], [0, 0, 1, 1], [], []>} : vector<256x128xbf16>, vector<128x128xbf16>, vector<256x128xf32> -> vector<256x128xf32>
    %37 = arith.addf %32, %36 : vector<256x128xf32>
    %c0_31 = arith.constant 0 : index
    %c0_32 = arith.constant 0 : index
    %38 = vector.load %arg6[%c0_31, %c0_32] : memref<256x128xf32, #tpu.memory_space<vmem>>, vector<256x128xf32>
    %39 = arith.addf %38, %37 : vector<256x128xf32>
    %c0_33 = arith.constant 0 : index
    %c0_34 = arith.constant 0 : index
    %40 = vector.load %arg6[%c0_33, %c0_34] : memref<256x128xf32, #tpu.memory_space<vmem>>, vector<256x128xf32>
    tpu.vector_store %arg6[%c0_33, %c0_34], %39 {strides = array<i32>} : memref<256x128xf32, #tpu.memory_space<vmem>>, vector<256x128xf32>,
    %41 = vector.extract_strided_slice %2 {offsets = [32, 0], sizes = [256, 128], strides = [1, 1]} : vector<288x128xbf16> to vector<256x128xbf16>
    %c6 = arith.constant 6 : index
    %c0_35 = arith.constant 0 : index
    %c0_36 = arith.constant 0 : index
    %42 = vector.load %arg3[%c6, %c0_35, %c0_36] : memref<9x128x128xbf16, #tpu.memory_space<vmem>>, vector<1x128x128xbf16>
    %43 = vector.shape_cast %42 : vector<1x128x128xbf16> to vector<128x128xbf16>
    %cst_37 = arith.constant dense<0.000000e+00> : vector<256x128xf32>
    %44 = tpu.matmul %41, %43, %cst_37 {dimension_numbers = #tpu.dot_dimension_numbers<[1], [0], [0], [1], [0, 0, 1, 1], [], []>} : vector<256x128xbf16>, vector<128x128xbf16>, vector<256x128xf32> -> vector<256x128xf32>
    %45 = vector.extract_strided_slice %9 {offsets = [32, 0], sizes = [256, 128], strides = [1, 1]} : vector<288x128xbf16> to vector<256x128xbf16>
    %c7 = arith.constant 7 : index
    %c0_38 = arith.constant 0 : index
    %c0_39 = arith.constant 0 : index
    %46 = vector.load %arg3[%c7, %c0_38, %c0_39] : memref<9x128x128xbf16, #tpu.memory_space<vmem>>, vector<1x128x128xbf16>
    %47 = vector.shape_cast %46 : vector<1x128x128xbf16> to vector<128x128xbf16>
    %cst_40 = arith.constant dense<0.000000e+00> : vector<256x128xf32>
    %48 = tpu.matmul %45, %47, %cst_40 {dimension_numbers = #tpu.dot_dimension_numbers<[1], [0], [0], [1], [0, 0, 1, 1], [], []>} : vector<256x128xbf16>, vector<128x128xbf16>, vector<256x128xf32> -> vector<256x128xf32>
    %49 = arith.addf %44, %48 : vector<256x128xf32>
    %50 = vector.extract_strided_slice %17 {offsets = [32, 0], sizes = [256, 128], strides = [1, 1]} : vector<288x128xbf16> to vector<256x128xbf16>
    %c8 = arith.constant 8 : index
    %c0_41 = arith.constant 0 : index
    %c0_42 = arith.constant 0 : index
    %51 = vector.load %arg3[%c8, %c0_41, %c0_42] : memref<9x128x128xbf16, #tpu.memory_space<vmem>>, vector<1x128x128xbf16>
    %52 = vector.shape_cast %51 : vector<1x128x128xbf16> to vector<128x128xbf16>
    %cst_43 = arith.constant dense<0.000000e+00> : vector<256x128xf32>
    %53 = tpu.matmul %50, %52, %cst_43 {dimension_numbers = #tpu.dot_dimension_numbers<[1], [0], [0], [1], [0, 0, 1, 1], [], []>} : vector<256x128xbf16>, vector<128x128xbf16>, vector<256x128xf32> -> vector<256x128xf32>
    %54 = arith.addf %49, %53 : vector<256x128xf32>
    %c0_44 = arith.constant 0 : index
    %c0_45 = arith.constant 0 : index
    %55 = vector.load %arg6[%c0_44, %c0_45] : memref<256x128xf32, #tpu.memory_space<vmem>>, vector<256x128xf32>
    %56 = arith.addf %55, %54 : vector<256x128xf32>
    %c0_46 = arith.constant 0 : index
    %c0_47 = arith.constant 0 : index
    %57 = vector.load %arg6[%c0_46, %c0_47] : memref<256x128xf32, #tpu.memory_space<vmem>>, vector<256x128xf32>
    tpu.vector_store %arg6[%c0_46, %c0_47], %56 {strides = array<i32>} : memref<256x128xf32, #tpu.memory_space<vmem>>, vector<256x128xf32>,
    %c0_48 = arith.constant 0 : index
    %c0_49 = arith.constant 0 : index
    %58 = vector.load %arg6[%c0_48, %c0_49] : memref<256x128xf32, #tpu.memory_space<vmem>>, vector<256x128xf32>
    %c0_50 = arith.constant 0 : index
    %c0_51 = arith.constant 0 : index
    %59 = vector.load %arg4[%c0_50, %c0_51] : memref<1x128xf32, #tpu.memory_space<vmem>>, vector<1x128xf32>
    %60 = vector.broadcast %59 : vector<1x128xf32> to vector<256x128xf32>
    %61 = arith.addf %58, %60 : vector<256x128xf32>
    %cst_52 = arith.constant 0.000000e+00 : f32
    %62 = vector.broadcast %cst_52 : f32 to vector<256x128xf32>
    %63 = arith.maximumf %61, %62 : vector<256x128xf32>
    %64 = arith.truncf %63 : vector<256x128xf32> to vector<256x128xbf16>
    %c0_53 = arith.constant 0 : index
    %c0_54 = arith.constant 0 : index
    %c0_55 = arith.constant 0 : index
    %65 = vector.load %arg5[%c0_53, %c0_54, %c0_55] : memref<1x256x128xbf16, #tpu.memory_space<vmem>>, vector<1x256x128xbf16>
    %66 = vector.shape_cast %65 : vector<1x256x128xbf16> to vector<256x128xbf16>
    %67 = vector.shape_cast %64 : vector<256x128xbf16> to vector<1x256x128xbf16>
    tpu.vector_store %arg5[%c0_53, %c0_54, %c0_55], %67 {strides = array<i32>} : memref<1x256x128xbf16, #tpu.memory_space<vmem>>, vector<1x256x128xbf16>,
    return
  }
  func.func @transform_0(%arg0: i32, %arg1: i32) -> (i32, i32, i32, i32) {
    %c0_i32 = arith.constant 0 : i32
    %c0_i32_0 = arith.constant 0 : i32
    %c0_i32_1 = arith.constant 0 : i32
    %c0_i32_2 = arith.constant 0 : i32
    return %arg0, %c0_i32, %c0_i32_0, %c0_i32_1 : i32, i32, i32, i32
  }
  func.func @transform_1(%arg0: i32, %arg1: i32) -> (i32, i32, i32) {
    %c0_i32 = arith.constant 0 : i32
    %c0_i32_0 = arith.constant 0 : i32
    %c0_i32_1 = arith.constant 0 : i32
    return %c0_i32, %c0_i32_0, %arg1 : i32, i32, i32
  }
  func.func @transform_2(%arg0: i32, %arg1: i32) -> (i32, i32) {
    %c0_i32 = arith.constant 0 : i32
    %c0_i32_0 = arith.constant 0 : i32
    return %c0_i32, %arg1 : i32, i32
  }
  func.func @transform_3(%arg0: i32, %arg1: i32) -> (i32, i32, i32) {
    %c0_i32 = arith.constant 0 : i32
    %c0_i32_0 = arith.constant 0 : i32
    return %arg0, %c0_i32, %arg1 : i32, i32, i32
  }
}

module attributes {stable_mosaic.version = 11 : i64} {
  func.func @_dual_matmul_bias_relu_kernel(%arg0: i32, %arg1: i32, %arg2: memref<512x128xbf16, #tpu.memory_space<vmem>>, %arg3: memref<128x128xbf16, #tpu.memory_space<vmem>>, %arg4: memref<512x128xbf16, #tpu.memory_space<vmem>>, %arg5: memref<128x128xbf16, #tpu.memory_space<vmem>>, %arg6: memref<1x128xf32, #tpu.memory_space<vmem>>, %arg7: memref<512x128xbf16, #tpu.memory_space<vmem>>) attributes {dimension_semantics = [#tpu.dimension_semantics<parallel>, #tpu.dimension_semantics<parallel>], iteration_bounds = array<i64: 1, 1>, scalar_prefetch = 0 : i64, scratch_operands = 0 : i64, tpu.core_type = #tpu.core_type<tc>, window_params = [{transform_indices = @transform_0, window_bounds = array<i64: 512, 128>}, {transform_indices = @transform_1, window_bounds = array<i64: 128, 128>}, {transform_indices = @transform_2, window_bounds = array<i64: 512, 128>}, {transform_indices = @transform_3, window_bounds = array<i64: 128, 128>}, {transform_indices = @transform_4, window_bounds = array<i64: 1, 128>}, {transform_indices = @transform_5, window_bounds = array<i64: 512, 128>}]} {
    %c0 = arith.constant 0 : index
    %c0_0 = arith.constant 0 : index
    %0 = vector.load %arg2[%c0, %c0_0] : memref<512x128xbf16, #tpu.memory_space<vmem>>, vector<512x128xbf16>
    %c0_1 = arith.constant 0 : index
    %c0_2 = arith.constant 0 : index
    %1 = vector.load %arg3[%c0_1, %c0_2] : memref<128x128xbf16, #tpu.memory_space<vmem>>, vector<128x128xbf16>
    %cst = arith.constant dense<0.000000e+00> : vector<512x128xf32>
    %2 = tpu.matmul %0, %1, %cst {dimension_numbers = #tpu.dot_dimension_numbers<[1], [0], [0], [1], [0, 0, 1, 1], [], []>} : vector<512x128xbf16>, vector<128x128xbf16>, vector<512x128xf32> -> vector<512x128xf32>
    %c0_3 = arith.constant 0 : index
    %c0_4 = arith.constant 0 : index
    %3 = vector.load %arg4[%c0_3, %c0_4] : memref<512x128xbf16, #tpu.memory_space<vmem>>, vector<512x128xbf16>
    %c0_5 = arith.constant 0 : index
    %c0_6 = arith.constant 0 : index
    %4 = vector.load %arg5[%c0_5, %c0_6] : memref<128x128xbf16, #tpu.memory_space<vmem>>, vector<128x128xbf16>
    %cst_7 = arith.constant dense<0.000000e+00> : vector<512x128xf32>
    %5 = tpu.matmul %3, %4, %cst_7 {dimension_numbers = #tpu.dot_dimension_numbers<[1], [0], [0], [1], [0, 0, 1, 1], [], []>} : vector<512x128xbf16>, vector<128x128xbf16>, vector<512x128xf32> -> vector<512x128xf32>
    %6 = arith.addf %2, %5 : vector<512x128xf32>
    %c0_8 = arith.constant 0 : index
    %c0_9 = arith.constant 0 : index
    %7 = vector.load %arg6[%c0_8, %c0_9] : memref<1x128xf32, #tpu.memory_space<vmem>>, vector<1x128xf32>
    %8 = vector.broadcast %7 : vector<1x128xf32> to vector<512x128xf32>
    %9 = arith.addf %6, %8 : vector<512x128xf32>
    %cst_10 = arith.constant 0.000000e+00 : f32
    %10 = vector.broadcast %cst_10 : f32 to vector<512x128xf32>
    %11 = arith.maximumf %9, %10 : vector<512x128xf32>
    %12 = arith.truncf %11 : vector<512x128xf32> to vector<512x128xbf16>
    %c0_11 = arith.constant 0 : index
    %c0_12 = arith.constant 0 : index
    %13 = vector.load %arg7[%c0_11, %c0_12] : memref<512x128xbf16, #tpu.memory_space<vmem>>, vector<512x128xbf16>
    tpu.vector_store %arg7[%c0_11, %c0_12], %12 {strides = array<i32>} : memref<512x128xbf16, #tpu.memory_space<vmem>>, vector<512x128xbf16>,
    return
  }
  func.func @transform_0(%arg0: i32, %arg1: i32) -> (i32, i32) {
    %c0_i32 = arith.constant 0 : i32
    %c0_i32_0 = arith.constant 0 : i32
    return %arg0, %c0_i32 : i32, i32
  }
  func.func @transform_1(%arg0: i32, %arg1: i32) -> (i32, i32) {
    %c0_i32 = arith.constant 0 : i32
    %c0_i32_0 = arith.constant 0 : i32
    return %c0_i32, %arg1 : i32, i32
  }
  func.func @transform_2(%arg0: i32, %arg1: i32) -> (i32, i32) {
    %c0_i32 = arith.constant 0 : i32
    %c0_i32_0 = arith.constant 0 : i32
    return %arg0, %c0_i32 : i32, i32
  }
  func.func @transform_3(%arg0: i32, %arg1: i32) -> (i32, i32) {
    %c0_i32 = arith.constant 0 : i32
    %c0_i32_0 = arith.constant 0 : i32
    return %c0_i32, %arg1 : i32, i32
  }
  func.func @transform_4(%arg0: i32, %arg1: i32) -> (i32, i32) {
    %c0_i32 = arith.constant 0 : i32
    %c0_i32_0 = arith.constant 0 : i32
    return %c0_i32, %arg1 : i32, i32
  }
  func.func @transform_5(%arg0: i32, %arg1: i32) -> (i32, i32) {
    %c0_i32 = arith.constant 0 : i32
    return %arg0, %arg1 : i32, i32
  }
}

</mosaic_0001>

<llo_original>
// kernel: bottleneck_forward.3
$region0: #{bottleneck_forward.3}
  #allocation0 [shape = 'u32[]', space=smem, size = 0x4, offset = 0x4, fixed_abs, tag = 'smem constant byte address 0x4 - core index']
  #allocation1 [shape = 'u32[144,128]{1,0:T(1,128)}', space=vmem, size = 0x12000, scoped, tag = 'internal scratch']
  %s0 = inlined_call_operand.vmem [shape: bf16[512,128], index: 0, kind: input, shape index: {}]
  %s1 = inlined_call_operand.vmem [shape: bf16[128,128], index: 1, kind: input, shape index: {}]
  %s2 = inlined_call_operand.vmem [shape: f32[1,128], index: 2, kind: input, shape index: {}]
  %s3 = inlined_call_operand.vmem [shape: bf16[512,128], index: 3, kind: output, shape index: {}]
  %s4 = sld [smem:[#allocation0]]
  $region22: #{bottleneck_forward.3} parent=0
    _
  %s6 = ssub.s32 1, %s4
  %s7 = scalar_select 0, %s6, %s4
  // Predicated region
  $region2: #{bottleneck_forward.3} parent=0 // pred_check
    _
  $region3: #{bottleneck_forward.3} parent=0 // pred_check_branch
    %9 = sbr.rel (0) target = $region5
  $region4: #{bottleneck_forward.3} parent=0 // pred_region
    _
  $region5: #{bottleneck_forward.3} parent=0 // pred_fallthru
    _
  // Predicated region
  $region6: #{bottleneck_forward.3} parent=0 // pred_check
    _
  $region7: #{bottleneck_forward.3} parent=0 // pred_check_branch
    %11 = sbr.rel (0) target = $region9
  $region8: #{bottleneck_forward.3} parent=0 // pred_region
    _
  $region9: #{bottleneck_forward.3} parent=0 // pred_fallthru
    _
  // Predicated region
  $region10: #{bottleneck_forward.3} parent=0 // pred_check
    _
  $region11: #{bottleneck_forward.3} parent=0 // pred_check_branch
    %13 = sbr.rel (0) target = $region13
  $region12: #{bottleneck_forward.3} parent=0 // pred_region
    _
  $region13: #{bottleneck_forward.3} parent=0 // pred_fallthru
    _
  %v15 = vld [vmem:[%s0] sm:$0xf]
  %v16 = vld [vmem:[%s0 + $0x4] sm:$0xf]
  %v17 = vld [vmem:[%s0 + $0x8] sm:$0xf]
  %v18 = vld [vmem:[%s0 + $0xc] sm:$0xf]
  %v19 = vld [vmem:[%s0 + $0x10] sm:$0xf]
  %v20 = vld [vmem:[%s0 + $0x14] sm:$0xf]
  %v21 = vld [vmem:[%s0 + $0x18] sm:$0xf]
  %v22 = vld [vmem:[%s0 + $0x1c] sm:$0xf]
  %v23 = vld [vmem:[%s0 + $0x20] sm:$0xf]
  %v24 = vld [vmem:[%s0 + $0x24] sm:$0xf]
  %v25 = vld [vmem:[%s0 + $0x28] sm:$0xf]
  %v26 = vld [vmem:[%s0 + $0x2c] sm:$0xf]
  %v27 = vld [vmem:[%s0 + $0x30] sm:$0xf]
  %v28 = vld [vmem:[%s0 + $0x34] sm:$0xf]
  %v29 = vld [vmem:[%s0 + $0x38] sm:$0xf]
  %v30 = vld [vmem:[%s0 + $0x3c] sm:$0xf]
  %v31 = vld [vmem:[%s0 + $0x40] sm:$0xf]
  %v32 = vld [vmem:[%s0 + $0x44] sm:$0xf]
  %v33 = vld [vmem:[%s0 + $0x48] sm:$0xf]
  %v34 = vld [vmem:[%s0 + $0x4c] sm:$0xf]
  %v35 = vld [vmem:[%s0 + $0x50] sm:$0xf]
  %v36 = vld [vmem:[%s0 + $0x54] sm:$0xf]
  %v37 = vld [vmem:[%s0 + $0x58] sm:$0xf]
  %v38 = vld [vmem:[%s0 + $0x5c] sm:$0xf]
  %v39 = vld [vmem:[%s0 + $0x60] sm:$0xf]
  %v40 = vld [vmem:[%s0 + $0x64] sm:$0xf]
  %v41 = vld [vmem:[%s0 + $0x68] sm:$0xf]
  %v42 = vld [vmem:[%s0 + $0x6c] sm:$0xf]
  %v43 = vld [vmem:[%s0 + $0x70] sm:$0xf]
  %v44 = vld [vmem:[%s0 + $0x74] sm:$0xf]
  %v45 = vld [vmem:[%s0 + $0x78] sm:$0xf]
  %v46 = vld [vmem:[%s0 + $0x7c] sm:$0xf]
  %v47 = vld [vmem:[%s0 + $0x80] sm:$0xf]
  %v48 = vld [vmem:[%s0 + $0x84] sm:$0xf]
  %v49 = vld [vmem:[%s0 + $0x88] sm:$0xf]
  %v50 = vld [vmem:[%s0 + $0x8c] sm:$0xf]
  %v51 = vld [vmem:[%s0 + $0x90] sm:$0xf]
  %v52 = vld [vmem:[%s0 + $0x94] sm:$0xf]
  %v53 = vld [vmem:[%s0 + $0x98] sm:$0xf]
  %v54 = vld [vmem:[%s0 + $0x9c] sm:$0xf]
  %v55 = vld [vmem:[%s0 + $0xa0] sm:$0xf]
  %v56 = vld [vmem:[%s0 + $0xa4] sm:$0xf]
  %v57 = vld [vmem:[%s0 + $0xa8] sm:$0xf]
  %v58 = vld [vmem:[%s0 + $0xac] sm:$0xf]
  %v59 = vld [vmem:[%s0 + $0xb0] sm:$0xf]
  %v60 = vld [vmem:[%s0 + $0xb4] sm:$0xf]
  %v61 = vld [vmem:[%s0 + $0xb8] sm:$0xf]
  %v62 = vld [vmem:[%s0 + $0xbc] sm:$0xf]
  %v63 = vld [vmem:[%s0 + $0xc0] sm:$0xf]
  %v64 = vld [vmem:[%s0 + $0xc4] sm:$0xf]
  %v65 = vld [vmem:[%s0 + $0xc8] sm:$0xf]
  %v66 = vld [vmem:[%s0 + $0xcc] sm:$0xf]
  %v67 = vld [vmem:[%s0 + $0xd0] sm:$0xf]
  %v68 = vld [vmem:[%s0 + $0xd4] sm:$0xf]
  %v69 = vld [vmem:[%s0 + $0xd8] sm:$0xf]
  %v70 = vld [vmem:[%s0 + $0xdc] sm:$0xf]
  %v71 = vld [vmem:[%s0 + $0xe0] sm:$0xf]
  %v72 = vld [vmem:[%s0 + $0xe4] sm:$0xf]
  %v73 = vld [vmem:[%s0 + $0xe8] sm:$0xf]
  %v74 = vld [vmem:[%s0 + $0xec] sm:$0xf]
  %v75 = vld [vmem:[%s0 + $0xf0] sm:$0xf]
  %v76 = vld [vmem:[%s0 + $0xf4] sm:$0xf]
  %v77 = vld [vmem:[%s0 + $0xf8] sm:$0xf]
  %v78 = vld [vmem:[%s0 + $0xfc] sm:$0xf]
  %v79 = vld [vmem:[%s1] sm:$0xf]
  %v80 = vld [vmem:[%s1 + $0x4] sm:$0xf]
  %v81 = vld [vmem:[%s1 + $0x8] sm:$0xf]
  %v82 = vld [vmem:[%s1 + $0xc] sm:$0xf]
  %v83 = vld [vmem:[%s1 + $0x10] sm:$0xf]
  %v84 = vld [vmem:[%s1 + $0x14] sm:$0xf]
  %v85 = vld [vmem:[%s1 + $0x18] sm:$0xf]
  %v86 = vld [vmem:[%s1 + $0x1c] sm:$0xf]
  %v87 = vld [vmem:[%s1 + $0x20] sm:$0xf]
  %v88 = vld [vmem:[%s1 + $0x24] sm:$0xf]
  %v89 = vld [vmem:[%s1 + $0x28] sm:$0xf]
  %v90 = vld [vmem:[%s1 + $0x2c] sm:$0xf]
  %v91 = vld [vmem:[%s1 + $0x30] sm:$0xf]
  %v92 = vld [vmem:[%s1 + $0x34] sm:$0xf]
  %v93 = vld [vmem:[%s1 + $0x38] sm:$0xf]
  %v94 = vld [vmem:[%s1 + $0x3c] sm:$0xf]
  %v95 = vld [vmem:[%s2] sm:$0x1]
  %v97 = vlaneseq
  %v98 = vshrl.u32 %v97, 7
  %v99 = vsub.s32 0, %v98
  %v100 = vrot.slane %v95, %v99
  %v166 = vunpack.c.l.b16 %v15
  %v167 = vunpack.c.l.b16 %v16
  %v168 = vunpack.c.l.b16 %v17
  %v169 = vunpack.c.l.b16 %v18
  %v170 = vunpack.c.l.b16 %v19
  %v171 = vunpack.c.l.b16 %v20
  %v172 = vunpack.c.l.b16 %v21
  %v173 = vunpack.c.l.b16 %v22
  %v174 = vunpack.c.l.b16 %v23
  %v175 = vunpack.c.l.b16 %v24
  %v176 = vunpack.c.l.b16 %v25
  %v177 = vunpack.c.l.b16 %v26
  %v178 = vunpack.c.l.b16 %v27
  %v179 = vunpack.c.l.b16 %v28
  %v180 = vunpack.c.l.b16 %v29
  %v181 = vunpack.c.l.b16 %v30
  %v182 = vunpack.c.l.b16 %v31
  %v183 = vunpack.c.l.b16 %v32
  %v184 = vunpack.c.l.b16 %v33
  %v185 = vunpack.c.l.b16 %v34
  %v186 = vunpack.c.l.b16 %v35
  %v187 = vunpack.c.l.b16 %v36
  %v188 = vunpack.c.l.b16 %v37
  %v189 = vunpack.c.l.b16 %v38
  %v190 = vunpack.c.l.b16 %v39
  %v191 = vunpack.c.l.b16 %v40
  %v192 = vunpack.c.l.b16 %v41
  %v193 = vunpack.c.l.b16 %v42
  %v194 = vunpack.c.l.b16 %v43
  %v195 = vunpack.c.l.b16 %v44
  %v196 = vunpack.c.l.b16 %v45
  %v197 = vunpack.c.l.b16 %v46
  %v198 = vunpack.c.l.b16 %v47
  %v199 = vunpack.c.l.b16 %v48
  %v200 = vunpack.c.l.b16 %v49
  %v201 = vunpack.c.l.b16 %v50
  %v202 = vunpack.c.l.b16 %v51
  %v203 = vunpack.c.l.b16 %v52
  %v204 = vunpack.c.l.b16 %v53
  %v205 = vunpack.c.l.b16 %v54
  %v206 = vunpack.c.l.b16 %v55
  %v207 = vunpack.c.l.b16 %v56
  %v208 = vunpack.c.l.b16 %v57
  %v209 = vunpack.c.l.b16 %v58
  %v210 = vunpack.c.l.b16 %v59
  %v211 = vunpack.c.l.b16 %v60
  %v212 = vunpack.c.l.b16 %v61
  %v213 = vunpack.c.l.b16 %v62
  %v214 = vunpack.c.l.b16 %v63
  %v215 = vunpack.c.l.b16 %v64
  %v216 = vunpack.c.l.b16 %v65
  %v217 = vunpack.c.l.b16 %v66
  %v218 = vunpack.c.l.b16 %v67
  %v219 = vunpack.c.l.b16 %v68
  %v220 = vunpack.c.l.b16 %v69
  %v221 = vunpack.c.l.b16 %v70
  %v222 = vunpack.c.l.b16 %v71
  %v223 = vunpack.c.l.b16 %v72
  %v224 = vunpack.c.l.b16 %v73
  %v225 = vunpack.c.l.b16 %v74
  %v226 = vunpack.c.l.b16 %v75
  %v227 = vunpack.c.l.b16 %v76
  %v228 = vunpack.c.l.b16 %v77
  %v229 = vunpack.c.l.b16 %v78
  %v230 = vpack.c.b16 %v167, %v166
  %v231 = vpack.c.b16 %v169, %v168
  %v232 = vpack.c.b16 %v171, %v170
  %v233 = vpack.c.b16 %v173, %v172
  %v234 = vpack.c.b16 %v175, %v174
  %v235 = vpack.c.b16 %v177, %v176
  %v236 = vpack.c.b16 %v179, %v178
  %v237 = vpack.c.b16 %v181, %v180
  %v238 = vpack.c.b16 %v183, %v182
  %v239 = vpack.c.b16 %v185, %v184
  %v240 = vpack.c.b16 %v187, %v186
  %v241 = vpack.c.b16 %v189, %v188
  %v242 = vpack.c.b16 %v191, %v190
  %v243 = vpack.c.b16 %v193, %v192
  %v244 = vpack.c.b16 %v195, %v194
  %v245 = vpack.c.b16 %v197, %v196
  %v246 = vpack.c.b16 %v199, %v198
  %v247 = vpack.c.b16 %v201, %v200
  %v248 = vpack.c.b16 %v203, %v202
  %v249 = vpack.c.b16 %v205, %v204
  %v250 = vpack.c.b16 %v207, %v206
  %v251 = vpack.c.b16 %v209, %v208
  %v252 = vpack.c.b16 %v211, %v210
  %v253 = vpack.c.b16 %v213, %v212
  %v254 = vpack.c.b16 %v215, %v214
  %v255 = vpack.c.b16 %v217, %v216
  %v256 = vpack.c.b16 %v219, %v218
  %v257 = vpack.c.b16 %v221, %v220
  %v258 = vpack.c.b16 %v223, %v222
  %v259 = vpack.c.b16 %v225, %v224
  %v260 = vpack.c.b16 %v227, %v226
  %v261 = vpack.c.b16 %v229, %v228
  %v310 = vunpack.c.l.b16 %v79
  %v311 = vunpack.c.l.b16 %v80
  %v312 = vunpack.c.l.b16 %v81
  %v313 = vunpack.c.l.b16 %v82
  %v314 = vunpack.c.l.b16 %v83
  %v315 = vunpack.c.l.b16 %v84
  %v316 = vunpack.c.l.b16 %v85
  %v317 = vunpack.c.l.b16 %v86
  %v318 = vunpack.c.l.b16 %v87
  %v319 = vunpack.c.l.b16 %v88
  %v320 = vunpack.c.l.b16 %v89
  %v321 = vunpack.c.l.b16 %v90
  %v322 = vunpack.c.l.b16 %v91
  %v323 = vunpack.c.l.b16 %v92
  %v324 = vunpack.c.l.b16 %v93
  %v325 = vunpack.c.l.b16 %v94
  %v326 = vpack.c.b16 %v311, %v310
  %v327 = vpack.c.b16 %v313, %v312
  %v328 = vpack.c.b16 %v315, %v314
  %v329 = vpack.c.b16 %v317, %v316
  %v330 = vpack.c.b16 %v319, %v318
  %v331 = vpack.c.b16 %v321, %v320
  %v332 = vpack.c.b16 %v323, %v322
  %v333 = vpack.c.b16 %v325, %v324
  %342 = vmatprep.subr.bf16.mxu0 0
  %343 = vmatpush1.bf16.msra.mxu0 %v326
  %344 = vmatprep.subr.bf16.mxu0 0
  %345 = vmatpush1.bf16.msra.mxu0 %v327
  %346 = vmatprep.subr.bf16.mxu0 0
  %347 = vmatpush1.bf16.msra.mxu0 %v328
  %348 = vmatprep.subr.bf16.mxu0 0
  %349 = vmatpush1.bf16.msra.mxu0 %v329
  %350 = vmatprep.subr.bf16.mxu0 0
  %351 = vmatpush1.bf16.msra.mxu0 %v330
  %352 = vmatprep.subr.bf16.mxu0 0
  %353 = vmatpush1.bf16.msra.mxu0 %v331
  %354 = vmatprep.subr.bf16.mxu0 0
  %355 = vmatpush1.bf16.msra.mxu0 %v332
  %356 = vmatprep.subr.bf16.mxu0 0
  %357 = vmatpush1.bf16.msra.mxu0 %v333
  %358 = vmatprep.subr.bf16.mxu0 0
  %359 = vmatpush1.bf16.msra.mxu0 0
  %360 = vmatprep.subr.bf16.mxu0 0
  %361 = vmatpush1.bf16.msra.mxu0 0
  %362 = vmatprep.subr.bf16.mxu0 0
  %363 = vmatpush1.bf16.msra.mxu0 0
  %364 = vmatprep.subr.bf16.mxu0 0
  %365 = vmatpush1.bf16.msra.mxu0 0
  %366 = vmatprep.subr.bf16.mxu0 0
  %367 = vmatpush1.bf16.msra.mxu0 0
  %368 = vmatprep.subr.bf16.mxu0 0
  %369 = vmatpush1.bf16.msra.mxu0 0
  %370 = vmatprep.subr.bf16.mxu0 0
  %371 = vmatpush1.bf16.msra.mxu0 0
  %372 = vmatprep.subr.bf16.mxu0 0
  %373 = vmatpush1.bf16.msra.mxu0 0
  %374 = vmatprep.mubr.bf16.mxu0 0
  %375 = vmatmul.mubr.bf16.gmra.mrb[0].mxu0 %v230
  %v376 = vpop.f32.mrb[0].mxu0
  %v377 = vadd.f32 %v100, %v376
  %v378 = vpop.f32.mrb[0].mxu0
  %v379 = vpop.f32.mrb[0].mxu0
  %v380 = vadd.f32 %v100, %v379
  %v381 = vpop.f32.mrb[0].mxu0
  %382 = vmatprep.mubr.bf16.mxu0 0
  %383 = vmatmul.mubr.bf16.gmra.mrb[0].mxu0 %v231
  %v384 = vpop.f32.mrb[0].mxu0
  %v385 = vadd.f32 %v100, %v384
  %v386 = vpop.f32.mrb[0].mxu0
  %v387 = vpop.f32.mrb[0].mxu0
  %v388 = vadd.f32 %v100, %v387
  %v389 = vpop.f32.mrb[0].mxu0
  %390 = vmatprep.mubr.bf16.mxu0 0
  %391 = vmatmul.mubr.bf16.gmra.mrb[0].mxu0 %v232
  %v392 = vpop.f32.mrb[0].mxu0
  %v393 = vadd.f32 %v100, %v392
  %v394 = vpop.f32.mrb[0].mxu0
  %v395 = vpop.f32.mrb[0].mxu0
  %v396 = vadd.f32 %v100, %v395
  %v397 = vpop.f32.mrb[0].mxu0
  %398 = vmatprep.mubr.bf16.mxu0 0
  %399 = vmatmul.mubr.bf16.gmra.mrb[0].mxu0 %v233
  %v400 = vpop.f32.mrb[0].mxu0
  %v401 = vadd.f32 %v100, %v400
  %v402 = vpop.f32.mrb[0].mxu0
  %v403 = vpop.f32.mrb[0].mxu0
  %v404 = vadd.f32 %v100, %v403
  %v405 = vpop.f32.mrb[0].mxu0
  %406 = vmatprep.mubr.bf16.mxu0 0
  %407 = vmatmul.mubr.bf16.gmra.mrb[0].mxu0 %v234
  %v408 = vpop.f32.mrb[0].mxu0
  %v409 = vadd.f32 %v100, %v408
  %v410 = vpop.f32.mrb[0].mxu0
  %v411 = vpop.f32.mrb[0].mxu0
  %v412 = vadd.f32 %v100, %v411
  %v413 = vpop.f32.mrb[0].mxu0
  %414 = vmatprep.mubr.bf16.mxu0 0
  %415 = vmatmul.mubr.bf16.gmra.mrb[0].mxu0 %v235
  %v416 = vpop.f32.mrb[0].mxu0
  %v417 = vadd.f32 %v100, %v416
  %v418 = vpop.f32.mrb[0].mxu0
  %v419 = vpop.f32.mrb[0].mxu0
  %v420 = vadd.f32 %v100, %v419
  %v421 = vpop.f32.mrb[0].mxu0
  %422 = vmatprep.mubr.bf16.mxu0 0
  %423 = vmatmul.mubr.bf16.gmra.mrb[0].mxu0 %v236
  %v424 = vpop.f32.mrb[0].mxu0
  %v425 = vadd.f32 %v100, %v424
  %v426 = vpop.f32.mrb[0].mxu0
  %v427 = vpop.f32.mrb[0].mxu0
  %v428 = vadd.f32 %v100, %v427
  %v429 = vpop.f32.mrb[0].mxu0
  %430 = vmatprep.mubr.bf16.mxu0 0
  %431 = vmatmul.mubr.bf16.gmra.mrb[0].mxu0 %v237
  %v432 = vpop.f32.mrb[0].mxu0
  %v433 = vadd.f32 %v100, %v432
  %v434 = vpop.f32.mrb[0].mxu0
  %v435 = vpop.f32.mrb[0].mxu0
  %v436 = vadd.f32 %v100, %v435
  %v437 = vpop.f32.mrb[0].mxu0
  %438 = vmatprep.mubr.bf16.mxu0 0
  %439 = vmatmul.mubr.bf16.gmra.mrb[0].mxu0 %v238
  %v440 = vpop.f32.mrb[0].mxu0
  %v441 = vadd.f32 %v100, %v440
  %v442 = vpop.f32.mrb[0].mxu0
  %v443 = vpop.f32.mrb[0].mxu0
  %v444 = vadd.f32 %v100, %v443
  %v445 = vpop.f32.mrb[0].mxu0
  %446 = vmatprep.mubr.bf16.mxu0 0
  %447 = vmatmul.mubr.bf16.gmra.mrb[0].mxu0 %v239
  %v448 = vpop.f32.mrb[0].mxu0
  %v449 = vadd.f32 %v100, %v448
  %v450 = vpop.f32.mrb[0].mxu0
  %v451 = vpop.f32.mrb[0].mxu0
  %v452 = vadd.f32 %v100, %v451
  %v453 = vpop.f32.mrb[0].mxu0
  %454 = vmatprep.mubr.bf16.mxu0 0
  %455 = vmatmul.mubr.bf16.gmra.mrb[0].mxu0 %v240
  %v456 = vpop.f32.mrb[0].mxu0
  %v457 = vadd.f32 %v100, %v456
  %v458 = vpop.f32.mrb[0].mxu0
  %v459 = vpop.f32.mrb[0].mxu0
  %v460 = vadd.f32 %v100, %v459
  %v461 = vpop.f32.mrb[0].mxu0
  %462 = vmatprep.mubr.bf16.mxu0 0
  %463 = vmatmul.mubr.bf16.gmra.mrb[0].mxu0 %v241
  %v464 = vpop.f32.mrb[0].mxu0
  %v465 = vadd.f32 %v100, %v464
  %v466 = vpop.f32.mrb[0].mxu0
  %v467 = vpop.f32.mrb[0].mxu0
  %v468 = vadd.f32 %v100, %v467
  %v469 = vpop.f32.mrb[0].mxu0
  %470 = vmatprep.mubr.bf16.mxu0 0
  %471 = vmatmul.mubr.bf16.gmra.mrb[0].mxu0 %v242
  %v472 = vpop.f32.mrb[0].mxu0
  %v473 = vadd.f32 %v100, %v472
  %v474 = vpop.f32.mrb[0].mxu0
  %v475 = vpop.f32.mrb[0].mxu0
  %v476 = vadd.f32 %v100, %v475
  %v477 = vpop.f32.mrb[0].mxu0
  %478 = vmatprep.mubr.bf16.mxu0 0
  %479 = vmatmul.mubr.bf16.gmra.mrb[0].mxu0 %v243
  %v480 = vpop.f32.mrb[0].mxu0
  %v481 = vadd.f32 %v100, %v480
  %v482 = vpop.f32.mrb[0].mxu0
  %v483 = vpop.f32.mrb[0].mxu0
  %v484 = vadd.f32 %v100, %v483
  %v485 = vpop.f32.mrb[0].mxu0
  %486 = vmatprep.mubr.bf16.mxu0 0
  %487 = vmatmul.mubr.bf16.gmra.mrb[0].mxu0 %v244
  %v488 = vpop.f32.mrb[0].mxu0
  %v489 = vadd.f32 %v100, %v488
  %v490 = vpop.f32.mrb[0].mxu0
  %v491 = vpop.f32.mrb[0].mxu0
  %v492 = vadd.f32 %v100, %v491
  %v493 = vpop.f32.mrb[0].mxu0
  %494 = vmatprep.mubr.bf16.mxu0 0
  %495 = vmatmul.mubr.bf16.gmra.mrb[0].mxu0 %v245
  %v496 = vpop.f32.mrb[0].mxu0
  %v497 = vadd.f32 %v100, %v496
  %v498 = vpop.f32.mrb[0].mxu0
  %v499 = vpop.f32.mrb[0].mxu0
  %v500 = vadd.f32 %v100, %v499
  %v501 = vpop.f32.mrb[0].mxu0
  %502 = vmatprep.mubr.bf16.mxu0 0
  %503 = vmatmul.mubr.bf16.gmra.mrb[0].mxu0 %v246
  %v504 = vpop.f32.mrb[0].mxu0
  %v505 = vadd.f32 %v100, %v504
  %v506 = vpop.f32.mrb[0].mxu0
  %v507 = vpop.f32.mrb[0].mxu0
  %v508 = vadd.f32 %v100, %v507
  %v509 = vpop.f32.mrb[0].mxu0
  %510 = vmatprep.mubr.bf16.mxu0 0
  %511 = vmatmul.mubr.bf16.gmra.mrb[0].mxu0 %v247
  %v512 = vpop.f32.mrb[0].mxu0
  %v513 = vadd.f32 %v100, %v512
  %v514 = vpop.f32.mrb[0].mxu0
  %v515 = vpop.f32.mrb[0].mxu0
  %v516 = vadd.f32 %v100, %v515
  %v517 = vpop.f32.mrb[0].mxu0
  %518 = vmatprep.mubr.bf16.mxu0 0
  %519 = vmatmul.mubr.bf16.gmra.mrb[0].mxu0 %v248
  %v520 = vpop.f32.mrb[0].mxu0
  %v521 = vadd.f32 %v100, %v520
  %v522 = vpop.f32.mrb[0].mxu0
  %v523 = vpop.f32.mrb[0].mxu0
  %v524 = vadd.f32 %v100, %v523
  %v525 = vpop.f32.mrb[0].mxu0
  %526 = vmatprep.mubr.bf16.mxu0 0
  %527 = vmatmul.mubr.bf16.gmra.mrb[0].mxu0 %v249
  %v528 = vpop.f32.mrb[0].mxu0
  %v529 = vadd.f32 %v100, %v528
  %v530 = vpop.f32.mrb[0].mxu0
  %v531 = vpop.f32.mrb[0].mxu0
  %v532 = vadd.f32 %v100, %v531
  %v533 = vpop.f32.mrb[0].mxu0
  %534 = vmatprep.mubr.bf16.mxu0 0
  %535 = vmatmul.mubr.bf16.gmra.mrb[0].mxu0 %v250
  %v536 = vpop.f32.mrb[0].mxu0
  %v537 = vadd.f32 %v100, %v536
  %v538 = vpop.f32.mrb[0].mxu0
  %v539 = vpop.f32.mrb[0].mxu0
  %v540 = vadd.f32 %v100, %v539
  %v541 = vpop.f32.mrb[0].mxu0
  %542 = vmatprep.mubr.bf16.mxu0 0
  %543 = vmatmul.mubr.bf16.gmra.mrb[0].mxu0 %v251
  %v544 = vpop.f32.mrb[0].mxu0
  %v545 = vadd.f32 %v100, %v544
  %v546 = vpop.f32.mrb[0].mxu0
  %v547 = vpop.f32.mrb[0].mxu0
  %v548 = vadd.f32 %v100, %v547
  %v549 = vpop.f32.mrb[0].mxu0
  %550 = vmatprep.mubr.bf16.mxu0 0
  %551 = vmatmul.mubr.bf16.gmra.mrb[0].mxu0 %v252
  %v552 = vpop.f32.mrb[0].mxu0
  %v553 = vadd.f32 %v100, %v552
  %v554 = vpop.f32.mrb[0].mxu0
  %v555 = vpop.f32.mrb[0].mxu0
  %v556 = vadd.f32 %v100, %v555
  %v557 = vpop.f32.mrb[0].mxu0
  %558 = vmatprep.mubr.bf16.mxu0 0
  %559 = vmatmul.mubr.bf16.gmra.mrb[0].mxu0 %v253
  %v560 = vpop.f32.mrb[0].mxu0
  %v561 = vadd.f32 %v100, %v560
  %v562 = vpop.f32.mrb[0].mxu0
  %v563 = vpop.f32.mrb[0].mxu0
  %v564 = vadd.f32 %v100, %v563
  %v565 = vpop.f32.mrb[0].mxu0
  %566 = vmatprep.mubr.bf16.mxu0 0
  %567 = vmatmul.mubr.bf16.gmra.mrb[0].mxu0 %v254
  %v568 = vpop.f32.mrb[0].mxu0
  %v569 = vadd.f32 %v100, %v568
  %v570 = vpop.f32.mrb[0].mxu0
  %v571 = vpop.f32.mrb[0].mxu0
  %v572 = vadd.f32 %v100, %v571
  %v573 = vpop.f32.mrb[0].mxu0
  %574 = vmatprep.mubr.bf16.mxu0 0
  %575 = vmatmul.mubr.bf16.gmra.mrb[0].mxu0 %v255
  %v576 = vpop.f32.mrb[0].mxu0
  %v577 = vadd.f32 %v100, %v576
  %v578 = vpop.f32.mrb[0].mxu0
  %v579 = vpop.f32.mrb[0].mxu0
  %v580 = vadd.f32 %v100, %v579
  %v581 = vpop.f32.mrb[0].mxu0
  %582 = vmatprep.mubr.bf16.mxu0 0
  %583 = vmatmul.mubr.bf16.gmra.mrb[0].mxu0 %v256
  %v584 = vpop.f32.mrb[0].mxu0
  %v585 = vadd.f32 %v100, %v584
  %v586 = vpop.f32.mrb[0].mxu0
  %v587 = vpop.f32.mrb[0].mxu0
  %v588 = vadd.f32 %v100, %v587
  %v589 = vpop.f32.mrb[0].mxu0
  %590 = vmatprep.mubr.bf16.mxu0 0
  %591 = vmatmul.mubr.bf16.gmra.mrb[0].mxu0 %v257
  %v592 = vpop.f32.mrb[0].mxu0
  %v593 = vadd.f32 %v100, %v592
  %v594 = vpop.f32.mrb[0].mxu0
  %v595 = vpop.f32.mrb[0].mxu0
  %v596 = vadd.f32 %v100, %v595
  %v597 = vpop.f32.mrb[0].mxu0
  %598 = vmatprep.mubr.bf16.mxu0 0
  %599 = vmatmul.mubr.bf16.gmra.mrb[0].mxu0 %v258
  %v600 = vpop.f32.mrb[0].mxu0
  %v601 = vadd.f32 %v100, %v600
  %v602 = vpop.f32.mrb[0].mxu0
  %v603 = vpop.f32.mrb[0].mxu0
  %v604 = vadd.f32 %v100, %v603
  %v605 = vpop.f32.mrb[0].mxu0
  %606 = vmatprep.mubr.bf16.mxu0 0
  %607 = vmatmul.mubr.bf16.gmra.mrb[0].mxu0 %v259
  %v608 = vpop.f32.mrb[0].mxu0
  %v609 = vadd.f32 %v100, %v608
  %v610 = vpop.f32.mrb[0].mxu0
  %v611 = vpop.f32.mrb[0].mxu0
  %v612 = vadd.f32 %v100, %v611
  %v613 = vpop.f32.mrb[0].mxu0
  %614 = vmatprep.mubr.bf16.mxu0 0
  %615 = vmatmul.mubr.bf16.gmra.mrb[0].mxu0 %v260
  %v616 = vpop.f32.mrb[0].mxu0
  %v617 = vadd.f32 %v100, %v616
  %v618 = vpop.f32.mrb[0].mxu0
  %v619 = vpop.f32.mrb[0].mxu0
  %v620 = vadd.f32 %v100, %v619
  %v621 = vpop.f32.mrb[0].mxu0
  %622 = vmatprep.mubr.bf16.mxu0 0
  %623 = vmatmul.mubr.bf16.gmra.mrb[0].mxu0 %v261
  %v624 = vpop.f32.mrb[0].mxu0
  %v625 = vadd.f32 %v100, %v624
  %v626 = vpop.f32.mrb[0].mxu0
  %v627 = vpop.f32.mrb[0].mxu0
  %v628 = vadd.f32 %v100, %v627
  %v629 = vpop.f32.mrb[0].mxu0
  %630 = vdwg.mxu0
  %v631 = vmax.f32 %v377, 0.0
  %v632 = vmax.f32 %v380, 0.0
  %v633 = vmax.f32 %v385, 0.0
  %v634 = vmax.f32 %v388, 0.0
  %v635 = vmax.f32 %v393, 0.0
  %v636 = vmax.f32 %v396, 0.0
  %v637 = vmax.f32 %v401, 0.0
  %v638 = vmax.f32 %v404, 0.0
  %v639 = vmax.f32 %v409, 0.0
  %v640 = vmax.f32 %v412, 0.0
  %v641 = vmax.f32 %v417, 0.0
  %v642 = vmax.f32 %v420, 0.0
  %v643 = vmax.f32 %v425, 0.0
  %v644 = vmax.f32 %v428, 0.0
  %v645 = vmax.f32 %v433, 0.0
  %v646 = vmax.f32 %v436, 0.0
  %v647 = vmax.f32 %v441, 0.0
  %v648 = vmax.f32 %v444, 0.0
  %v649 = vmax.f32 %v449, 0.0
  %v650 = vmax.f32 %v452, 0.0
  %v651 = vmax.f32 %v457, 0.0
  %v652 = vmax.f32 %v460, 0.0
  %v653 = vmax.f32 %v465, 0.0
  %v654 = vmax.f32 %v468, 0.0
  %v655 = vmax.f32 %v473, 0.0
  %v656 = vmax.f32 %v476, 0.0
  %v657 = vmax.f32 %v481, 0.0
  %v658 = vmax.f32 %v484, 0.0
  %v659 = vmax.f32 %v489, 0.0
  %v660 = vmax.f32 %v492, 0.0
  %v661 = vmax.f32 %v497, 0.0
  %v662 = vmax.f32 %v500, 0.0
  %v663 = vmax.f32 %v505, 0.0
  %v664 = vmax.f32 %v508, 0.0
  %v665 = vmax.f32 %v513, 0.0
  %v666 = vmax.f32 %v516, 0.0
  %v667 = vmax.f32 %v521, 0.0
  %v668 = vmax.f32 %v524, 0.0
  %v669 = vmax.f32 %v529, 0.0
  %v670 = vmax.f32 %v532, 0.0
  %v671 = vmax.f32 %v537, 0.0
  %v672 = vmax.f32 %v540, 0.0
  %v673 = vmax.f32 %v545, 0.0
  %v674 = vmax.f32 %v548, 0.0
  %v675 = vmax.f32 %v553, 0.0
  %v676 = vmax.f32 %v556, 0.0
  %v677 = vmax.f32 %v561, 0.0
  %v678 = vmax.f32 %v564, 0.0
  %v679 = vmax.f32 %v569, 0.0
  %v680 = vmax.f32 %v572, 0.0
  %v681 = vmax.f32 %v577, 0.0
  %v682 = vmax.f32 %v580, 0.0
  %v683 = vmax.f32 %v585, 0.0
  %v684 = vmax.f32 %v588, 0.0
  %v685 = vmax.f32 %v593, 0.0
  %v686 = vmax.f32 %v596, 0.0
  %v687 = vmax.f32 %v601, 0.0
  %v688 = vmax.f32 %v604, 0.0
  %v689 = vmax.f32 %v609, 0.0
  %v690 = vmax.f32 %v612, 0.0
  %v691 = vmax.f32 %v617, 0.0
  %v692 = vmax.f32 %v620, 0.0
  %v693 = vmax.f32 %v625, 0.0
  %v694 = vmax.f32 %v628, 0.0
  %v695 = vpack.c.bf16 %v632, %v631
  %v696 = vpack.c.bf16 %v634, %v633
  %v697 = vpack.c.bf16 %v636, %v635
  %v698 = vpack.c.bf16 %v638, %v637
  %v699 = vpack.c.bf16 %v640, %v639
  %v700 = vpack.c.bf16 %v642, %v641
  %v701 = vpack.c.bf16 %v644, %v643
  %v702 = vpack.c.bf16 %v646, %v645
  %v703 = vpack.c.bf16 %v648, %v647
  %v704 = vpack.c.bf16 %v650, %v649
  %v705 = vpack.c.bf16 %v652, %v651
  %v706 = vpack.c.bf16 %v654, %v653
  %v707 = vpack.c.bf16 %v656, %v655
  %v708 = vpack.c.bf16 %v658, %v657
  %v709 = vpack.c.bf16 %v660, %v659
  %v710 = vpack.c.bf16 %v662, %v661
  %v711 = vpack.c.bf16 %v664, %v663
  %v712 = vpack.c.bf16 %v666, %v665
  %v713 = vpack.c.bf16 %v668, %v667
  %v714 = vpack.c.bf16 %v670, %v669
  %v715 = vpack.c.bf16 %v672, %v671
  %v716 = vpack.c.bf16 %v674, %v673
  %v717 = vpack.c.bf16 %v676, %v675
  %v718 = vpack.c.bf16 %v678, %v677
  %v719 = vpack.c.bf16 %v680, %v679
  %v720 = vpack.c.bf16 %v682, %v681
  %v721 = vpack.c.bf16 %v684, %v683
  %v722 = vpack.c.bf16 %v686, %v685
  %v723 = vpack.c.bf16 %v688, %v687
  %v724 = vpack.c.bf16 %v690, %v689
  %v725 = vpack.c.bf16 %v692, %v691
  %v726 = vpack.c.bf16 %v694, %v693
  %v759 = vunpack.c.l.b16 %v695
  %v760 = vunpack.c.h.b16 %v695
  %v761 = vunpack.c.l.b16 %v696
  %v762 = vunpack.c.h.b16 %v696
  %v763 = vunpack.c.l.b16 %v697
  %v764 = vunpack.c.h.b16 %v697
  %v765 = vunpack.c.l.b16 %v698
  %v766 = vunpack.c.h.b16 %v698
  %v767 = vunpack.c.l.b16 %v699
  %v768 = vunpack.c.h.b16 %v699
  %v769 = vunpack.c.l.b16 %v700
  %v770 = vunpack.c.h.b16 %v700
  %v771 = vunpack.c.l.b16 %v701
  %v772 = vunpack.c.h.b16 %v701
  %v773 = vunpack.c.l.b16 %v702
  %v774 = vunpack.c.h.b16 %v702
  %v775 = vunpack.c.l.b16 %v703
  %v776 = vunpack.c.h.b16 %v703
  %v777 = vunpack.c.l.b16 %v704
  %v778 = vunpack.c.h.b16 %v704
  %v779 = vunpack.c.l.b16 %v705
  %v780 = vunpack.c.h.b16 %v705
  %v781 = vunpack.c.l.b16 %v706
  %v782 = vunpack.c.h.b16 %v706
  %v783 = vunpack.c.l.b16 %v707
  %v784 = vunpack.c.h.b16 %v707
  %v785 = vunpack.c.l.b16 %v708
  %v786 = vunpack.c.h.b16 %v708
  %v787 = vunpack.c.l.b16 %v709
  %v788 = vunpack.c.h.b16 %v709
  %v789 = vunpack.c.l.b16 %v710
  %v790 = vunpack.c.h.b16 %v710
  %v791 = vunpack.c.l.b16 %v711
  %v792 = vunpack.c.h.b16 %v711
  %v793 = vunpack.c.l.b16 %v712
  %v794 = vunpack.c.h.b16 %v712
  %v795 = vunpack.c.l.b16 %v713
  %v796 = vunpack.c.h.b16 %v713
  %v797 = vunpack.c.l.b16 %v714
  %v798 = vunpack.c.h.b16 %v714
  %v799 = vunpack.c.l.b16 %v715
  %v800 = vunpack.c.h.b16 %v715
  %v801 = vunpack.c.l.b16 %v716
  %v802 = vunpack.c.h.b16 %v716
  %v803 = vunpack.c.l.b16 %v717
  %v804 = vunpack.c.h.b16 %v717
  %v805 = vunpack.c.l.b16 %v718
  %v806 = vunpack.c.h.b16 %v718
  %v807 = vunpack.c.l.b16 %v719
  %v808 = vunpack.c.h.b16 %v719
  %v809 = vunpack.c.l.b16 %v720
  %v810 = vunpack.c.h.b16 %v720
  %v811 = vunpack.c.l.b16 %v721
  %v812 = vunpack.c.h.b16 %v721
  %v813 = vunpack.c.l.b16 %v722
  %v814 = vunpack.c.h.b16 %v722
  %v815 = vunpack.c.l.b16 %v723
  %v816 = vunpack.c.h.b16 %v723
  %v817 = vunpack.c.l.b16 %v724
  %v818 = vunpack.c.h.b16 %v724
  %v819 = vunpack.c.l.b16 %v725
  %v820 = vunpack.c.h.b16 %v725
  %v821 = vunpack.c.l.b16 %v726
  %v822 = vunpack.c.h.b16 %v726
  %v823 = vpack.c.b16 %v759, %v759
  %v824 = vpack.c.b16 %v760, %v760
  %v825 = vpack.c.b16 %v761, %v761
  %v826 = vpack.c.b16 %v762, %v762
  %v827 = vpack.c.b16 %v763, %v763
  %v828 = vpack.c.b16 %v764, %v764
  %v829 = vpack.c.b16 %v765, %v765
  %v830 = vpack.c.b16 %v766, %v766
  %v831 = vpack.c.b16 %v767, %v767
  %v832 = vpack.c.b16 %v768, %v768
  %v833 = vpack.c.b16 %v769, %v769
  %v834 = vpack.c.b16 %v770, %v770
  %v835 = vpack.c.b16 %v771, %v771
  %v836 = vpack.c.b16 %v772, %v772
  %v837 = vpack.c.b16 %v773, %v773
  %v838 = vpack.c.b16 %v774, %v774
  %v839 = vpack.c.b16 %v775, %v775
  %v840 = vpack.c.b16 %v776, %v776
  %v841 = vpack.c.b16 %v777, %v777
  %v842 = vpack.c.b16 %v778, %v778
  %v843 = vpack.c.b16 %v779, %v779
  %v844 = vpack.c.b16 %v780, %v780
  %v845 = vpack.c.b16 %v781, %v781
  %v846 = vpack.c.b16 %v782, %v782
  %v847 = vpack.c.b16 %v783, %v783
  %v848 = vpack.c.b16 %v784, %v784
  %v849 = vpack.c.b16 %v785, %v785
  %v850 = vpack.c.b16 %v786, %v786
  %v851 = vpack.c.b16 %v787, %v787
  %v852 = vpack.c.b16 %v788, %v788
  %v853 = vpack.c.b16 %v789, %v789
  %v854 = vpack.c.b16 %v790, %v790
  %v855 = vpack.c.b16 %v791, %v791
  %v856 = vpack.c.b16 %v792, %v792
  %v857 = vpack.c.b16 %v793, %v793
  %v858 = vpack.c.b16 %v794, %v794
  %v859 = vpack.c.b16 %v795, %v795
  %v860 = vpack.c.b16 %v796, %v796
  %v861 = vpack.c.b16 %v797, %v797
  %v862 = vpack.c.b16 %v798, %v798
  %v863 = vpack.c.b16 %v799, %v799
  %v864 = vpack.c.b16 %v800, %v800
  %v865 = vpack.c.b16 %v801, %v801
  %v866 = vpack.c.b16 %v802, %v802
  %v867 = vpack.c.b16 %v803, %v803
  %v868 = vpack.c.b16 %v804, %v804
  %v869 = vpack.c.b16 %v805, %v805
  %v870 = vpack.c.b16 %v806, %v806
  %v871 = vpack.c.b16 %v807, %v807
  %v872 = vpack.c.b16 %v808, %v808
  %v873 = vpack.c.b16 %v809, %v809
  %v874 = vpack.c.b16 %v810, %v810
  %v875 = vpack.c.b16 %v811, %v811
  %v876 = vpack.c.b16 %v812, %v812
  %v877 = vpack.c.b16 %v813, %v813
  %v878 = vpack.c.b16 %v814, %v814
  %v879 = vpack.c.b16 %v815, %v815
  %v880 = vpack.c.b16 %v816, %v816
  %v881 = vpack.c.b16 %v817, %v817
  %v882 = vpack.c.b16 %v818, %v818
  %v883 = vpack.c.b16 %v819, %v819
  %v884 = vpack.c.b16 %v820, %v820
  %v885 = vpack.c.b16 %v821, %v821
  %v886 = vpack.c.b16 %v822, %v822
  %951 = vst [vmem:[%s3] sm:$0xf] %v823
  %952 = vst [vmem:[%s3 + $0x4] sm:$0xf] %v824
  %953 = vst [vmem:[%s3 + $0x8] sm:$0xf] %v825
  %954 = vst [vmem:[%s3 + $0xc] sm:$0xf] %v826
  %955 = vst [vmem:[%s3 + $0x10] sm:$0xf] %v827
  %956 = vst [vmem:[%s3 + $0x14] sm:$0xf] %v828
  %957 = vst [vmem:[%s3 + $0x18] sm:$0xf] %v829
  %958 = vst [vmem:[%s3 + $0x1c] sm:$0xf] %v830
  %959 = vst [vmem:[%s3 + $0x20] sm:$0xf] %v831
  %960 = vst [vmem:[%s3 + $0x24] sm:$0xf] %v832
  %961 = vst [vmem:[%s3 + $0x28] sm:$0xf] %v833
  %962 = vst [vmem:[%s3 + $0x2c] sm:$0xf] %v834
  %963 = vst [vmem:[%s3 + $0x30] sm:$0xf] %v835
  %964 = vst [vmem:[%s3 + $0x34] sm:$0xf] %v836
  %965 = vst [vmem:[%s3 + $0x38] sm:$0xf] %v837
  %966 = vst [vmem:[%s3 + $0x3c] sm:$0xf] %v838
  %967 = vst [vmem:[%s3 + $0x40] sm:$0xf] %v839
  %968 = vst [vmem:[%s3 + $0x44] sm:$0xf] %v840
  %969 = vst [vmem:[%s3 + $0x48] sm:$0xf] %v841
  %970 = vst [vmem:[%s3 + $0x4c] sm:$0xf] %v842
  %971 = vst [vmem:[%s3 + $0x50] sm:$0xf] %v843
  %972 = vst [vmem:[%s3 + $0x54] sm:$0xf] %v844
  %973 = vst [vmem:[%s3 + $0x58] sm:$0xf] %v845
  %974 = vst [vmem:[%s3 + $0x5c] sm:$0xf] %v846
  %975 = vst [vmem:[%s3 + $0x60] sm:$0xf] %v847
  %976 = vst [vmem:[%s3 + $0x64] sm:$0xf] %v848
  %977 = vst [vmem:[%s3 + $0x68] sm:$0xf] %v849
  %978 = vst [vmem:[%s3 + $0x6c] sm:$0xf] %v850
  %979 = vst [vmem:[%s3 + $0x70] sm:$0xf] %v851
  %980 = vst [vmem:[%s3 + $0x74] sm:$0xf] %v852
  %981 = vst [vmem:[%s3 + $0x78] sm:$0xf] %v853
  %982 = vst [vmem:[%s3 + $0x7c] sm:$0xf] %v854
  %983 = vst [vmem:[%s3 + $0x80] sm:$0xf] %v855
  %984 = vst [vmem:[%s3 + $0x84] sm:$0xf] %v856
  %985 = vst [vmem:[%s3 + $0x88] sm:$0xf] %v857
  %986 = vst [vmem:[%s3 + $0x8c] sm:$0xf] %v858
  %987 = vst [vmem:[%s3 + $0x90] sm:$0xf] %v859
  %988 = vst [vmem:[%s3 + $0x94] sm:$0xf] %v860
  %989 = vst [vmem:[%s3 + $0x98] sm:$0xf] %v861
  %990 = vst [vmem:[%s3 + $0x9c] sm:$0xf] %v862
  %991 = vst [vmem:[%s3 + $0xa0] sm:$0xf] %v863
  %992 = vst [vmem:[%s3 + $0xa4] sm:$0xf] %v864
  %993 = vst [vmem:[%s3 + $0xa8] sm:$0xf] %v865
  %994 = vst [vmem:[%s3 + $0xac] sm:$0xf] %v866
  %995 = vst [vmem:[%s3 + $0xb0] sm:$0xf] %v867
  %996 = vst [vmem:[%s3 + $0xb4] sm:$0xf] %v868
  %997 = vst [vmem:[%s3 + $0xb8] sm:$0xf] %v869
  %998 = vst [vmem:[%s3 + $0xbc] sm:$0xf] %v870
  %999 = vst [vmem:[%s3 + $0xc0] sm:$0xf] %v871
  %1000 = vst [vmem:[%s3 + $0xc4] sm:$0xf] %v872
  %1001 = vst [vmem:[%s3 + $0xc8] sm:$0xf] %v873
  %1002 = vst [vmem:[%s3 + $0xcc] sm:$0xf] %v874
  %1003 = vst [vmem:[%s3 + $0xd0] sm:$0xf] %v875
  %1004 = vst [vmem:[%s3 + $0xd4] sm:$0xf] %v876
  %1005 = vst [vmem:[%s3 + $0xd8] sm:$0xf] %v877
  %1006 = vst [vmem:[%s3 + $0xdc] sm:$0xf] %v878
  %1007 = vst [vmem:[%s3 + $0xe0] sm:$0xf] %v879
  %1008 = vst [vmem:[%s3 + $0xe4] sm:$0xf] %v880
  %1009 = vst [vmem:[%s3 + $0xe8] sm:$0xf] %v881
  %1010 = vst [vmem:[%s3 + $0xec] sm:$0xf] %v882
  %1011 = vst [vmem:[%s3 + $0xf0] sm:$0xf] %v883
  %1012 = vst [vmem:[%s3 + $0xf4] sm:$0xf] %v884
  %1013 = vst [vmem:[%s3 + $0xf8] sm:$0xf] %v885
  %1014 = vst [vmem:[%s3 + $0xfc] sm:$0xf] %v886
  // Predicated region
  $region14: #{bottleneck_forward.3} parent=0 // pred_check
    _
  $region15: #{bottleneck_forward.3} parent=0 // pred_check_branch
    %1016 = sbr.rel (0) target = $region17
  $region16: #{bottleneck_forward.3} parent=0 // pred_region
    _
  $region17: #{bottleneck_forward.3} parent=0 // pred_fallthru
    _
  // Predicated region
  $region18: #{bottleneck_forward.3} parent=0 // pred_check
    _
  $region19: #{bottleneck_forward.3} parent=0 // pred_check_branch
    %1018 = sbr.rel (0) target = $region21
  $region20: #{bottleneck_forward.3} parent=0 // pred_region
    _
  $region21: #{bottleneck_forward.3} parent=0 // pred_fallthru
    _

// kernel: bottleneck_forward.5
$region0: #{bottleneck_forward.5}
  #allocation0 [shape = 'u32[]', space=smem, size = 0x4, offset = 0x4, fixed_abs, tag = 'smem constant byte address 0x4 - core index']
  #allocation1 [shape = 'u32[144,128]{1,0:T(1,128)}', space=vmem, size = 0x12000, scoped, tag = 'internal scratch']
  %s0 = inlined_call_operand.vmem [shape: bf16[512,128], index: 0, kind: input, shape index: {}]
  %s1 = inlined_call_operand.vmem [shape: bf16[128,128], index: 1, kind: input, shape index: {}]
  %s2 = inlined_call_operand.vmem [shape: bf16[512,128], index: 2, kind: input, shape index: {}]
  %s3 = inlined_call_operand.vmem [shape: bf16[128,128], index: 3, kind: input, shape index: {}]
  %s4 = inlined_call_operand.vmem [shape: f32[1,128], index: 4, kind: input, shape index: {}]
  %s5 = inlined_call_operand.vmem [shape: bf16[512,128], index: 5, kind: output, shape index: {}]
  %s6 = sld [smem:[#allocation0]]
  $region30: #{bottleneck_forward.5} parent=0
    _
  %s8 = ssub.s32 1, %s6
  %s9 = scalar_select 0, %s8, %s6
  // Predicated region
  $region2: #{bottleneck_forward.5} parent=0 // pred_check
    _
  $region3: #{bottleneck_forward.5} parent=0 // pred_check_branch
    %11 = sbr.rel (0) target = $region5
  $region4: #{bottleneck_forward.5} parent=0 // pred_region
    _
  $region5: #{bottleneck_forward.5} parent=0 // pred_fallthru
    _
  // Predicated region
  $region6: #{bottleneck_forward.5} parent=0 // pred_check
    _
  $region7: #{bottleneck_forward.5} parent=0 // pred_check_branch
    %13 = sbr.rel (0) target = $region9
  $region8: #{bottleneck_forward.5} parent=0 // pred_region
    _
  $region9: #{bottleneck_forward.5} parent=0 // pred_fallthru
    _
  // Predicated region
  $region10: #{bottleneck_forward.5} parent=0 // pred_check
    _
  $region11: #{bottleneck_forward.5} parent=0 // pred_check_branch
    %15 = sbr.rel (0) target = $region13
  $region12: #{bottleneck_forward.5} parent=0 // pred_region
    _
  $region13: #{bottleneck_forward.5} parent=0 // pred_fallthru
    _
  // Predicated region
  $region14: #{bottleneck_forward.5} parent=0 // pred_check
    _
  $region15: #{bottleneck_forward.5} parent=0 // pred_check_branch
    %17 = sbr.rel (0) target = $region17
  $region16: #{bottleneck_forward.5} parent=0 // pred_region
    _
  $region17: #{bottleneck_forward.5} parent=0 // pred_fallthru
    _
  // Predicated region
  $region18: #{bottleneck_forward.5} parent=0 // pred_check
    _
  $region19: #{bottleneck_forward.5} parent=0 // pred_check_branch
    %19 = sbr.rel (0) target = $region21
  $region20: #{bottleneck_forward.5} parent=0 // pred_region
    _
  $region21: #{bottleneck_forward.5} parent=0 // pred_fallthru
    _
  %v21 = vld [vmem:[%s0] sm:$0xf]
  %v22 = vld [vmem:[%s0 + $0x4] sm:$0xf]
  %v23 = vld [vmem:[%s0 + $0x8] sm:$0xf]
  %v24 = vld [vmem:[%s0 + $0xc] sm:$0xf]
  %v25 = vld [vmem:[%s0 + $0x10] sm:$0xf]
  %v26 = vld [vmem:[%s0 + $0x14] sm:$0xf]
  %v27 = vld [vmem:[%s0 + $0x18] sm:$0xf]
  %v28 = vld [vmem:[%s0 + $0x1c] sm:$0xf]
  %v29 = vld [vmem:[%s0 + $0x20] sm:$0xf]
  %v30 = vld [vmem:[%s0 + $0x24] sm:$0xf]
  %v31 = vld [vmem:[%s0 + $0x28] sm:$0xf]
  %v32 = vld [vmem:[%s0 + $0x2c] sm:$0xf]
  %v33 = vld [vmem:[%s0 + $0x30] sm:$0xf]
  %v34 = vld [vmem:[%s0 + $0x34] sm:$0xf]
  %v35 = vld [vmem:[%s0 + $0x38] sm:$0xf]
  %v36 = vld [vmem:[%s0 + $0x3c] sm:$0xf]
  %v37 = vld [vmem:[%s0 + $0x40] sm:$0xf]
  %v38 = vld [vmem:[%s0 + $0x44] sm:$0xf]
  %v39 = vld [vmem:[%s0 + $0x48] sm:$0xf]
  %v40 = vld [vmem:[%s0 + $0x4c] sm:$0xf]
  %v41 = vld [vmem:[%s0 + $0x50] sm:$0xf]
  %v42 = vld [vmem:[%s0 + $0x54] sm:$0xf]
  %v43 = vld [vmem:[%s0 + $0x58] sm:$0xf]
  %v44 = vld [vmem:[%s0 + $0x5c] sm:$0xf]
  %v45 = vld [vmem:[%s0 + $0x60] sm:$0xf]
  %v46 = vld [vmem:[%s0 + $0x64] sm:$0xf]
  %v47 = vld [vmem:[%s0 + $0x68] sm:$0xf]
  %v48 = vld [vmem:[%s0 + $0x6c] sm:$0xf]
  %v49 = vld [vmem:[%s0 + $0x70] sm:$0xf]
  %v50 = vld [vmem:[%s0 + $0x74] sm:$0xf]
  %v51 = vld [vmem:[%s0 + $0x78] sm:$0xf]
  %v52 = vld [vmem:[%s0 + $0x7c] sm:$0xf]
  %v53 = vld [vmem:[%s0 + $0x80] sm:$0xf]
  %v54 = vld [vmem:[%s0 + $0x84] sm:$0xf]
  %v55 = vld [vmem:[%s0 + $0x88] sm:$0xf]
  %v56 = vld [vmem:[%s0 + $0x8c] sm:$0xf]
  %v57 = vld [vmem:[%s0 + $0x90] sm:$0xf]
  %v58 = vld [vmem:[%s0 + $0x94] sm:$0xf]
  %v59 = vld [vmem:[%s0 + $0x98] sm:$0xf]
  %v60 = vld [vmem:[%s0 + $0x9c] sm:$0xf]
  %v61 = vld [vmem:[%s0 + $0xa0] sm:$0xf]
  %v62 = vld [vmem:[%s0 + $0xa4] sm:$0xf]
  %v63 = vld [vmem:[%s0 + $0xa8] sm:$0xf]
  %v64 = vld [vmem:[%s0 + $0xac] sm:$0xf]
  %v65 = vld [vmem:[%s0 + $0xb0] sm:$0xf]
  %v66 = vld [vmem:[%s0 + $0xb4] sm:$0xf]
  %v67 = vld [vmem:[%s0 + $0xb8] sm:$0xf]
  %v68 = vld [vmem:[%s0 + $0xbc] sm:$0xf]
  %v69 = vld [vmem:[%s0 + $0xc0] sm:$0xf]
  %v70 = vld [vmem:[%s0 + $0xc4] sm:$0xf]
  %v71 = vld [vmem:[%s0 + $0xc8] sm:$0xf]
  %v72 = vld [vmem:[%s0 + $0xcc] sm:$0xf]
  %v73 = vld [vmem:[%s0 + $0xd0] sm:$0xf]
  %v74 = vld [vmem:[%s0 + $0xd4] sm:$0xf]
  %v75 = vld [vmem:[%s0 + $0xd8] sm:$0xf]
  %v76 = vld [vmem:[%s0 + $0xdc] sm:$0xf]
  %v77 = vld [vmem:[%s0 + $0xe0] sm:$0xf]
  %v78 = vld [vmem:[%s0 + $0xe4] sm:$0xf]
  %v79 = vld [vmem:[%s0 + $0xe8] sm:$0xf]
  %v80 = vld [vmem:[%s0 + $0xec] sm:$0xf]
  %v81 = vld [vmem:[%s0 + $0xf0] sm:$0xf]
  %v82 = vld [vmem:[%s0 + $0xf4] sm:$0xf]
  %v83 = vld [vmem:[%s0 + $0xf8] sm:$0xf]
  %v84 = vld [vmem:[%s0 + $0xfc] sm:$0xf]
  %v85 = vld [vmem:[%s1] sm:$0xf]
  %v86 = vld [vmem:[%s1 + $0x4] sm:$0xf]
  %v87 = vld [vmem:[%s1 + $0x8] sm:$0xf]
  %v88 = vld [vmem:[%s1 + $0xc] sm:$0xf]
  %v89 = vld [vmem:[%s1 + $0x10] sm:$0xf]
  %v90 = vld [vmem:[%s1 + $0x14] sm:$0xf]
  %v91 = vld [vmem:[%s1 + $0x18] sm:$0xf]
  %v92 = vld [vmem:[%s1 + $0x1c] sm:$0xf]
  %v93 = vld [vmem:[%s1 + $0x20] sm:$0xf]
  %v94 = vld [vmem:[%s1 + $0x24] sm:$0xf]
  %v95 = vld [vmem:[%s1 + $0x28] sm:$0xf]
  %v96 = vld [vmem:[%s1 + $0x2c] sm:$0xf]
  %v97 = vld [vmem:[%s1 + $0x30] sm:$0xf]
  %v98 = vld [vmem:[%s1 + $0x34] sm:$0xf]
  %v99 = vld [vmem:[%s1 + $0x38] sm:$0xf]
  %v100 = vld [vmem:[%s1 + $0x3c] sm:$0xf]
  %v101 = vld [vmem:[%s2] sm:$0xf]
  %v102 = vld [vmem:[%s2 + $0x4] sm:$0xf]
  %v103 = vld [vmem:[%s2 + $0x8] sm:$0xf]
  %v104 = vld [vmem:[%s2 + $0xc] sm:$0xf]
  %v105 = vld [vmem:[%s2 + $0x10] sm:$0xf]
  %v106 = vld [vmem:[%s2 + $0x14] sm:$0xf]
  %v107 = vld [vmem:[%s2 + $0x18] sm:$0xf]
  %v108 = vld [vmem:[%s2 + $0x1c] sm:$0xf]
  %v109 = vld [vmem:[%s2 + $0x20] sm:$0xf]
  %v110 = vld [vmem:[%s2 + $0x24] sm:$0xf]
  %v111 = vld [vmem:[%s2 + $0x28] sm:$0xf]
  %v112 = vld [vmem:[%s2 + $0x2c] sm:$0xf]
  %v113 = vld [vmem:[%s2 + $0x30] sm:$0xf]
  %v114 = vld [vmem:[%s2 + $0x34] sm:$0xf]
  %v115 = vld [vmem:[%s2 + $0x38] sm:$0xf]
  %v116 = vld [vmem:[%s2 + $0x3c] sm:$0xf]
  %v117 = vld [vmem:[%s2 + $0x40] sm:$0xf]
  %v118 = vld [vmem:[%s2 + $0x44] sm:$0xf]
  %v119 = vld [vmem:[%s2 + $0x48] sm:$0xf]
  %v120 = vld [vmem:[%s2 + $0x4c] sm:$0xf]
  %v121 = vld [vmem:[%s2 + $0x50] sm:$0xf]
  %v122 = vld [vmem:[%s2 + $0x54] sm:$0xf]
  %v123 = vld [vmem:[%s2 + $0x58] sm:$0xf]
  %v124 = vld [vmem:[%s2 + $0x5c] sm:$0xf]
  %v125 = vld [vmem:[%s2 + $0x60] sm:$0xf]
  %v126 = vld [vmem:[%s2 + $0x64] sm:$0xf]
  %v127 = vld [vmem:[%s2 + $0x68] sm:$0xf]
  %v128 = vld [vmem:[%s2 + $0x6c] sm:$0xf]
  %v129 = vld [vmem:[%s2 + $0x70] sm:$0xf]
  %v130 = vld [vmem:[%s2 + $0x74] sm:$0xf]
  %v131 = vld [vmem:[%s2 + $0x78] sm:$0xf]
  %v132 = vld [vmem:[%s2 + $0x7c] sm:$0xf]
  %v133 = vld [vmem:[%s2 + $0x80] sm:$0xf]
  %v134 = vld [vmem:[%s2 + $0x84] sm:$0xf]
  %v135 = vld [vmem:[%s2 + $0x88] sm:$0xf]
  %v136 = vld [vmem:[%s2 + $0x8c] sm:$0xf]
  %v137 = vld [vmem:[%s2 + $0x90] sm:$0xf]
  %v138 = vld [vmem:[%s2 + $0x94] sm:$0xf]
  %v139 = vld [vmem:[%s2 + $0x98] sm:$0xf]
  %v140 = vld [vmem:[%s2 + $0x9c] sm:$0xf]
  %v141 = vld [vmem:[%s2 + $0xa0] sm:$0xf]
  %v142 = vld [vmem:[%s2 + $0xa4] sm:$0xf]
  %v143 = vld [vmem:[%s2 + $0xa8] sm:$0xf]
  %v144 = vld [vmem:[%s2 + $0xac] sm:$0xf]
  %v145 = vld [vmem:[%s2 + $0xb0] sm:$0xf]
  %v146 = vld [vmem:[%s2 + $0xb4] sm:$0xf]
  %v147 = vld [vmem:[%s2 + $0xb8] sm:$0xf]
  %v148 = vld [vmem:[%s2 + $0xbc] sm:$0xf]
  %v149 = vld [vmem:[%s2 + $0xc0] sm:$0xf]
  %v150 = vld [vmem:[%s2 + $0xc4] sm:$0xf]
  %v151 = vld [vmem:[%s2 + $0xc8] sm:$0xf]
  %v152 = vld [vmem:[%s2 + $0xcc] sm:$0xf]
  %v153 = vld [vmem:[%s2 + $0xd0] sm:$0xf]
  %v154 = vld [vmem:[%s2 + $0xd4] sm:$0xf]
  %v155 = vld [vmem:[%s2 + $0xd8] sm:$0xf]
  %v156 = vld [vmem:[%s2 + $0xdc] sm:$0xf]
  %v157 = vld [vmem:[%s2 + $0xe0] sm:$0xf]
  %v158 = vld [vmem:[%s2 + $0xe4] sm:$0xf]
  %v159 = vld [vmem:[%s2 + $0xe8] sm:$0xf]
  %v160 = vld [vmem:[%s2 + $0xec] sm:$0xf]
  %v161 = vld [vmem:[%s2 + $0xf0] sm:$0xf]
  %v162 = vld [vmem:[%s2 + $0xf4] sm:$0xf]
  %v163 = vld [vmem:[%s2 + $0xf8] sm:$0xf]
  %v164 = vld [vmem:[%s2 + $0xfc] sm:$0xf]
  %v165 = vld [vmem:[%s3] sm:$0xf]
  %v166 = vld [vmem:[%s3 + $0x4] sm:$0xf]
  %v167 = vld [vmem:[%s3 + $0x8] sm:$0xf]
  %v168 = vld [vmem:[%s3 + $0xc] sm:$0xf]
  %v169 = vld [vmem:[%s3 + $0x10] sm:$0xf]
  %v170 = vld [vmem:[%s3 + $0x14] sm:$0xf]
  %v171 = vld [vmem:[%s3 + $0x18] sm:$0xf]
  %v172 = vld [vmem:[%s3 + $0x1c] sm:$0xf]
  %v173 = vld [vmem:[%s3 + $0x20] sm:$0xf]
  %v174 = vld [vmem:[%s3 + $0x24] sm:$0xf]
  %v175 = vld [vmem:[%s3 + $0x28] sm:$0xf]
  %v176 = vld [vmem:[%s3 + $0x2c] sm:$0xf]
  %v177 = vld [vmem:[%s3 + $0x30] sm:$0xf]
  %v178 = vld [vmem:[%s3 + $0x34] sm:$0xf]
  %v179 = vld [vmem:[%s3 + $0x38] sm:$0xf]
  %v180 = vld [vmem:[%s3 + $0x3c] sm:$0xf]
  %v245 = vunpack.c.l.b16 %v101
  %v246 = vunpack.c.l.b16 %v102
  %v247 = vunpack.c.l.b16 %v103
  %v248 = vunpack.c.l.b16 %v104
  %v249 = vunpack.c.l.b16 %v105
  %v250 = vunpack.c.l.b16 %v106
  %v251 = vunpack.c.l.b16 %v107
  %v252 = vunpack.c.l.b16 %v108
  %v253 = vunpack.c.l.b16 %v109
  %v254 = vunpack.c.l.b16 %v110
  %v255 = vunpack.c.l.b16 %v111
  %v256 = vunpack.c.l.b16 %v112
  %v257 = vunpack.c.l.b16 %v113
  %v258 = vunpack.c.l.b16 %v114
  %v259 = vunpack.c.l.b16 %v115
  %v260 = vunpack.c.l.b16 %v116
  %v261 = vunpack.c.l.b16 %v117
  %v262 = vunpack.c.l.b16 %v118
  %v263 = vunpack.c.l.b16 %v119
  %v264 = vunpack.c.l.b16 %v120
  %v265 = vunpack.c.l.b16 %v121
  %v266 = vunpack.c.l.b16 %v122
  %v267 = vunpack.c.l.b16 %v123
  %v268 = vunpack.c.l.b16 %v124
  %v269 = vunpack.c.l.b16 %v125
  %v270 = vunpack.c.l.b16 %v126
  %v271 = vunpack.c.l.b16 %v127
  %v272 = vunpack.c.l.b16 %v128
  %v273 = vunpack.c.l.b16 %v129
  %v274 = vunpack.c.l.b16 %v130
  %v275 = vunpack.c.l.b16 %v131
  %v276 = vunpack.c.l.b16 %v132
  %v277 = vunpack.c.l.b16 %v133
  %v278 = vunpack.c.l.b16 %v134
  %v279 = vunpack.c.l.b16 %v135
  %v280 = vunpack.c.l.b16 %v136
  %v281 = vunpack.c.l.b16 %v137
  %v282 = vunpack.c.l.b16 %v138
  %v283 = vunpack.c.l.b16 %v139
  %v284 = vunpack.c.l.b16 %v140
  %v285 = vunpack.c.l.b16 %v141
  %v286 = vunpack.c.l.b16 %v142
  %v287 = vunpack.c.l.b16 %v143
  %v288 = vunpack.c.l.b16 %v144
  %v289 = vunpack.c.l.b16 %v145
  %v290 = vunpack.c.l.b16 %v146
  %v291 = vunpack.c.l.b16 %v147
  %v292 = vunpack.c.l.b16 %v148
  %v293 = vunpack.c.l.b16 %v149
  %v294 = vunpack.c.l.b16 %v150
  %v295 = vunpack.c.l.b16 %v151
  %v296 = vunpack.c.l.b16 %v152
  %v297 = vunpack.c.l.b16 %v153
  %v298 = vunpack.c.l.b16 %v154
  %v299 = vunpack.c.l.b16 %v155
  %v300 = vunpack.c.l.b16 %v156
  %v301 = vunpack.c.l.b16 %v157
  %v302 = vunpack.c.l.b16 %v158
  %v303 = vunpack.c.l.b16 %v159
  %v304 = vunpack.c.l.b16 %v160
  %v305 = vunpack.c.l.b16 %v161
  %v306 = vunpack.c.l.b16 %v162
  %v307 = vunpack.c.l.b16 %v163
  %v308 = vunpack.c.l.b16 %v164
  %v309 = vpack.c.b16 %v246, %v245
  %v310 = vpack.c.b16 %v248, %v247
  %v311 = vpack.c.b16 %v250, %v249
  %v312 = vpack.c.b16 %v252, %v251
  %v313 = vpack.c.b16 %v254, %v253
  %v314 = vpack.c.b16 %v256, %v255
  %v315 = vpack.c.b16 %v258, %v257
  %v316 = vpack.c.b16 %v260, %v259
  %v317 = vpack.c.b16 %v262, %v261
  %v318 = vpack.c.b16 %v264, %v263
  %v319 = vpack.c.b16 %v266, %v265
  %v320 = vpack.c.b16 %v268, %v267
  %v321 = vpack.c.b16 %v270, %v269
  %v322 = vpack.c.b16 %v272, %v271
  %v323 = vpack.c.b16 %v274, %v273
  %v324 = vpack.c.b16 %v276, %v275
  %v325 = vpack.c.b16 %v278, %v277
  %v326 = vpack.c.b16 %v280, %v279
  %v327 = vpack.c.b16 %v282, %v281
  %v328 = vpack.c.b16 %v284, %v283
  %v329 = vpack.c.b16 %v286, %v285
  %v330 = vpack.c.b16 %v288, %v287
  %v331 = vpack.c.b16 %v290, %v289
  %v332 = vpack.c.b16 %v292, %v291
  %v333 = vpack.c.b16 %v294, %v293
  %v334 = vpack.c.b16 %v296, %v295
  %v335 = vpack.c.b16 %v298, %v297
  %v336 = vpack.c.b16 %v300, %v299
  %v337 = vpack.c.b16 %v302, %v301
  %v338 = vpack.c.b16 %v304, %v303
  %v339 = vpack.c.b16 %v306, %v305
  %v340 = vpack.c.b16 %v308, %v307
  %v389 = vunpack.c.l.b16 %v165
  %v390 = vunpack.c.l.b16 %v166
  %v391 = vunpack.c.l.b16 %v167
  %v392 = vunpack.c.l.b16 %v168
  %v393 = vunpack.c.l.b16 %v169
  %v394 = vunpack.c.l.b16 %v170
  %v395 = vunpack.c.l.b16 %v171
  %v396 = vunpack.c.l.b16 %v172
  %v397 = vunpack.c.l.b16 %v173
  %v398 = vunpack.c.l.b16 %v174
  %v399 = vunpack.c.l.b16 %v175
  %v400 = vunpack.c.l.b16 %v176
  %v401 = vunpack.c.l.b16 %v177
  %v402 = vunpack.c.l.b16 %v178
  %v403 = vunpack.c.l.b16 %v179
  %v404 = vunpack.c.l.b16 %v180
  %v405 = vpack.c.b16 %v390, %v389
  %v406 = vpack.c.b16 %v392, %v391
  %v407 = vpack.c.b16 %v394, %v393
  %v408 = vpack.c.b16 %v396, %v395
  %v409 = vpack.c.b16 %v398, %v397
  %v410 = vpack.c.b16 %v400, %v399
  %v411 = vpack.c.b16 %v402, %v401
  %v412 = vpack.c.b16 %v404, %v403
  %421 = vmatprep.subr.bf16.mxu0 0
  %422 = vmatpush1.bf16.msra.mxu0 %v405
  %423 = vmatprep.subr.bf16.mxu0 0
  %424 = vmatpush1.bf16.msra.mxu0 %v406
  %425 = vmatprep.subr.bf16.mxu0 0
  %426 = vmatpush1.bf16.msra.mxu0 %v407
  %427 = vmatprep.subr.bf16.mxu0 0
  %428 = vmatpush1.bf16.msra.mxu0 %v408
  %429 = vmatprep.subr.bf16.mxu0 0
  %430 = vmatpush1.bf16.msra.mxu0 %v409
  %431 = vmatprep.subr.bf16.mxu0 0
  %432 = vmatpush1.bf16.msra.mxu0 %v410
  %433 = vmatprep.subr.bf16.mxu0 0
  %434 = vmatpush1.bf16.msra.mxu0 %v411
  %435 = vmatprep.subr.bf16.mxu0 0
  %436 = vmatpush1.bf16.msra.mxu0 %v412
  %437 = vmatprep.subr.bf16.mxu0 0
  %438 = vmatpush1.bf16.msra.mxu0 0
  %439 = vmatprep.subr.bf16.mxu0 0
  %440 = vmatpush1.bf16.msra.mxu0 0
  %441 = vmatprep.subr.bf16.mxu0 0
  %442 = vmatpush1.bf16.msra.mxu0 0
  %443 = vmatprep.subr.bf16.mxu0 0
  %444 = vmatpush1.bf16.msra.mxu0 0
  %445 = vmatprep.subr.bf16.mxu0 0
  %446 = vmatpush1.bf16.msra.mxu0 0
  %447 = vmatprep.subr.bf16.mxu0 0
  %448 = vmatpush1.bf16.msra.mxu0 0
  %449 = vmatprep.subr.bf16.mxu0 0
  %450 = vmatpush1.bf16.msra.mxu0 0
  %451 = vmatprep.subr.bf16.mxu0 0
  %452 = vmatpush1.bf16.msra.mxu0 0
  %453 = vmatprep.mubr.bf16.mxu0 0
  %454 = vmatmul.mubr.bf16.gmra.mrb[0].mxu0 %v309
  %v455 = vpop.f32.mrb[0].mxu0
  %v456 = vadd.f32 0.0, %v455
  %v457 = vpop.f32.mrb[0].mxu0
  %v458 = vpop.f32.mrb[0].mxu0
  %v459 = vadd.f32 0.0, %v458
  %v460 = vpop.f32.mrb[0].mxu0
  %461 = vmatprep.mubr.bf16.mxu0 0
  %462 = vmatmul.mubr.bf16.gmra.mrb[0].mxu0 %v310
  %v463 = vpop.f32.mrb[0].mxu0
  %v464 = vadd.f32 0.0, %v463
  %v465 = vpop.f32.mrb[0].mxu0
  %v466 = vpop.f32.mrb[0].mxu0
  %v467 = vadd.f32 0.0, %v466
  %v468 = vpop.f32.mrb[0].mxu0
  %469 = vmatprep.mubr.bf16.mxu0 0
  %470 = vmatmul.mubr.bf16.gmra.mrb[0].mxu0 %v311
  %v471 = vpop.f32.mrb[0].mxu0
  %v472 = vadd.f32 0.0, %v471
  %v473 = vpop.f32.mrb[0].mxu0
  %v474 = vpop.f32.mrb[0].mxu0
  %v475 = vadd.f32 0.0, %v474
  %v476 = vpop.f32.mrb[0].mxu0
  %477 = vmatprep.mubr.bf16.mxu0 0
  %478 = vmatmul.mubr.bf16.gmra.mrb[0].mxu0 %v312
  %v479 = vpop.f32.mrb[0].mxu0
  %v480 = vadd.f32 0.0, %v479
  %v481 = vpop.f32.mrb[0].mxu0
  %v482 = vpop.f32.mrb[0].mxu0
  %v483 = vadd.f32 0.0, %v482
  %v484 = vpop.f32.mrb[0].mxu0
  %485 = vmatprep.mubr.bf16.mxu0 0
  %486 = vmatmul.mubr.bf16.gmra.mrb[0].mxu0 %v313
  %v487 = vpop.f32.mrb[0].mxu0
  %v488 = vadd.f32 0.0, %v487
  %v489 = vpop.f32.mrb[0].mxu0
  %v490 = vpop.f32.mrb[0].mxu0
  %v491 = vadd.f32 0.0, %v490
  %v492 = vpop.f32.mrb[0].mxu0
  %493 = vmatprep.mubr.bf16.mxu0 0
  %494 = vmatmul.mubr.bf16.gmra.mrb[0].mxu0 %v314
  %v495 = vpop.f32.mrb[0].mxu0
  %v496 = vadd.f32 0.0, %v495
  %v497 = vpop.f32.mrb[0].mxu0
  %v498 = vpop.f32.mrb[0].mxu0
  %v499 = vadd.f32 0.0, %v498
  %v500 = vpop.f32.mrb[0].mxu0
  %501 = vmatprep.mubr.bf16.mxu0 0
  %502 = vmatmul.mubr.bf16.gmra.mrb[0].mxu0 %v315
  %v503 = vpop.f32.mrb[0].mxu0
  %v504 = vadd.f32 0.0, %v503
  %v505 = vpop.f32.mrb[0].mxu0
  %v506 = vpop.f32.mrb[0].mxu0
  %v507 = vadd.f32 0.0, %v506
  %v508 = vpop.f32.mrb[0].mxu0
  %509 = vmatprep.mubr.bf16.mxu0 0
  %510 = vmatmul.mubr.bf16.gmra.mrb[0].mxu0 %v316
  %v511 = vpop.f32.mrb[0].mxu0
  %v512 = vadd.f32 0.0, %v511
  %v513 = vpop.f32.mrb[0].mxu0
  %v514 = vpop.f32.mrb[0].mxu0
  %v515 = vadd.f32 0.0, %v514
  %v516 = vpop.f32.mrb[0].mxu0
  %517 = vmatprep.mubr.bf16.mxu0 0
  %518 = vmatmul.mubr.bf16.gmra.mrb[0].mxu0 %v317
  %v519 = vpop.f32.mrb[0].mxu0
  %v520 = vadd.f32 0.0, %v519
  %v521 = vpop.f32.mrb[0].mxu0
  %v522 = vpop.f32.mrb[0].mxu0
  %v523 = vadd.f32 0.0, %v522
  %v524 = vpop.f32.mrb[0].mxu0
  %525 = vmatprep.mubr.bf16.mxu0 0
  %526 = vmatmul.mubr.bf16.gmra.mrb[0].mxu0 %v318
  %v527 = vpop.f32.mrb[0].mxu0
  %v528 = vadd.f32 0.0, %v527
  %v529 = vpop.f32.mrb[0].mxu0
  %v530 = vpop.f32.mrb[0].mxu0
  %v531 = vadd.f32 0.0, %v530
  %v532 = vpop.f32.mrb[0].mxu0
  %533 = vmatprep.mubr.bf16.mxu0 0
  %534 = vmatmul.mubr.bf16.gmra.mrb[0].mxu0 %v319
  %v535 = vpop.f32.mrb[0].mxu0
  %v536 = vadd.f32 0.0, %v535
  %v537 = vpop.f32.mrb[0].mxu0
  %v538 = vpop.f32.mrb[0].mxu0
  %v539 = vadd.f32 0.0, %v538
  %v540 = vpop.f32.mrb[0].mxu0
  %541 = vmatprep.mubr.bf16.mxu0 0
  %542 = vmatmul.mubr.bf16.gmra.mrb[0].mxu0 %v320
  %v543 = vpop.f32.mrb[0].mxu0
  %v544 = vadd.f32 0.0, %v543
  %v545 = vpop.f32.mrb[0].mxu0
  %v546 = vpop.f32.mrb[0].mxu0
  %v547 = vadd.f32 0.0, %v546
  %v548 = vpop.f32.mrb[0].mxu0
  %549 = vmatprep.mubr.bf16.mxu0 0
  %550 = vmatmul.mubr.bf16.gmra.mrb[0].mxu0 %v321
  %v551 = vpop.f32.mrb[0].mxu0
  %v552 = vadd.f32 0.0, %v551
  %v553 = vpop.f32.mrb[0].mxu0
  %v554 = vpop.f32.mrb[0].mxu0
  %v555 = vadd.f32 0.0, %v554
  %v556 = vpop.f32.mrb[0].mxu0
  %557 = vmatprep.mubr.bf16.mxu0 0
  %558 = vmatmul.mubr.bf16.gmra.mrb[0].mxu0 %v322
  %v559 = vpop.f32.mrb[0].mxu0
  %v560 = vadd.f32 0.0, %v559
  %v561 = vpop.f32.mrb[0].mxu0
  %v562 = vpop.f32.mrb[0].mxu0
  %v563 = vadd.f32 0.0, %v562
  %v564 = vpop.f32.mrb[0].mxu0
  %565 = vmatprep.mubr.bf16.mxu0 0
  %566 = vmatmul.mubr.bf16.gmra.mrb[0].mxu0 %v323
  %v567 = vpop.f32.mrb[0].mxu0
  %v568 = vadd.f32 0.0, %v567
  %v569 = vpop.f32.mrb[0].mxu0
  %v570 = vpop.f32.mrb[0].mxu0
  %v571 = vadd.f32 0.0, %v570
  %v572 = vpop.f32.mrb[0].mxu0
  %573 = vmatprep.mubr.bf16.mxu0 0
  %574 = vmatmul.mubr.bf16.gmra.mrb[0].mxu0 %v324
  %v575 = vpop.f32.mrb[0].mxu0
  %v576 = vadd.f32 0.0, %v575
  %v577 = vpop.f32.mrb[0].mxu0
  %v578 = vpop.f32.mrb[0].mxu0
  %v579 = vadd.f32 0.0, %v578
  %v580 = vpop.f32.mrb[0].mxu0
  %581 = vmatprep.mubr.bf16.mxu0 0
  %582 = vmatmul.mubr.bf16.gmra.mrb[0].mxu0 %v325
  %v583 = vpop.f32.mrb[0].mxu0
  %v584 = vadd.f32 0.0, %v583
  %v585 = vpop.f32.mrb[0].mxu0
  %v586 = vpop.f32.mrb[0].mxu0
  %v587 = vadd.f32 0.0, %v586
  %v588 = vpop.f32.mrb[0].mxu0
  %589 = vmatprep.mubr.bf16.mxu0 0
  %590 = vmatmul.mubr.bf16.gmra.mrb[0].mxu0 %v326
  %v591 = vpop.f32.mrb[0].mxu0
  %v592 = vadd.f32 0.0, %v591
  %v593 = vpop.f32.mrb[0].mxu0
  %v594 = vpop.f32.mrb[0].mxu0
  %v595 = vadd.f32 0.0, %v594
  %v596 = vpop.f32.mrb[0].mxu0
  %597 = vmatprep.mubr.bf16.mxu0 0
  %598 = vmatmul.mubr.bf16.gmra.mrb[0].mxu0 %v327
  %v599 = vpop.f32.mrb[0].mxu0
  %v600 = vadd.f32 0.0, %v599
  %v601 = vpop.f32.mrb[0].mxu0
  %v602 = vpop.f32.mrb[0].mxu0
  %v603 = vadd.f32 0.0, %v602
  %v604 = vpop.f32.mrb[0].mxu0
  %605 = vmatprep.mubr.bf16.mxu0 0
  %606 = vmatmul.mubr.bf16.gmra.mrb[0].mxu0 %v328
  %v607 = vpop.f32.mrb[0].mxu0
  %v608 = vadd.f32 0.0, %v607
  %v609 = vpop.f32.mrb[0].mxu0
  %v610 = vpop.f32.mrb[0].mxu0
  %v611 = vadd.f32 0.0, %v610
  %v612 = vpop.f32.mrb[0].mxu0
  %613 = vmatprep.mubr.bf16.mxu0 0
  %614 = vmatmul.mubr.bf16.gmra.mrb[0].mxu0 %v329
  %v615 = vpop.f32.mrb[0].mxu0
  %v616 = vadd.f32 0.0, %v615
  %v617 = vpop.f32.mrb[0].mxu0
  %v618 = vpop.f32.mrb[0].mxu0
  %v619 = vadd.f32 0.0, %v618
  %v620 = vpop.f32.mrb[0].mxu0
  %621 = vmatprep.mubr.bf16.mxu0 0
  %622 = vmatmul.mubr.bf16.gmra.mrb[0].mxu0 %v330
  %v623 = vpop.f32.mrb[0].mxu0
  %v624 = vadd.f32 0.0, %v623
  %v625 = vpop.f32.mrb[0].mxu0
  %v626 = vpop.f32.mrb[0].mxu0
  %v627 = vadd.f32 0.0, %v626
  %v628 = vpop.f32.mrb[0].mxu0
  %629 = vmatprep.mubr.bf16.mxu0 0
  %630 = vmatmul.mubr.bf16.gmra.mrb[0].mxu0 %v331
  %v631 = vpop.f32.mrb[0].mxu0
  %v632 = vadd.f32 0.0, %v631
  %v633 = vpop.f32.mrb[0].mxu0
  %v634 = vpop.f32.mrb[0].mxu0
  %v635 = vadd.f32 0.0, %v634
  %v636 = vpop.f32.mrb[0].mxu0
  %637 = vmatprep.mubr.bf16.mxu0 0
  %638 = vmatmul.mubr.bf16.gmra.mrb[0].mxu0 %v332
  %v639 = vpop.f32.mrb[0].mxu0
  %v640 = vadd.f32 0.0, %v639
  %v641 = vpop.f32.mrb[0].mxu0
  %v642 = vpop.f32.mrb[0].mxu0
  %v643 = vadd.f32 0.0, %v642
  %v644 = vpop.f32.mrb[0].mxu0
  %645 = vmatprep.mubr.bf16.mxu0 0
  %646 = vmatmul.mubr.bf16.gmra.mrb[0].mxu0 %v333
  %v647 = vpop.f32.mrb[0].mxu0
  %v648 = vadd.f32 0.0, %v647
  %v649 = vpop.f32.mrb[0].mxu0
  %v650 = vpop.f32.mrb[0].mxu0
  %v651 = vadd.f32 0.0, %v650
  %v652 = vpop.f32.mrb[0].mxu0
  %653 = vmatprep.mubr.bf16.mxu0 0
  %654 = vmatmul.mubr.bf16.gmra.mrb[0].mxu0 %v334
  %v655 = vpop.f32.mrb[0].mxu0
  %v656 = vadd.f32 0.0, %v655
  %v657 = vpop.f32.mrb[0].mxu0
  %v658 = vpop.f32.mrb[0].mxu0
  %v659 = vadd.f32 0.0, %v658
  %v660 = vpop.f32.mrb[0].mxu0
  %661 = vmatprep.mubr.bf16.mxu0 0
  %662 = vmatmul.mubr.bf16.gmra.mrb[0].mxu0 %v335
  %v663 = vpop.f32.mrb[0].mxu0
  %v664 = vadd.f32 0.0, %v663
  %v665 = vpop.f32.mrb[0].mxu0
  %v666 = vpop.f32.mrb[0].mxu0
  %v667 = vadd.f32 0.0, %v666
  %v668 = vpop.f32.mrb[0].mxu0
  %669 = vmatprep.mubr.bf16.mxu0 0
  %670 = vmatmul.mubr.bf16.gmra.mrb[0].mxu0 %v336
  %v671 = vpop.f32.mrb[0].mxu0
  %v672 = vadd.f32 0.0, %v671
  %v673 = vpop.f32.mrb[0].mxu0
  %v674 = vpop.f32.mrb[0].mxu0
  %v675 = vadd.f32 0.0, %v674
  %v676 = vpop.f32.mrb[0].mxu0
  %677 = vmatprep.mubr.bf16.mxu0 0
  %678 = vmatmul.mubr.bf16.gmra.mrb[0].mxu0 %v337
  %v679 = vpop.f32.mrb[0].mxu0
  %v680 = vadd.f32 0.0, %v679
  %v681 = vpop.f32.mrb[0].mxu0
  %v682 = vpop.f32.mrb[0].mxu0
  %v683 = vadd.f32 0.0, %v682
  %v684 = vpop.f32.mrb[0].mxu0
  %685 = vmatprep.mubr.bf16.mxu0 0
  %686 = vmatmul.mubr.bf16.gmra.mrb[0].mxu0 %v338
  %v687 = vpop.f32.mrb[0].mxu0
  %v688 = vadd.f32 0.0, %v687
  %v689 = vpop.f32.mrb[0].mxu0
  %v690 = vpop.f32.mrb[0].mxu0
  %v691 = vadd.f32 0.0, %v690
  %v692 = vpop.f32.mrb[0].mxu0
  %693 = vmatprep.mubr.bf16.mxu0 0
  %694 = vmatmul.mubr.bf16.gmra.mrb[0].mxu0 %v339
  %v695 = vpop.f32.mrb[0].mxu0
  %v696 = vadd.f32 0.0, %v695
  %v697 = vpop.f32.mrb[0].mxu0
  %v698 = vpop.f32.mrb[0].mxu0
  %v699 = vadd.f32 0.0, %v698
  %v700 = vpop.f32.mrb[0].mxu0
  %701 = vmatprep.mubr.bf16.mxu0 0
  %702 = vmatmul.mubr.bf16.gmra.mrb[0].mxu0 %v340
  %v703 = vpop.f32.mrb[0].mxu0
  %v704 = vadd.f32 0.0, %v703
  %v705 = vpop.f32.mrb[0].mxu0
  %v706 = vpop.f32.mrb[0].mxu0
  %v707 = vadd.f32 0.0, %v706
  %v708 = vpop.f32.mrb[0].mxu0
  %709 = vdwg.mxu0
  %v774 = vunpack.c.l.b16 %v21
  %v775 = vunpack.c.l.b16 %v22
  %v776 = vunpack.c.l.b16 %v23
  %v777 = vunpack.c.l.b16 %v24
  %v778 = vunpack.c.l.b16 %v25
  %v779 = vunpack.c.l.b16 %v26
  %v780 = vunpack.c.l.b16 %v27
  %v781 = vunpack.c.l.b16 %v28
  %v782 = vunpack.c.l.b16 %v29
  %v783 = vunpack.c.l.b16 %v30
  %v784 = vunpack.c.l.b16 %v31
  %v785 = vunpack.c.l.b16 %v32
  %v786 = vunpack.c.l.b16 %v33
  %v787 = vunpack.c.l.b16 %v34
  %v788 = vunpack.c.l.b16 %v35
  %v789 = vunpack.c.l.b16 %v36
  %v790 = vunpack.c.l.b16 %v37
  %v791 = vunpack.c.l.b16 %v38
  %v792 = vunpack.c.l.b16 %v39
  %v793 = vunpack.c.l.b16 %v40
  %v794 = vunpack.c.l.b16 %v41
  %v795 = vunpack.c.l.b16 %v42
  %v796 = vunpack.c.l.b16 %v43
  %v797 = vunpack.c.l.b16 %v44
  %v798 = vunpack.c.l.b16 %v45
  %v799 = vunpack.c.l.b16 %v46
  %v800 = vunpack.c.l.b16 %v47
  %v801 = vunpack.c.l.b16 %v48
  %v802 = vunpack.c.l.b16 %v49
  %v803 = vunpack.c.l.b16 %v50
  %v804 = vunpack.c.l.b16 %v51
  %v805 = vunpack.c.l.b16 %v52
  %v806 = vunpack.c.l.b16 %v53
  %v807 = vunpack.c.l.b16 %v54
  %v808 = vunpack.c.l.b16 %v55
  %v809 = vunpack.c.l.b16 %v56
  %v810 = vunpack.c.l.b16 %v57
  %v811 = vunpack.c.l.b16 %v58
  %v812 = vunpack.c.l.b16 %v59
  %v813 = vunpack.c.l.b16 %v60
  %v814 = vunpack.c.l.b16 %v61
  %v815 = vunpack.c.l.b16 %v62
  %v816 = vunpack.c.l.b16 %v63
  %v817 = vunpack.c.l.b16 %v64
  %v818 = vunpack.c.l.b16 %v65
  %v819 = vunpack.c.l.b16 %v66
  %v820 = vunpack.c.l.b16 %v67
  %v821 = vunpack.c.l.b16 %v68
  %v822 = vunpack.c.l.b16 %v69
  %v823 = vunpack.c.l.b16 %v70
  %v824 = vunpack.c.l.b16 %v71
  %v825 = vunpack.c.l.b16 %v72
  %v826 = vunpack.c.l.b16 %v73
  %v827 = vunpack.c.l.b16 %v74
  %v828 = vunpack.c.l.b16 %v75
  %v829 = vunpack.c.l.b16 %v76
  %v830 = vunpack.c.l.b16 %v77
  %v831 = vunpack.c.l.b16 %v78
  %v832 = vunpack.c.l.b16 %v79
  %v833 = vunpack.c.l.b16 %v80
  %v834 = vunpack.c.l.b16 %v81
  %v835 = vunpack.c.l.b16 %v82
  %v836 = vunpack.c.l.b16 %v83
  %v837 = vunpack.c.l.b16 %v84
  %v838 = vpack.c.b16 %v775, %v774
  %v839 = vpack.c.b16 %v777, %v776
  %v840 = vpack.c.b16 %v779, %v778
  %v841 = vpack.c.b16 %v781, %v780
  %v842 = vpack.c.b16 %v783, %v782
  %v843 = vpack.c.b16 %v785, %v784
  %v844 = vpack.c.b16 %v787, %v786
  %v845 = vpack.c.b16 %v789, %v788
  %v846 = vpack.c.b16 %v791, %v790
  %v847 = vpack.c.b16 %v793, %v792
  %v848 = vpack.c.b16 %v795, %v794
  %v849 = vpack.c.b16 %v797, %v796
  %v850 = vpack.c.b16 %v799, %v798
  %v851 = vpack.c.b16 %v801, %v800
  %v852 = vpack.c.b16 %v803, %v802
  %v853 = vpack.c.b16 %v805, %v804
  %v854 = vpack.c.b16 %v807, %v806
  %v855 = vpack.c.b16 %v809, %v808
  %v856 = vpack.c.b16 %v811, %v810
  %v857 = vpack.c.b16 %v813, %v812
  %v858 = vpack.c.b16 %v815, %v814
  %v859 = vpack.c.b16 %v817, %v816
  %v860 = vpack.c.b16 %v819, %v818
  %v861 = vpack.c.b16 %v821, %v820
  %v862 = vpack.c.b16 %v823, %v822
  %v863 = vpack.c.b16 %v825, %v824
  %v864 = vpack.c.b16 %v827, %v826
  %v865 = vpack.c.b16 %v829, %v828
  %v866 = vpack.c.b16 %v831, %v830
  %v867 = vpack.c.b16 %v833, %v832
  %v868 = vpack.c.b16 %v835, %v834
  %v869 = vpack.c.b16 %v837, %v836
  %v918 = vunpack.c.l.b16 %v85
  %v919 = vunpack.c.l.b16 %v86
  %v920 = vunpack.c.l.b16 %v87
  %v921 = vunpack.c.l.b16 %v88
  %v922 = vunpack.c.l.b16 %v89
  %v923 = vunpack.c.l.b16 %v90
  %v924 = vunpack.c.l.b16 %v91
  %v925 = vunpack.c.l.b16 %v92
  %v926 = vunpack.c.l.b16 %v93
  %v927 = vunpack.c.l.b16 %v94
  %v928 = vunpack.c.l.b16 %v95
  %v929 = vunpack.c.l.b16 %v96
  %v930 = vunpack.c.l.b16 %v97
  %v931 = vunpack.c.l.b16 %v98
  %v932 = vunpack.c.l.b16 %v99
  %v933 = vunpack.c.l.b16 %v100
  %v934 = vpack.c.b16 %v919, %v918
  %v935 = vpack.c.b16 %v921, %v920
  %v936 = vpack.c.b16 %v923, %v922
  %v937 = vpack.c.b16 %v925, %v924
  %v938 = vpack.c.b16 %v927, %v926
  %v939 = vpack.c.b16 %v929, %v928
  %v940 = vpack.c.b16 %v931, %v930
  %v941 = vpack.c.b16 %v933, %v932
  %950 = vmatprep.subr.bf16.mxu0 0
  %951 = vmatpush1.bf16.msra.mxu0 %v934
  %952 = vmatprep.subr.bf16.mxu0 0
  %953 = vmatpush1.bf16.msra.mxu0 %v935
  %954 = vmatprep.subr.bf16.mxu0 0
  %955 = vmatpush1.bf16.msra.mxu0 %v936
  %956 = vmatprep.subr.bf16.mxu0 0
  %957 = vmatpush1.bf16.msra.mxu0 %v937
  %958 = vmatprep.subr.bf16.mxu0 0
  %959 = vmatpush1.bf16.msra.mxu0 %v938
  %960 = vmatprep.subr.bf16.mxu0 0
  %961 = vmatpush1.bf16.msra.mxu0 %v939
  %962 = vmatprep.subr.bf16.mxu0 0
  %963 = vmatpush1.bf16.msra.mxu0 %v940
  %964 = vmatprep.subr.bf16.mxu0 0
  %965 = vmatpush1.bf16.msra.mxu0 %v941
  %966 = vmatprep.subr.bf16.mxu0 0
  %967 = vmatpush1.bf16.msra.mxu0 0
  %968 = vmatprep.subr.bf16.mxu0 0
  %969 = vmatpush1.bf16.msra.mxu0 0
  %970 = vmatprep.subr.bf16.mxu0 0
  %971 = vmatpush1.bf16.msra.mxu0 0
  %972 = vmatprep.subr.bf16.mxu0 0
  %973 = vmatpush1.bf16.msra.mxu0 0
  %974 = vmatprep.subr.bf16.mxu0 0
  %975 = vmatpush1.bf16.msra.mxu0 0
  %976 = vmatprep.subr.bf16.mxu0 0
  %977 = vmatpush1.bf16.msra.mxu0 0
  %978 = vmatprep.subr.bf16.mxu0 0
  %979 = vmatpush1.bf16.msra.mxu0 0
  %980 = vmatprep.subr.bf16.mxu0 0
  %981 = vmatpush1.bf16.msra.mxu0 0
  %982 = vmatprep.mubr.bf16.mxu0 0
  %983 = vmatmul.mubr.bf16.gmra.mrb[0].mxu0 %v838
  %v984 = vpop.f32.mrb[0].mxu0
  %v985 = vadd.f32 %v456, %v984
  %v986 = vpop.f32.mrb[0].mxu0
  %v987 = vpop.f32.mrb[0].mxu0
  %v988 = vadd.f32 %v459, %v987
  %v989 = vpop.f32.mrb[0].mxu0
  %990 = vmatprep.mubr.bf16.mxu0 0
  %991 = vmatmul.mubr.bf16.gmra.mrb[0].mxu0 %v839
  %v992 = vpop.f32.mrb[0].mxu0
  %v993 = vadd.f32 %v464, %v992
  %v994 = vpop.f32.mrb[0].mxu0
  %v995 = vpop.f32.mrb[0].mxu0
  %v996 = vadd.f32 %v467, %v995
  %v997 = vpop.f32.mrb[0].mxu0
  %998 = vmatprep.mubr.bf16.mxu0 0
  %999 = vmatmul.mubr.bf16.gmra.mrb[0].mxu0 %v840
  %v1000 = vpop.f32.mrb[0].mxu0
  %v1001 = vadd.f32 %v472, %v1000
  %v1002 = vpop.f32.mrb[0].mxu0
  %v1003 = vpop.f32.mrb[0].mxu0
  %v1004 = vadd.f32 %v475, %v1003
  %v1005 = vpop.f32.mrb[0].mxu0
  %1006 = vmatprep.mubr.bf16.mxu0 0
  %1007 = vmatmul.mubr.bf16.gmra.mrb[0].mxu0 %v841
  %v1008 = vpop.f32.mrb[0].mxu0
  %v1009 = vadd.f32 %v480, %v1008
  %v1010 = vpop.f32.mrb[0].mxu0
  %v1011 = vpop.f32.mrb[0].mxu0
  %v1012 = vadd.f32 %v483, %v1011
  %v1013 = vpop.f32.mrb[0].mxu0
  %1014 = vmatprep.mubr.bf16.mxu0 0
  %1015 = vmatmul.mubr.bf16.gmra.mrb[0].mxu0 %v842
  %v1016 = vpop.f32.mrb[0].mxu0
  %v1017 = vadd.f32 %v488, %v1016
  %v1018 = vpop.f32.mrb[0].mxu0
  %v1019 = vpop.f32.mrb[0].mxu0
  %v1020 = vadd.f32 %v491, %v1019
  %v1021 = vpop.f32.mrb[0].mxu0
  %1022 = vmatprep.mubr.bf16.mxu0 0
  %1023 = vmatmul.mubr.bf16.gmra.mrb[0].mxu0 %v843
  %v1024 = vpop.f32.mrb[0].mxu0
  %v1025 = vadd.f32 %v496, %v1024
  %v1026 = vpop.f32.mrb[0].mxu0
  %v1027 = vpop.f32.mrb[0].mxu0
  %v1028 = vadd.f32 %v499, %v1027
  %v1029 = vpop.f32.mrb[0].mxu0
  %1030 = vmatprep.mubr.bf16.mxu0 0
  %1031 = vmatmul.mubr.bf16.gmra.mrb[0].mxu0 %v844
  %v1032 = vpop.f32.mrb[0].mxu0
  %v1033 = vadd.f32 %v504, %v1032
  %v1034 = vpop.f32.mrb[0].mxu0
  %v1035 = vpop.f32.mrb[0].mxu0
  %v1036 = vadd.f32 %v507, %v1035
  %v1037 = vpop.f32.mrb[0].mxu0
  %1038 = vmatprep.mubr.bf16.mxu0 0
  %1039 = vmatmul.mubr.bf16.gmra.mrb[0].mxu0 %v845
  %v1040 = vpop.f32.mrb[0].mxu0
  %v1041 = vadd.f32 %v512, %v1040
  %v1042 = vpop.f32.mrb[0].mxu0
  %v1043 = vpop.f32.mrb[0].mxu0
  %v1044 = vadd.f32 %v515, %v1043
  %v1045 = vpop.f32.mrb[0].mxu0
  %1046 = vmatprep.mubr.bf16.mxu0 0
  %1047 = vmatmul.mubr.bf16.gmra.mrb[0].mxu0 %v846
  %v1048 = vpop.f32.mrb[0].mxu0
  %v1049 = vadd.f32 %v520, %v1048
  %v1050 = vpop.f32.mrb[0].mxu0
  %v1051 = vpop.f32.mrb[0].mxu0
  %v1052 = vadd.f32 %v523, %v1051
  %v1053 = vpop.f32.mrb[0].mxu0
  %1054 = vmatprep.mubr.bf16.mxu0 0
  %1055 = vmatmul.mubr.bf16.gmra.mrb[0].mxu0 %v847
  %v1056 = vpop.f32.mrb[0].mxu0
  %v1057 = vadd.f32 %v528, %v1056
  %v1058 = vpop.f32.mrb[0].mxu0
  %v1059 = vpop.f32.mrb[0].mxu0
  %v1060 = vadd.f32 %v531, %v1059
  %v1061 = vpop.f32.mrb[0].mxu0
  %1062 = vmatprep.mubr.bf16.mxu0 0
  %1063 = vmatmul.mubr.bf16.gmra.mrb[0].mxu0 %v848
  %v1064 = vpop.f32.mrb[0].mxu0
  %v1065 = vadd.f32 %v536, %v1064
  %v1066 = vpop.f32.mrb[0].mxu0
  %v1067 = vpop.f32.mrb[0].mxu0
  %v1068 = vadd.f32 %v539, %v1067
  %v1069 = vpop.f32.mrb[0].mxu0
  %1070 = vmatprep.mubr.bf16.mxu0 0
  %1071 = vmatmul.mubr.bf16.gmra.mrb[0].mxu0 %v849
  %v1072 = vpop.f32.mrb[0].mxu0
  %v1073 = vadd.f32 %v544, %v1072
  %v1074 = vpop.f32.mrb[0].mxu0
  %v1075 = vpop.f32.mrb[0].mxu0
  %v1076 = vadd.f32 %v547, %v1075
  %v1077 = vpop.f32.mrb[0].mxu0
  %1078 = vmatprep.mubr.bf16.mxu0 0
  %1079 = vmatmul.mubr.bf16.gmra.mrb[0].mxu0 %v850
  %v1080 = vpop.f32.mrb[0].mxu0
  %v1081 = vadd.f32 %v552, %v1080
  %v1082 = vpop.f32.mrb[0].mxu0
  %v1083 = vpop.f32.mrb[0].mxu0
  %v1084 = vadd.f32 %v555, %v1083
  %v1085 = vpop.f32.mrb[0].mxu0
  %1086 = vmatprep.mubr.bf16.mxu0 0
  %1087 = vmatmul.mubr.bf16.gmra.mrb[0].mxu0 %v851
  %v1088 = vpop.f32.mrb[0].mxu0
  %v1089 = vadd.f32 %v560, %v1088
  %v1090 = vpop.f32.mrb[0].mxu0
  %v1091 = vpop.f32.mrb[0].mxu0
  %v1092 = vadd.f32 %v563, %v1091
  %v1093 = vpop.f32.mrb[0].mxu0
  %1094 = vmatprep.mubr.bf16.mxu0 0
  %1095 = vmatmul.mubr.bf16.gmra.mrb[0].mxu0 %v852
  %v1096 = vpop.f32.mrb[0].mxu0
  %v1097 = vadd.f32 %v568, %v1096
  %v1098 = vpop.f32.mrb[0].mxu0
  %v1099 = vpop.f32.mrb[0].mxu0
  %v1100 = vadd.f32 %v571, %v1099
  %v1101 = vpop.f32.mrb[0].mxu0
  %1102 = vmatprep.mubr.bf16.mxu0 0
  %1103 = vmatmul.mubr.bf16.gmra.mrb[0].mxu0 %v853
  %v1104 = vpop.f32.mrb[0].mxu0
  %v1105 = vadd.f32 %v576, %v1104
  %v1106 = vpop.f32.mrb[0].mxu0
  %v1107 = vpop.f32.mrb[0].mxu0
  %v1108 = vadd.f32 %v579, %v1107
  %v1109 = vpop.f32.mrb[0].mxu0
  %1110 = vmatprep.mubr.bf16.mxu0 0
  %1111 = vmatmul.mubr.bf16.gmra.mrb[0].mxu0 %v854
  %v1112 = vpop.f32.mrb[0].mxu0
  %v1113 = vadd.f32 %v584, %v1112
  %v1114 = vpop.f32.mrb[0].mxu0
  %v1115 = vpop.f32.mrb[0].mxu0
  %v1116 = vadd.f32 %v587, %v1115
  %v1117 = vpop.f32.mrb[0].mxu0
  %1118 = vmatprep.mubr.bf16.mxu0 0
  %1119 = vmatmul.mubr.bf16.gmra.mrb[0].mxu0 %v855
  %v1120 = vpop.f32.mrb[0].mxu0
  %v1121 = vadd.f32 %v592, %v1120
  %v1122 = vpop.f32.mrb[0].mxu0
  %v1123 = vpop.f32.mrb[0].mxu0
  %v1124 = vadd.f32 %v595, %v1123
  %v1125 = vpop.f32.mrb[0].mxu0
  %1126 = vmatprep.mubr.bf16.mxu0 0
  %1127 = vmatmul.mubr.bf16.gmra.mrb[0].mxu0 %v856
  %v1128 = vpop.f32.mrb[0].mxu0
  %v1129 = vadd.f32 %v600, %v1128
  %v1130 = vpop.f32.mrb[0].mxu0
  %v1131 = vpop.f32.mrb[0].mxu0
  %v1132 = vadd.f32 %v603, %v1131
  %v1133 = vpop.f32.mrb[0].mxu0
  %1134 = vmatprep.mubr.bf16.mxu0 0
  %1135 = vmatmul.mubr.bf16.gmra.mrb[0].mxu0 %v857
  %v1136 = vpop.f32.mrb[0].mxu0
  %v1137 = vadd.f32 %v608, %v1136
  %v1138 = vpop.f32.mrb[0].mxu0
  %v1139 = vpop.f32.mrb[0].mxu0
  %v1140 = vadd.f32 %v611, %v1139
  %v1141 = vpop.f32.mrb[0].mxu0
  %1142 = vmatprep.mubr.bf16.mxu0 0
  %1143 = vmatmul.mubr.bf16.gmra.mrb[0].mxu0 %v858
  %v1144 = vpop.f32.mrb[0].mxu0
  %v1145 = vadd.f32 %v616, %v1144
  %v1146 = vpop.f32.mrb[0].mxu0
  %v1147 = vpop.f32.mrb[0].mxu0
  %v1148 = vadd.f32 %v619, %v1147
  %v1149 = vpop.f32.mrb[0].mxu0
  %1150 = vmatprep.mubr.bf16.mxu0 0
  %1151 = vmatmul.mubr.bf16.gmra.mrb[0].mxu0 %v859
  %v1152 = vpop.f32.mrb[0].mxu0
  %v1153 = vadd.f32 %v624, %v1152
  %v1154 = vpop.f32.mrb[0].mxu0
  %v1155 = vpop.f32.mrb[0].mxu0
  %v1156 = vadd.f32 %v627, %v1155
  %v1157 = vpop.f32.mrb[0].mxu0
  %1158 = vmatprep.mubr.bf16.mxu0 0
  %1159 = vmatmul.mubr.bf16.gmra.mrb[0].mxu0 %v860
  %v1160 = vpop.f32.mrb[0].mxu0
  %v1161 = vadd.f32 %v632, %v1160
  %v1162 = vpop.f32.mrb[0].mxu0
  %v1163 = vpop.f32.mrb[0].mxu0
  %v1164 = vadd.f32 %v635, %v1163
  %v1165 = vpop.f32.mrb[0].mxu0
  %1166 = vmatprep.mubr.bf16.mxu0 0
  %1167 = vmatmul.mubr.bf16.gmra.mrb[0].mxu0 %v861
  %v1168 = vpop.f32.mrb[0].mxu0
  %v1169 = vadd.f32 %v640, %v1168
  %v1170 = vpop.f32.mrb[0].mxu0
  %v1171 = vpop.f32.mrb[0].mxu0
  %v1172 = vadd.f32 %v643, %v1171
  %v1173 = vpop.f32.mrb[0].mxu0
  %1174 = vmatprep.mubr.bf16.mxu0 0
  %1175 = vmatmul.mubr.bf16.gmra.mrb[0].mxu0 %v862
  %v1176 = vpop.f32.mrb[0].mxu0
  %v1177 = vadd.f32 %v648, %v1176
  %v1178 = vpop.f32.mrb[0].mxu0
  %v1179 = vpop.f32.mrb[0].mxu0
  %v1180 = vadd.f32 %v651, %v1179
  %v1181 = vpop.f32.mrb[0].mxu0
  %1182 = vmatprep.mubr.bf16.mxu0 0
  %1183 = vmatmul.mubr.bf16.gmra.mrb[0].mxu0 %v863
  %v1184 = vpop.f32.mrb[0].mxu0
  %v1185 = vadd.f32 %v656, %v1184
  %v1186 = vpop.f32.mrb[0].mxu0
  %v1187 = vpop.f32.mrb[0].mxu0
  %v1188 = vadd.f32 %v659, %v1187
  %v1189 = vpop.f32.mrb[0].mxu0
  %1190 = vmatprep.mubr.bf16.mxu0 0
  %1191 = vmatmul.mubr.bf16.gmra.mrb[0].mxu0 %v864
  %v1192 = vpop.f32.mrb[0].mxu0
  %v1193 = vadd.f32 %v664, %v1192
  %v1194 = vpop.f32.mrb[0].mxu0
  %v1195 = vpop.f32.mrb[0].mxu0
  %v1196 = vadd.f32 %v667, %v1195
  %v1197 = vpop.f32.mrb[0].mxu0
  %1198 = vmatprep.mubr.bf16.mxu0 0
  %1199 = vmatmul.mubr.bf16.gmra.mrb[0].mxu0 %v865
  %v1200 = vpop.f32.mrb[0].mxu0
  %v1201 = vadd.f32 %v672, %v1200
  %v1202 = vpop.f32.mrb[0].mxu0
  %v1203 = vpop.f32.mrb[0].mxu0
  %v1204 = vadd.f32 %v675, %v1203
  %v1205 = vpop.f32.mrb[0].mxu0
  %1206 = vmatprep.mubr.bf16.mxu0 0
  %1207 = vmatmul.mubr.bf16.gmra.mrb[0].mxu0 %v866
  %v1208 = vpop.f32.mrb[0].mxu0
  %v1209 = vadd.f32 %v680, %v1208
  %v1210 = vpop.f32.mrb[0].mxu0
  %v1211 = vpop.f32.mrb[0].mxu0
  %v1212 = vadd.f32 %v683, %v1211
  %v1213 = vpop.f32.mrb[0].mxu0
  %1214 = vmatprep.mubr.bf16.mxu0 0
  %1215 = vmatmul.mubr.bf16.gmra.mrb[0].mxu0 %v867
  %v1216 = vpop.f32.mrb[0].mxu0
  %v1217 = vadd.f32 %v688, %v1216
  %v1218 = vpop.f32.mrb[0].mxu0
  %v1219 = vpop.f32.mrb[0].mxu0
  %v1220 = vadd.f32 %v691, %v1219
  %v1221 = vpop.f32.mrb[0].mxu0
  %1222 = vmatprep.mubr.bf16.mxu0 0
  %1223 = vmatmul.mubr.bf16.gmra.mrb[0].mxu0 %v868
  %v1224 = vpop.f32.mrb[0].mxu0
  %v1225 = vadd.f32 %v696, %v1224
  %v1226 = vpop.f32.mrb[0].mxu0
  %v1227 = vpop.f32.mrb[0].mxu0
  %v1228 = vadd.f32 %v699, %v1227
  %v1229 = vpop.f32.mrb[0].mxu0
  %1230 = vmatprep.mubr.bf16.mxu0 0
  %1231 = vmatmul.mubr.bf16.gmra.mrb[0].mxu0 %v869
  %v1232 = vpop.f32.mrb[0].mxu0
  %v1233 = vadd.f32 %v704, %v1232
  %v1234 = vpop.f32.mrb[0].mxu0
  %v1235 = vpop.f32.mrb[0].mxu0
  %v1236 = vadd.f32 %v707, %v1235
  %v1237 = vpop.f32.mrb[0].mxu0
  %1238 = vdwg.mxu0
  %v1239 = vld [vmem:[%s4] sm:$0x1]
  %v1241 = vlaneseq
  %v1242 = vshrl.u32 %v1241, 7
  %v1243 = vsub.s32 0, %v1242
  %v1244 = vrot.slane %v1239, %v1243
  %v1246 = vadd.f32 %v985, %v1244
  %v1247 = vadd.f32 %v988, %v1244
  %v1248 = vadd.f32 %v993, %v1244
  %v1249 = vadd.f32 %v996, %v1244
  %v1250 = vadd.f32 %v1001, %v1244
  %v1251 = vadd.f32 %v1004, %v1244
  %v1252 = vadd.f32 %v1009, %v1244
  %v1253 = vadd.f32 %v1012, %v1244
  %v1254 = vadd.f32 %v1017, %v1244
  %v1255 = vadd.f32 %v1020, %v1244
  %v1256 = vadd.f32 %v1025, %v1244
  %v1257 = vadd.f32 %v1028, %v1244
  %v1258 = vadd.f32 %v1033, %v1244
  %v1259 = vadd.f32 %v1036, %v1244
  %v1260 = vadd.f32 %v1041, %v1244
  %v1261 = vadd.f32 %v1044, %v1244
  %v1262 = vadd.f32 %v1049, %v1244
  %v1263 = vadd.f32 %v1052, %v1244
  %v1264 = vadd.f32 %v1057, %v1244
  %v1265 = vadd.f32 %v1060, %v1244
  %v1266 = vadd.f32 %v1065, %v1244
  %v1267 = vadd.f32 %v1068, %v1244
  %v1268 = vadd.f32 %v1073, %v1244
  %v1269 = vadd.f32 %v1076, %v1244
  %v1270 = vadd.f32 %v1081, %v1244
  %v1271 = vadd.f32 %v1084, %v1244
  %v1272 = vadd.f32 %v1089, %v1244
  %v1273 = vadd.f32 %v1092, %v1244
  %v1274 = vadd.f32 %v1097, %v1244
  %v1275 = vadd.f32 %v1100, %v1244
  %v1276 = vadd.f32 %v1105, %v1244
  %v1277 = vadd.f32 %v1108, %v1244
  %v1278 = vadd.f32 %v1113, %v1244
  %v1279 = vadd.f32 %v1116, %v1244
  %v1280 = vadd.f32 %v1121, %v1244
  %v1281 = vadd.f32 %v1124, %v1244
  %v1282 = vadd.f32 %v1129, %v1244
  %v1283 = vadd.f32 %v1132, %v1244
  %v1284 = vadd.f32 %v1137, %v1244
  %v1285 = vadd.f32 %v1140, %v1244
  %v1286 = vadd.f32 %v1145, %v1244
  %v1287 = vadd.f32 %v1148, %v1244
  %v1288 = vadd.f32 %v1153, %v1244
  %v1289 = vadd.f32 %v1156, %v1244
  %v1290 = vadd.f32 %v1161, %v1244
  %v1291 = vadd.f32 %v1164, %v1244
  %v1292 = vadd.f32 %v1169, %v1244
  %v1293 = vadd.f32 %v1172, %v1244
  %v1294 = vadd.f32 %v1177, %v1244
  %v1295 = vadd.f32 %v1180, %v1244
  %v1296 = vadd.f32 %v1185, %v1244
  %v1297 = vadd.f32 %v1188, %v1244
  %v1298 = vadd.f32 %v1193, %v1244
  %v1299 = vadd.f32 %v1196, %v1244
  %v1300 = vadd.f32 %v1201, %v1244
  %v1301 = vadd.f32 %v1204, %v1244
  %v1302 = vadd.f32 %v1209, %v1244
  %v1303 = vadd.f32 %v1212, %v1244
  %v1304 = vadd.f32 %v1217, %v1244
  %v1305 = vadd.f32 %v1220, %v1244
  %v1306 = vadd.f32 %v1225, %v1244
  %v1307 = vadd.f32 %v1228, %v1244
  %v1308 = vadd.f32 %v1233, %v1244
  %v1309 = vadd.f32 %v1236, %v1244
  %v1310 = vmax.f32 %v1246, 0.0
  %v1311 = vmax.f32 %v1247, 0.0
  %v1312 = vmax.f32 %v1248, 0.0
  %v1313 = vmax.f32 %v1249, 0.0
  %v1314 = vmax.f32 %v1250, 0.0
  %v1315 = vmax.f32 %v1251, 0.0
  %v1316 = vmax.f32 %v1252, 0.0
  %v1317 = vmax.f32 %v1253, 0.0
  %v1318 = vmax.f32 %v1254, 0.0
  %v1319 = vmax.f32 %v1255, 0.0
  %v1320 = vmax.f32 %v1256, 0.0
  %v1321 = vmax.f32 %v1257, 0.0
  %v1322 = vmax.f32 %v1258, 0.0
  %v1323 = vmax.f32 %v1259, 0.0
  %v1324 = vmax.f32 %v1260, 0.0
  %v1325 = vmax.f32 %v1261, 0.0
  %v1326 = vmax.f32 %v1262, 0.0
  %v1327 = vmax.f32 %v1263, 0.0
  %v1328 = vmax.f32 %v1264, 0.0
  %v1329 = vmax.f32 %v1265, 0.0
  %v1330 = vmax.f32 %v1266, 0.0
  %v1331 = vmax.f32 %v1267, 0.0
  %v1332 = vmax.f32 %v1268, 0.0
  %v1333 = vmax.f32 %v1269, 0.0
  %v1334 = vmax.f32 %v1270, 0.0
  %v1335 = vmax.f32 %v1271, 0.0
  %v1336 = vmax.f32 %v1272, 0.0
  %v1337 = vmax.f32 %v1273, 0.0
  %v1338 = vmax.f32 %v1274, 0.0
  %v1339 = vmax.f32 %v1275, 0.0
  %v1340 = vmax.f32 %v1276, 0.0
  %v1341 = vmax.f32 %v1277, 0.0
  %v1342 = vmax.f32 %v1278, 0.0
  %v1343 = vmax.f32 %v1279, 0.0
  %v1344 = vmax.f32 %v1280, 0.0
  %v1345 = vmax.f32 %v1281, 0.0
  %v1346 = vmax.f32 %v1282, 0.0
  %v1347 = vmax.f32 %v1283, 0.0
  %v1348 = vmax.f32 %v1284, 0.0
  %v1349 = vmax.f32 %v1285, 0.0
  %v1350 = vmax.f32 %v1286, 0.0
  %v1351 = vmax.f32 %v1287, 0.0
  %v1352 = vmax.f32 %v1288, 0.0
  %v1353 = vmax.f32 %v1289, 0.0
  %v1354 = vmax.f32 %v1290, 0.0
  %v1355 = vmax.f32 %v1291, 0.0
  %v1356 = vmax.f32 %v1292, 0.0
  %v1357 = vmax.f32 %v1293, 0.0
  %v1358 = vmax.f32 %v1294, 0.0
  %v1359 = vmax.f32 %v1295, 0.0
  %v1360 = vmax.f32 %v1296, 0.0
  %v1361 = vmax.f32 %v1297, 0.0
  %v1362 = vmax.f32 %v1298, 0.0
  %v1363 = vmax.f32 %v1299, 0.0
  %v1364 = vmax.f32 %v1300, 0.0
  %v1365 = vmax.f32 %v1301, 0.0
  %v1366 = vmax.f32 %v1302, 0.0
  %v1367 = vmax.f32 %v1303, 0.0
  %v1368 = vmax.f32 %v1304, 0.0
  %v1369 = vmax.f32 %v1305, 0.0
  %v1370 = vmax.f32 %v1306, 0.0
  %v1371 = vmax.f32 %v1307, 0.0
  %v1372 = vmax.f32 %v1308, 0.0
  %v1373 = vmax.f32 %v1309, 0.0
  %v1374 = vpack.c.bf16 %v1311, %v1310
  %v1375 = vpack.c.bf16 %v1313, %v1312
  %v1376 = vpack.c.bf16 %v1315, %v1314
  %v1377 = vpack.c.bf16 %v1317, %v1316
  %v1378 = vpack.c.bf16 %v1319, %v1318
  %v1379 = vpack.c.bf16 %v1321, %v1320
  %v1380 = vpack.c.bf16 %v1323, %v1322
  %v1381 = vpack.c.bf16 %v1325, %v1324
  %v1382 = vpack.c.bf16 %v1327, %v1326
  %v1383 = vpack.c.bf16 %v1329, %v1328
  %v1384 = vpack.c.bf16 %v1331, %v1330
  %v1385 = vpack.c.bf16 %v1333, %v1332
  %v1386 = vpack.c.bf16 %v1335, %v1334
  %v1387 = vpack.c.bf16 %v1337, %v1336
  %v1388 = vpack.c.bf16 %v1339, %v1338
  %v1389 = vpack.c.bf16 %v1341, %v1340
  %v1390 = vpack.c.bf16 %v1343, %v1342
  %v1391 = vpack.c.bf16 %v1345, %v1344
  %v1392 = vpack.c.bf16 %v1347, %v1346
  %v1393 = vpack.c.bf16 %v1349, %v1348
  %v1394 = vpack.c.bf16 %v1351, %v1350
  %v1395 = vpack.c.bf16 %v1353, %v1352
  %v1396 = vpack.c.bf16 %v1355, %v1354
  %v1397 = vpack.c.bf16 %v1357, %v1356
  %v1398 = vpack.c.bf16 %v1359, %v1358
  %v1399 = vpack.c.bf16 %v1361, %v1360
  %v1400 = vpack.c.bf16 %v1363, %v1362
  %v1401 = vpack.c.bf16 %v1365, %v1364
  %v1402 = vpack.c.bf16 %v1367, %v1366
  %v1403 = vpack.c.bf16 %v1369, %v1368
  %v1404 = vpack.c.bf16 %v1371, %v1370
  %v1405 = vpack.c.bf16 %v1373, %v1372
  %v1438 = vunpack.c.l.b16 %v1374
  %v1439 = vunpack.c.h.b16 %v1374
  %v1440 = vunpack.c.l.b16 %v1375
  %v1441 = vunpack.c.h.b16 %v1375
  %v1442 = vunpack.c.l.b16 %v1376
  %v1443 = vunpack.c.h.b16 %v1376
  %v1444 = vunpack.c.l.b16 %v1377
  %v1445 = vunpack.c.h.b16 %v1377
  %v1446 = vunpack.c.l.b16 %v1378
  %v1447 = vunpack.c.h.b16 %v1378
  %v1448 = vunpack.c.l.b16 %v1379
  %v1449 = vunpack.c.h.b16 %v1379
  %v1450 = vunpack.c.l.b16 %v1380
  %v1451 = vunpack.c.h.b16 %v1380
  %v1452 = vunpack.c.l.b16 %v1381
  %v1453 = vunpack.c.h.b16 %v1381
  %v1454 = vunpack.c.l.b16 %v1382
  %v1455 = vunpack.c.h.b16 %v1382
  %v1456 = vunpack.c.l.b16 %v1383
  %v1457 = vunpack.c.h.b16 %v1383
  %v1458 = vunpack.c.l.b16 %v1384
  %v1459 = vunpack.c.h.b16 %v1384
  %v1460 = vunpack.c.l.b16 %v1385
  %v1461 = vunpack.c.h.b16 %v1385
  %v1462 = vunpack.c.l.b16 %v1386
  %v1463 = vunpack.c.h.b16 %v1386
  %v1464 = vunpack.c.l.b16 %v1387
  %v1465 = vunpack.c.h.b16 %v1387
  %v1466 = vunpack.c.l.b16 %v1388
  %v1467 = vunpack.c.h.b16 %v1388
  %v1468 = vunpack.c.l.b16 %v1389
  %v1469 = vunpack.c.h.b16 %v1389
  %v1470 = vunpack.c.l.b16 %v1390
  %v1471 = vunpack.c.h.b16 %v1390
  %v1472 = vunpack.c.l.b16 %v1391
  %v1473 = vunpack.c.h.b16 %v1391
  %v1474 = vunpack.c.l.b16 %v1392
  %v1475 = vunpack.c.h.b16 %v1392
  %v1476 = vunpack.c.l.b16 %v1393
  %v1477 = vunpack.c.h.b16 %v1393
  %v1478 = vunpack.c.l.b16 %v1394
  %v1479 = vunpack.c.h.b16 %v1394
  %v1480 = vunpack.c.l.b16 %v1395
  %v1481 = vunpack.c.h.b16 %v1395
  %v1482 = vunpack.c.l.b16 %v1396
  %v1483 = vunpack.c.h.b16 %v1396
  %v1484 = vunpack.c.l.b16 %v1397
  %v1485 = vunpack.c.h.b16 %v1397
  %v1486 = vunpack.c.l.b16 %v1398
  %v1487 = vunpack.c.h.b16 %v1398
  %v1488 = vunpack.c.l.b16 %v1399
  %v1489 = vunpack.c.h.b16 %v1399
  %v1490 = vunpack.c.l.b16 %v1400
  %v1491 = vunpack.c.h.b16 %v1400
  %v1492 = vunpack.c.l.b16 %v1401
  %v1493 = vunpack.c.h.b16 %v1401
  %v1494 = vunpack.c.l.b16 %v1402
  %v1495 = vunpack.c.h.b16 %v1402
  %v1496 = vunpack.c.l.b16 %v1403
  %v1497 = vunpack.c.h.b16 %v1403
  %v1498 = vunpack.c.l.b16 %v1404
  %v1499 = vunpack.c.h.b16 %v1404
  %v1500 = vunpack.c.l.b16 %v1405
  %v1501 = vunpack.c.h.b16 %v1405
  %v1502 = vpack.c.b16 %v1438, %v1438
  %v1503 = vpack.c.b16 %v1439, %v1439
  %v1504 = vpack.c.b16 %v1440, %v1440
  %v1505 = vpack.c.b16 %v1441, %v1441
  %v1506 = vpack.c.b16 %v1442, %v1442
  %v1507 = vpack.c.b16 %v1443, %v1443
  %v1508 = vpack.c.b16 %v1444, %v1444
  %v1509 = vpack.c.b16 %v1445, %v1445
  %v1510 = vpack.c.b16 %v1446, %v1446
  %v1511 = vpack.c.b16 %v1447, %v1447
  %v1512 = vpack.c.b16 %v1448, %v1448
  %v1513 = vpack.c.b16 %v1449, %v1449
  %v1514 = vpack.c.b16 %v1450, %v1450
  %v1515 = vpack.c.b16 %v1451, %v1451
  %v1516 = vpack.c.b16 %v1452, %v1452
  %v1517 = vpack.c.b16 %v1453, %v1453
  %v1518 = vpack.c.b16 %v1454, %v1454
  %v1519 = vpack.c.b16 %v1455, %v1455
  %v1520 = vpack.c.b16 %v1456, %v1456
  %v1521 = vpack.c.b16 %v1457, %v1457
  %v1522 = vpack.c.b16 %v1458, %v1458
  %v1523 = vpack.c.b16 %v1459, %v1459
  %v1524 = vpack.c.b16 %v1460, %v1460
  %v1525 = vpack.c.b16 %v1461, %v1461
  %v1526 = vpack.c.b16 %v1462, %v1462
  %v1527 = vpack.c.b16 %v1463, %v1463
  %v1528 = vpack.c.b16 %v1464, %v1464
  %v1529 = vpack.c.b16 %v1465, %v1465
  %v1530 = vpack.c.b16 %v1466, %v1466
  %v1531 = vpack.c.b16 %v1467, %v1467
  %v1532 = vpack.c.b16 %v1468, %v1468
  %v1533 = vpack.c.b16 %v1469, %v1469
  %v1534 = vpack.c.b16 %v1470, %v1470
  %v1535 = vpack.c.b16 %v1471, %v1471
  %v1536 = vpack.c.b16 %v1472, %v1472
  %v1537 = vpack.c.b16 %v1473, %v1473
  %v1538 = vpack.c.b16 %v1474, %v1474
  %v1539 = vpack.c.b16 %v1475, %v1475
  %v1540 = vpack.c.b16 %v1476, %v1476
  %v1541 = vpack.c.b16 %v1477, %v1477
  %v1542 = vpack.c.b16 %v1478, %v1478
  %v1543 = vpack.c.b16 %v1479, %v1479
  %v1544 = vpack.c.b16 %v1480, %v1480
  %v1545 = vpack.c.b16 %v1481, %v1481
  %v1546 = vpack.c.b16 %v1482, %v1482
  %v1547 = vpack.c.b16 %v1483, %v1483
  %v1548 = vpack.c.b16 %v1484, %v1484
  %v1549 = vpack.c.b16 %v1485, %v1485
  %v1550 = vpack.c.b16 %v1486, %v1486
  %v1551 = vpack.c.b16 %v1487, %v1487
  %v1552 = vpack.c.b16 %v1488, %v1488
  %v1553 = vpack.c.b16 %v1489, %v1489
  %v1554 = vpack.c.b16 %v1490, %v1490
  %v1555 = vpack.c.b16 %v1491, %v1491
  %v1556 = vpack.c.b16 %v1492, %v1492
  %v1557 = vpack.c.b16 %v1493, %v1493
  %v1558 = vpack.c.b16 %v1494, %v1494
  %v1559 = vpack.c.b16 %v1495, %v1495
  %v1560 = vpack.c.b16 %v1496, %v1496
  %v1561 = vpack.c.b16 %v1497, %v1497
  %v1562 = vpack.c.b16 %v1498, %v1498
  %v1563 = vpack.c.b16 %v1499, %v1499
  %v1564 = vpack.c.b16 %v1500, %v1500
  %v1565 = vpack.c.b16 %v1501, %v1501
  %1630 = vst [vmem:[%s5] sm:$0xf] %v1502
  %1631 = vst [vmem:[%s5 + $0x4] sm:$0xf] %v1503
  %1632 = vst [vmem:[%s5 + $0x8] sm:$0xf] %v1504
  %1633 = vst [vmem:[%s5 + $0xc] sm:$0xf] %v1505
  %1634 = vst [vmem:[%s5 + $0x10] sm:$0xf] %v1506
  %1635 = vst [vmem:[%s5 + $0x14] sm:$0xf] %v1507
  %1636 = vst [vmem:[%s5 + $0x18] sm:$0xf] %v1508
  %1637 = vst [vmem:[%s5 + $0x1c] sm:$0xf] %v1509
  %1638 = vst [vmem:[%s5 + $0x20] sm:$0xf] %v1510
  %1639 = vst [vmem:[%s5 + $0x24] sm:$0xf] %v1511
  %1640 = vst [vmem:[%s5 + $0x28] sm:$0xf] %v1512
  %1641 = vst [vmem:[%s5 + $0x2c] sm:$0xf] %v1513
  %1642 = vst [vmem:[%s5 + $0x30] sm:$0xf] %v1514
  %1643 = vst [vmem:[%s5 + $0x34] sm:$0xf] %v1515
  %1644 = vst [vmem:[%s5 + $0x38] sm:$0xf] %v1516
  %1645 = vst [vmem:[%s5 + $0x3c] sm:$0xf] %v1517
  %1646 = vst [vmem:[%s5 + $0x40] sm:$0xf] %v1518
  %1647 = vst [vmem:[%s5 + $0x44] sm:$0xf] %v1519
  %1648 = vst [vmem:[%s5 + $0x48] sm:$0xf] %v1520
  %1649 = vst [vmem:[%s5 + $0x4c] sm:$0xf] %v1521
  %1650 = vst [vmem:[%s5 + $0x50] sm:$0xf] %v1522
  %1651 = vst [vmem:[%s5 + $0x54] sm:$0xf] %v1523
  %1652 = vst [vmem:[%s5 + $0x58] sm:$0xf] %v1524
  %1653 = vst [vmem:[%s5 + $0x5c] sm:$0xf] %v1525
  %1654 = vst [vmem:[%s5 + $0x60] sm:$0xf] %v1526
  %1655 = vst [vmem:[%s5 + $0x64] sm:$0xf] %v1527
  %1656 = vst [vmem:[%s5 + $0x68] sm:$0xf] %v1528
  %1657 = vst [vmem:[%s5 + $0x6c] sm:$0xf] %v1529
  %1658 = vst [vmem:[%s5 + $0x70] sm:$0xf] %v1530
  %1659 = vst [vmem:[%s5 + $0x74] sm:$0xf] %v1531
  %1660 = vst [vmem:[%s5 + $0x78] sm:$0xf] %v1532
  %1661 = vst [vmem:[%s5 + $0x7c] sm:$0xf] %v1533
  %1662 = vst [vmem:[%s5 + $0x80] sm:$0xf] %v1534
  %1663 = vst [vmem:[%s5 + $0x84] sm:$0xf] %v1535
  %1664 = vst [vmem:[%s5 + $0x88] sm:$0xf] %v1536
  %1665 = vst [vmem:[%s5 + $0x8c] sm:$0xf] %v1537
  %1666 = vst [vmem:[%s5 + $0x90] sm:$0xf] %v1538
  %1667 = vst [vmem:[%s5 + $0x94] sm:$0xf] %v1539
  %1668 = vst [vmem:[%s5 + $0x98] sm:$0xf] %v1540
  %1669 = vst [vmem:[%s5 + $0x9c] sm:$0xf] %v1541
  %1670 = vst [vmem:[%s5 + $0xa0] sm:$0xf] %v1542
  %1671 = vst [vmem:[%s5 + $0xa4] sm:$0xf] %v1543
  %1672 = vst [vmem:[%s5 + $0xa8] sm:$0xf] %v1544
  %1673 = vst [vmem:[%s5 + $0xac] sm:$0xf] %v1545
  %1674 = vst [vmem:[%s5 + $0xb0] sm:$0xf] %v1546
  %1675 = vst [vmem:[%s5 + $0xb4] sm:$0xf] %v1547
  %1676 = vst [vmem:[%s5 + $0xb8] sm:$0xf] %v1548
  %1677 = vst [vmem:[%s5 + $0xbc] sm:$0xf] %v1549
  %1678 = vst [vmem:[%s5 + $0xc0] sm:$0xf] %v1550
  %1679 = vst [vmem:[%s5 + $0xc4] sm:$0xf] %v1551
  %1680 = vst [vmem:[%s5 + $0xc8] sm:$0xf] %v1552
  %1681 = vst [vmem:[%s5 + $0xcc] sm:$0xf] %v1553
  %1682 = vst [vmem:[%s5 + $0xd0] sm:$0xf] %v1554
  %1683 = vst [vmem:[%s5 + $0xd4] sm:$0xf] %v1555
  %1684 = vst [vmem:[%s5 + $0xd8] sm:$0xf] %v1556
  %1685 = vst [vmem:[%s5 + $0xdc] sm:$0xf] %v1557
  %1686 = vst [vmem:[%s5 + $0xe0] sm:$0xf] %v1558
  %1687 = vst [vmem:[%s5 + $0xe4] sm:$0xf] %v1559
  %1688 = vst [vmem:[%s5 + $0xe8] sm:$0xf] %v1560
  %1689 = vst [vmem:[%s5 + $0xec] sm:$0xf] %v1561
  %1690 = vst [vmem:[%s5 + $0xf0] sm:$0xf] %v1562
  %1691 = vst [vmem:[%s5 + $0xf4] sm:$0xf] %v1563
  %1692 = vst [vmem:[%s5 + $0xf8] sm:$0xf] %v1564
  %1693 = vst [vmem:[%s5 + $0xfc] sm:$0xf] %v1565
  // Predicated region
  $region22: #{bottleneck_forward.5} parent=0 // pred_check
    _
  $region23: #{bottleneck_forward.5} parent=0 // pred_check_branch
    %1695 = sbr.rel (0) target = $region25
  $region24: #{bottleneck_forward.5} parent=0 // pred_region
    _
  $region25: #{bottleneck_forward.5} parent=0 // pred_fallthru
    _
  // Predicated region
  $region26: #{bottleneck_forward.5} parent=0 // pred_check
    _
  $region27: #{bottleneck_forward.5} parent=0 // pred_check_branch
    %1697 = sbr.rel (0) target = $region29
  $region28: #{bottleneck_forward.5} parent=0 // pred_region
    _
  $region29: #{bottleneck_forward.5} parent=0 // pred_fallthru
    _

// kernel: bottleneck_forward.4
$region0: #{bottleneck_forward.4}
  #allocation0 [shape = 'u32[]', space=smem, size = 0x4, offset = 0x4, fixed_abs, tag = 'smem constant byte address 0x4 - core index']
  #allocation1 [shape = 'u32[144,128]{1,0:T(1,128)}', space=vmem, size = 0x12000, scoped, tag = 'internal scratch']
  #allocation2 [shape = 'f32[256,128]{1,0:T(8,128)}', space=vmem, size = 0x20000, scoped, tag = 'scratch operand']
  %s0 = inlined_call_operand.vmem [shape: bf16[2,18,18,128], index: 0, kind: input, shape index: {}]
  %s1 = inlined_call_operand.vmem [shape: bf16[9,128,128], index: 1, kind: input, shape index: {}]
  %s2 = inlined_call_operand.vmem [shape: f32[1,128], index: 2, kind: input, shape index: {}]
  %s3 = inlined_call_operand.vmem [shape: bf16[2,256,128], index: 3, kind: output, shape index: {}]
  %s4 = sld [smem:[#allocation0]]
  $region45: #{bottleneck_forward.4} parent=0
    _
  %s6 = ssub.s32 1, %s4
  %s7 = scalar_select 0, %s6, %s4
  loop: start=0, step=1, limit=4
  $region2: #{bottleneck_forward.4} parent=0 // loop_pre_header
    _
  $region3: #{bottleneck_forward.4} parent=0 // loop_header
    %s9 = sphi 0, %s13
    %p10 = scmp.ge.s32.totalorder %s9, 4
    %s16 = sphi 0, %s28
    %s17 = sphi 0, %s24
    %s18 = sphi 0, %s16
    %s19 = sphi 0, %s17
    %s20 = sphi 0, %s18
    %s21 = sphi 0, %s19
    %s31 = sphi 0, %s33
    %s34 = sphi 0, %s31
    %s35 = sphi 0, %s34
    %s51 = sphi 0, %s35
    %s57 = sphi 0, %s59
    %s60 = sphi 0, %s57
    %s61 = sphi 0, %s60
    %s77 = sphi 0, %s61
    %s83 = sphi 0, %s85
    %s86 = sphi 0, %s83
    %s87 = sphi 0, %s86
    %s103 = sphi 0, %s87
    %s111 = sphi 0, %s113
    %s114 = sphi 0, %s111
    %s115 = sphi 0, %s114
    %s131 = sphi 0, %s115
  $region4: #{bottleneck_forward.4} parent=0 // loop_header_branch
    %12 = sbr.rel (%p10) target = $region8
  $region5: #{bottleneck_forward.4} parent=0 // loop_body
    %s14 = ssub.s32 %s9, 1
    %s15 = ssub.s32 %s9, 2
    %s22 = sadd.s32 1, %s17
    %p23 = scmp.ge.s32.totalorder %s22, 1
    %s24 = scalar_select %p23, 0, %s22
    %s25 = sadd.s32 1, %s16
    %s26 = scalar_select %p23, %s25, %s16
    %p27 = scmp.ge.s32.totalorder %s26, 2
    %s28 = scalar_select %p27, 0, %s26
    %s29 = ssub.s32 %s16, %s28
    %p30 = scmp.eq.s32.totalorder %s29, 0
    %s32 = sadd.s32 %s31, 1
    %s33 = scalar_select %p30, %s31, %s32
    %p36 = pneg %p30
    %p37 = scmp.eq.s32.totalorder %s9, 1
    %p38 = por %p36, %p37
    %p39 = scmp.ne.s32.totalorder %s31, %s34
    %p40 = scmp.eq.s32.totalorder %s9, 0
    %p41 = por %p39, %p40
    %p42 = scmp.ne.s32.totalorder %s31, %s34
    %p43 = scmp.eq.s32.totalorder %s14, 1
    %p44 = por %p42, %p43
    %p45 = scmp.ne.s32.totalorder %s34, %s35
    %p46 = scmp.eq.s32.totalorder %s14, 0
    %p47 = por %p45, %p46
    %p48 = scmp.ne.s32.totalorder %s34, %s35
    %p49 = scmp.eq.s32.totalorder %s15, 1
    %p50 = por %p48, %p49
    %p52 = scmp.ne.s32.totalorder %s35, %s51
    %p53 = scmp.eq.s32.totalorder %s15, 0
    %p54 = por %p52, %p53
    %s55 = ssub.s32 %s17, %s24
    %p56 = scmp.eq.s32.totalorder %s55, 0
    %s58 = sadd.s32 %s57, 1
    %s59 = scalar_select %p56, %s57, %s58
    %p62 = pneg %p56
    %p63 = scmp.eq.s32.totalorder %s9, 1
    %p64 = por %p62, %p63
    %p65 = scmp.ne.s32.totalorder %s57, %s60
    %p66 = scmp.eq.s32.totalorder %s9, 0
    %p67 = por %p65, %p66
    %p68 = scmp.ne.s32.totalorder %s57, %s60
    %p69 = scmp.eq.s32.totalorder %s14, 1
    %p70 = por %p68, %p69
    %p71 = scmp.ne.s32.totalorder %s60, %s61
    %p72 = scmp.eq.s32.totalorder %s14, 0
    %p73 = por %p71, %p72
    %p74 = scmp.ne.s32.totalorder %s60, %s61
    %p75 = scmp.eq.s32.totalorder %s15, 1
    %p76 = por %p74, %p75
    %p78 = scmp.ne.s32.totalorder %s61, %s77
    %p79 = scmp.eq.s32.totalorder %s15, 0
    %p80 = por %p78, %p79
    %s81 = ssub.s32 %s17, %s24
    %p82 = scmp.eq.s32.totalorder %s81, 0
    %s84 = sadd.s32 %s83, 1
    %s85 = scalar_select %p82, %s83, %s84
    %p88 = pneg %p82
    %p89 = scmp.eq.s32.totalorder %s9, 1
    %p90 = por %p88, %p89
    %p91 = scmp.ne.s32.totalorder %s83, %s86
    %p92 = scmp.eq.s32.totalorder %s9, 0
    %p93 = por %p91, %p92
    %p94 = scmp.ne.s32.totalorder %s83, %s86
    %p95 = scmp.eq.s32.totalorder %s14, 1
    %p96 = por %p94, %p95
    %p97 = scmp.ne.s32.totalorder %s86, %s87
    %p98 = scmp.eq.s32.totalorder %s14, 0
    %p99 = por %p97, %p98
    %p100 = scmp.ne.s32.totalorder %s86, %s87
    %p101 = scmp.eq.s32.totalorder %s15, 1
    %p102 = por %p100, %p101
    %p104 = scmp.ne.s32.totalorder %s87, %s103
    %p105 = scmp.eq.s32.totalorder %s15, 0
    %p106 = por %p104, %p105
    %s107 = ssub.s32 %s16, %s28
    %s108 = ssub.s32 %s17, %s24
    %s109 = sor.u32 %s107, %s108
    %p110 = scmp.eq.s32.totalorder %s109, 0
    %s112 = sadd.s32 %s111, 1
    %s113 = scalar_select %p110, %s111, %s112
    %p116 = pneg %p110
    %p117 = scmp.eq.s32.totalorder %s9, 1
    %p118 = por %p116, %p117
    %p119 = scmp.ne.s32.totalorder %s111, %s114
    %p120 = scmp.eq.s32.totalorder %s9, 0
    %p121 = por %p119, %p120
    %p122 = scmp.ne.s32.totalorder %s111, %s114
    %p123 = scmp.eq.s32.totalorder %s14, 1
    %p124 = por %p122, %p123
    %p125 = scmp.ne.s32.totalorder %s114, %s115
    %p126 = scmp.eq.s32.totalorder %s14, 0
    %p127 = por %p125, %p126
    %p128 = scmp.ne.s32.totalorder %s114, %s115
    %p129 = scmp.eq.s32.totalorder %s15, 1
    %p130 = por %p128, %p129
    %p132 = scmp.ne.s32.totalorder %s115, %s131
    %p133 = scmp.eq.s32.totalorder %s15, 0
    %p134 = por %p132, %p133
    %p135 = scmp.le.s32.totalorder 1, %s9
    %p136 = scmp.lt.s32.totalorder %s9, 3
    %p137 = pnand %p135, %p136
    %p138 = pneg %p137
    // Predicated region
    $region9: #{bottleneck_forward.4} parent=5 // pred_check
      _
    $region10: #{bottleneck_forward.4} parent=5 // pred_check_branch
      %140 = sbr.rel (%p137) target = $region12
    $region11: #{bottleneck_forward.4} parent=5 // pred_region
      %s141 = ssub.s32 %s9, 1
      // Predicated region
      $region13: #{bottleneck_forward.4} parent=11 // pred_check
        %p142 = pneg %p73
      $region14: #{bottleneck_forward.4} parent=11 // pred_check_branch
        %144 = sbr.rel (%p142) target = $region16
      $region15: #{bottleneck_forward.4} parent=11 // pred_region
        %p145 = scmp.lt.s32.totalorder %s19, 0
        %s146 = scalar_select %p145, %s19, 0
        %s147 = smul.addr %s146, 4
        %s148 = scalar_lea.vmem %s1, %s147
      $region16: #{bottleneck_forward.4} parent=11 // pred_fallthru
        _
      // Predicated region
      $region17: #{bottleneck_forward.4} parent=11 // pred_check
        %p149 = pneg %p99
      $region18: #{bottleneck_forward.4} parent=11 // pred_check_branch
        %151 = sbr.rel (%p149) target = $region20
      $region19: #{bottleneck_forward.4} parent=11 // pred_region
        %p152 = scmp.lt.s32.totalorder %s19, 0
        %s153 = scalar_select %p152, %s19, 0
        %s154 = scalar_lea.vmem %s2, %s153
      $region20: #{bottleneck_forward.4} parent=11 // pred_fallthru
        _
    $region12: #{bottleneck_forward.4} parent=5 // pred_fallthru
      _
    %p155 = scmp.lt.s32.totalorder %s9, 2
    // Predicated region
    $region21: #{bottleneck_forward.4} parent=5 // pred_check
      %p156 = pneg %p155
    $region22: #{bottleneck_forward.4} parent=5 // pred_check_branch
      %158 = sbr.rel (%p156) target = $region24
    $region23: #{bottleneck_forward.4} parent=5 // pred_region
      // Predicated region
      $region25: #{bottleneck_forward.4} parent=23 // pred_check
        %p159 = pneg %p41
      $region26: #{bottleneck_forward.4} parent=23 // pred_check_branch
        %161 = sbr.rel (%p159) target = $region28
      $region27: #{bottleneck_forward.4} parent=23 // pred_region
        %p162 = scmp.lt.s32.totalorder %s16, 1
        %s163 = scalar_select %p162, %s16, 1
        %s164 = smul.addr %s163, 54
        %s165 = smul.addr %s164, 4
        %s166 = scalar_lea.vmem %s0, %s165
      $region28: #{bottleneck_forward.4} parent=23 // pred_fallthru
        _
    $region24: #{bottleneck_forward.4} parent=5 // pred_fallthru
      _
    %p167 = scmp.le.s32.totalorder 1, %s9
    %p168 = scmp.lt.s32.totalorder %s9, 3
    %p169 = pnand %p167, %p168
    %p170 = pneg %p169
    // Predicated region
    $region29: #{bottleneck_forward.4} parent=5 // pred_check
      _
    $region30: #{bottleneck_forward.4} parent=5 // pred_check_branch
      %172 = sbr.rel (%p169) target = $region32
    $region31: #{bottleneck_forward.4} parent=5 // pred_region
      %s173 = ssub.s32 %s9, 1
      %p174 = scmp.lt.s32.totalorder %s18, 1
      %s175 = scalar_select %p174, %s18, 1
      %s176 = smul.addr %s175, 54
      %s177 = smul.addr %s176, 4
      %s178 = scalar_lea.vmem %s0, %s177
      %p179 = pneg %p47
      %p180 = pneg %p44
      %p181 = scmp.lt.s32.totalorder %s19, 0
      %s182 = scalar_select %p181, %s19, 0
      %s183 = smul.addr %s182, 4
      %s184 = scalar_lea.vmem %s1, %s183
      %p185 = pneg %p73
      %p186 = pneg %p70
      %p187 = scmp.lt.s32.totalorder %s19, 0
      %s188 = scalar_select %p187, %s19, 0
      %s189 = scalar_lea.vmem %s2, %s188
      %p190 = pneg %p99
      %p191 = pneg %p96
      %p192 = pneg %p127
      %p193 = pneg %p124
      %p194 = scmp.lt.s32.totalorder %s18, 1
      %s195 = scalar_select %p194, %s18, 1
      %p196 = scmp.lt.s32.totalorder %s19, 0
      %s197 = scalar_select %p196, %s19, 0
      %s198 = smul.addr %s195, 32
      %s199 = sadd.s32 %s197, %s198
      %s200 = smul.addr %s199, 4
      %s201 = scalar_lea.vmem %s3, %s200
      %p202 = scmp.lt.s32.totalorder %s18, 1
      %s203 = scalar_select %p202, %s18, 1
      %s204 = smul.addr %s203, 54
      %s205 = smul.addr %s204, 4
      %s206 = scalar_lea.vmem %s0, %s205
      %p207 = scmp.lt.s32.totalorder %s19, 0
      %s208 = scalar_select %p207, %s19, 0
      %s209 = smul.addr %s208, 4
      %s210 = scalar_lea.vmem %s1, %s209
      %p211 = scmp.lt.s32.totalorder %s19, 0
      %s212 = scalar_select %p211, %s19, 0
      %s213 = scalar_lea.vmem %s2, %s212
      %p214 = scmp.lt.s32.totalorder %s18, 1
      %s215 = scalar_select %p214, %s18, 1
      %p216 = scmp.lt.s32.totalorder %s19, 0
      %s217 = scalar_select %p216, %s19, 0
      %s218 = smul.addr %s215, 32
      %s219 = sadd.s32 %s217, %s218
      %s220 = smul.addr %s219, 4
      %s221 = scalar_lea.vmem %s3, %s220
      %v223 = vld [vmem:[%s206] sm:$0xf]
      %v224 = vld [vmem:[%s206 + $0x4] sm:$0xf]
      %v225 = vld [vmem:[%s206 + $0xc] sm:$0xf]
      %v226 = vld [vmem:[%s206 + $0x10] sm:$0xf]
      %v227 = vld [vmem:[%s206 + $0x18] sm:$0xf]
      %v228 = vld [vmem:[%s206 + $0x1c] sm:$0xf]
      %v229 = vld [vmem:[%s206 + $0x24] sm:$0xf]
      %v230 = vld [vmem:[%s206 + $0x28] sm:$0xf]
      %v231 = vld [vmem:[%s206 + $0x30] sm:$0xf]
      %v232 = vld [vmem:[%s206 + $0x34] sm:$0xf]
      %v233 = vld [vmem:[%s206 + $0x3c] sm:$0xf]
      %v234 = vld [vmem:[%s206 + $0x40] sm:$0xf]
      %v235 = vld [vmem:[%s206 + $0x48] sm:$0xf]
      %v236 = vld [vmem:[%s206 + $0x4c] sm:$0xf]
      %v237 = vld [vmem:[%s206 + $0x54] sm:$0xf]
      %v238 = vld [vmem:[%s206 + $0x58] sm:$0xf]
      %v239 = vld [vmem:[%s206 + $0x60] sm:$0xf]
      %v240 = vld [vmem:[%s206 + $0x64] sm:$0xf]
      %v241 = vld [vmem:[%s206 + $0x6c] sm:$0xf]
      %v242 = vld [vmem:[%s206 + $0x70] sm:$0xf]
      %v243 = vld [vmem:[%s206 + $0x78] sm:$0xf]
      %v244 = vld [vmem:[%s206 + $0x7c] sm:$0xf]
      %v245 = vld [vmem:[%s206 + $0x84] sm:$0xf]
      %v246 = vld [vmem:[%s206 + $0x88] sm:$0xf]
      %v247 = vld [vmem:[%s206 + $0x90] sm:$0xf]
      %v248 = vld [vmem:[%s206 + $0x94] sm:$0xf]
      %v249 = vld [vmem:[%s206 + $0x9c] sm:$0xf]
      %v250 = vld [vmem:[%s206 + $0xa0] sm:$0xf]
      %v251 = vld [vmem:[%s206 + $0xa8] sm:$0xf]
      %v252 = vld [vmem:[%s206 + $0xac] sm:$0xf]
      %v253 = vld [vmem:[%s206 + $0xb4] sm:$0xf]
      %v254 = vld [vmem:[%s206 + $0xb8] sm:$0xf]
      %v255 = vld [vmem:[%s206 + $0xc0] sm:$0xf]
      %v256 = vld [vmem:[%s206 + $0xc4] sm:$0xf]
      %v257 = vld [vmem:[%s206 + $0xcc] sm:$0xf]
      %v258 = vld [vmem:[%s206 + $0xd0] sm:$0xf]
      %v259 = vld [vmem:[%s210] sm:$0xf]
      %v260 = vld [vmem:[%s210 + $0x4] sm:$0xf]
      %v261 = vld [vmem:[%s210 + $0x8] sm:$0xf]
      %v262 = vld [vmem:[%s210 + $0xc] sm:$0xf]
      %v263 = vld [vmem:[%s210 + $0x10] sm:$0xf]
      %v264 = vld [vmem:[%s210 + $0x14] sm:$0xf]
      %v265 = vld [vmem:[%s210 + $0x18] sm:$0xf]
      %v266 = vld [vmem:[%s210 + $0x1c] sm:$0xf]
      %v267 = vld [vmem:[%s210 + $0x20] sm:$0xf]
      %v268 = vld [vmem:[%s210 + $0x24] sm:$0xf]
      %v269 = vld [vmem:[%s210 + $0x28] sm:$0xf]
      %v270 = vld [vmem:[%s210 + $0x2c] sm:$0xf]
      %v271 = vld [vmem:[%s210 + $0x30] sm:$0xf]
      %v272 = vld [vmem:[%s210 + $0x34] sm:$0xf]
      %v273 = vld [vmem:[%s210 + $0x38] sm:$0xf]
      %v274 = vld [vmem:[%s210 + $0x3c] sm:$0xf]
      %v275 = vld [vmem:[%s206 + $0x8] sm:$0x1]
      %v276 = vld [vmem:[%s206 + $0x14] sm:$0x1]
      %v277 = vld [vmem:[%s206 + $0x20] sm:$0x1]
      %v278 = vld [vmem:[%s206 + $0x2c] sm:$0x1]
      %v279 = vld [vmem:[%s206 + $0x38] sm:$0x1]
      %v280 = vld [vmem:[%s206 + $0x44] sm:$0x1]
      %v281 = vld [vmem:[%s206 + $0x50] sm:$0x1]
      %v282 = vld [vmem:[%s206 + $0x5c] sm:$0x1]
      %v283 = vld [vmem:[%s206 + $0x68] sm:$0x1]
      %v284 = vld [vmem:[%s206 + $0x74] sm:$0x1]
      %v285 = vld [vmem:[%s206 + $0x80] sm:$0x1]
      %v286 = vld [vmem:[%s206 + $0x8c] sm:$0x1]
      %v287 = vld [vmem:[%s206 + $0x98] sm:$0x1]
      %v288 = vld [vmem:[%s206 + $0xa4] sm:$0x1]
      %v289 = vld [vmem:[%s206 + $0xb0] sm:$0x1]
      %v290 = vld [vmem:[%s206 + $0xbc] sm:$0x1]
      %v291 = vld [vmem:[%s206 + $0xc8] sm:$0x1]
      %v292 = vld [vmem:[%s206 + $0xd4] sm:$0x1]
      %vm293 = vsmask.f32 3328
      %vm294 = vsmask.f32 7440
      %vm295 = vmor %vm293, %vm294
      %v297 = vshrl.u32 %v223, 16
      %v299 = vrot.slane %v297, 4
      %v300 = vshll.u32 %v223, 16
      %v302 = vrot.slane %v300, 5
      %v303 = vor.u32 %v299, %v302
      %v304 = vrot.slane %v303, 4
      %v306 = vshll.u32 %v224, 16
      %v308 = vrot.slane %v306, 5
      %v309 = vsel %vm295, %v304, %v308
      %v310 = vshrl.u32 %v224, 16
      %v312 = vrot.slane %v310, 4
      %v313 = vor.u32 %v312, %v308
      %v314 = vrot.slane %v313, 4
      %v316 = vshll.u32 %v275, 16
      %v318 = vrot.slane %v316, 5
      %v319 = vsel %vm295, %v314, %v318
      %v321 = vshrl.u32 %v225, 16
      %v323 = vrot.slane %v321, 4
      %v324 = vshll.u32 %v225, 16
      %v326 = vrot.slane %v324, 5
      %v327 = vor.u32 %v323, %v326
      %v328 = vrot.slane %v327, 4
      %v330 = vshll.u32 %v226, 16
      %v332 = vrot.slane %v330, 5
      %v333 = vsel %vm295, %v328, %v332
      %v334 = vshrl.u32 %v226, 16
      %v336 = vrot.slane %v334, 4
      %v337 = vor.u32 %v336, %v332
      %v338 = vrot.slane %v337, 4
      %v340 = vshll.u32 %v276, 16
      %v342 = vrot.slane %v340, 5
      %v343 = vsel %vm295, %v338, %v342
      %v345 = vshrl.u32 %v227, 16
      %v347 = vrot.slane %v345, 4
      %v348 = vshll.u32 %v227, 16
      %v350 = vrot.slane %v348, 5
      %v351 = vor.u32 %v347, %v350
      %v352 = vrot.slane %v351, 4
      %v354 = vshll.u32 %v228, 16
      %v356 = vrot.slane %v354, 5
      %v357 = vsel %vm295, %v352, %v356
      %v358 = vshrl.u32 %v228, 16
      %v360 = vrot.slane %v358, 4
      %v361 = vor.u32 %v360, %v356
      %v362 = vrot.slane %v361, 4
      %v364 = vshll.u32 %v277, 16
      %v366 = vrot.slane %v364, 5
      %v367 = vsel %vm295, %v362, %v366
      %v369 = vshrl.u32 %v229, 16
      %v371 = vrot.slane %v369, 4
      %v372 = vshll.u32 %v229, 16
      %v374 = vrot.slane %v372, 5
      %v375 = vor.u32 %v371, %v374
      %v376 = vrot.slane %v375, 4
      %v378 = vshll.u32 %v230, 16
      %v380 = vrot.slane %v378, 5
      %v381 = vsel %vm295, %v376, %v380
      %v382 = vshrl.u32 %v230, 16
      %v384 = vrot.slane %v382, 4
      %v385 = vor.u32 %v384, %v380
      %v386 = vrot.slane %v385, 4
      %v388 = vshll.u32 %v278, 16
      %v390 = vrot.slane %v388, 5
      %v391 = vsel %vm295, %v386, %v390
      %v393 = vshrl.u32 %v231, 16
      %v395 = vrot.slane %v393, 4
      %v396 = vshll.u32 %v231, 16
      %v398 = vrot.slane %v396, 5
      %v399 = vor.u32 %v395, %v398
      %v400 = vrot.slane %v399, 4
      %v402 = vshll.u32 %v232, 16
      %v404 = vrot.slane %v402, 5
      %v405 = vsel %vm295, %v400, %v404
      %v406 = vshrl.u32 %v232, 16
      %v408 = vrot.slane %v406, 4
      %v409 = vor.u32 %v408, %v404
      %v410 = vrot.slane %v409, 4
      %v412 = vshll.u32 %v279, 16
      %v414 = vrot.slane %v412, 5
      %v415 = vsel %vm295, %v410, %v414
      %v417 = vshrl.u32 %v233, 16
      %v419 = vrot.slane %v417, 4
      %v420 = vshll.u32 %v233, 16
      %v422 = vrot.slane %v420, 5
      %v423 = vor.u32 %v419, %v422
      %v424 = vrot.slane %v423, 4
      %v426 = vshll.u32 %v234, 16
      %v428 = vrot.slane %v426, 5
      %v429 = vsel %vm295, %v424, %v428
      %v430 = vshrl.u32 %v234, 16
      %v432 = vrot.slane %v430, 4
      %v433 = vor.u32 %v432, %v428
      %v434 = vrot.slane %v433, 4
      %v436 = vshll.u32 %v280, 16
      %v438 = vrot.slane %v436, 5
      %v439 = vsel %vm295, %v434, %v438
      %v441 = vshrl.u32 %v235, 16
      %v443 = vrot.slane %v441, 4
      %v444 = vshll.u32 %v235, 16
      %v446 = vrot.slane %v444, 5
      %v447 = vor.u32 %v443, %v446
      %v448 = vrot.slane %v447, 4
      %v450 = vshll.u32 %v236, 16
      %v452 = vrot.slane %v450, 5
      %v453 = vsel %vm295, %v448, %v452
      %v454 = vshrl.u32 %v236, 16
      %v456 = vrot.slane %v454, 4
      %v457 = vor.u32 %v456, %v452
      %v458 = vrot.slane %v457, 4
      %v460 = vshll.u32 %v281, 16
      %v462 = vrot.slane %v460, 5
      %v463 = vsel %vm295, %v458, %v462
      %v465 = vshrl.u32 %v237, 16
      %v467 = vrot.slane %v465, 4
      %v468 = vshll.u32 %v237, 16
      %v470 = vrot.slane %v468, 5
      %v471 = vor.u32 %v467, %v470
      %v472 = vrot.slane %v471, 4
      %v474 = vshll.u32 %v238, 16
      %v476 = vrot.slane %v474, 5
      %v477 = vsel %vm295, %v472, %v476
      %v478 = vshrl.u32 %v238, 16
      %v480 = vrot.slane %v478, 4
      %v481 = vor.u32 %v480, %v476
      %v482 = vrot.slane %v481, 4
      %v484 = vshll.u32 %v282, 16
      %v486 = vrot.slane %v484, 5
      %v487 = vsel %vm295, %v482, %v486
      %v489 = vshrl.u32 %v239, 16
      %v491 = vrot.slane %v489, 4
      %v492 = vshll.u32 %v239, 16
      %v494 = vrot.slane %v492, 5
      %v495 = vor.u32 %v491, %v494
      %v496 = vrot.slane %v495, 4
      %v498 = vshll.u32 %v240, 16
      %v500 = vrot.slane %v498, 5
      %v501 = vsel %vm295, %v496, %v500
      %v502 = vshrl.u32 %v240, 16
      %v504 = vrot.slane %v502, 4
      %v505 = vor.u32 %v504, %v500
      %v506 = vrot.slane %v505, 4
      %v508 = vshll.u32 %v283, 16
      %v510 = vrot.slane %v508, 5
      %v511 = vsel %vm295, %v506, %v510
      %v513 = vshrl.u32 %v241, 16
      %v515 = vrot.slane %v513, 4
      %v516 = vshll.u32 %v241, 16
      %v518 = vrot.slane %v516, 5
      %v519 = vor.u32 %v515, %v518
      %v520 = vrot.slane %v519, 4
      %v522 = vshll.u32 %v242, 16
      %v524 = vrot.slane %v522, 5
      %v525 = vsel %vm295, %v520, %v524
      %v526 = vshrl.u32 %v242, 16
      %v528 = vrot.slane %v526, 4
      %v529 = vor.u32 %v528, %v524
      %v530 = vrot.slane %v529, 4
      %v532 = vshll.u32 %v284, 16
      %v534 = vrot.slane %v532, 5
      %v535 = vsel %vm295, %v530, %v534
      %v537 = vshrl.u32 %v243, 16
      %v539 = vrot.slane %v537, 4
      %v540 = vshll.u32 %v243, 16
      %v542 = vrot.slane %v540, 5
      %v543 = vor.u32 %v539, %v542
      %v544 = vrot.slane %v543, 4
      %v546 = vshll.u32 %v244, 16
      %v548 = vrot.slane %v546, 5
      %v549 = vsel %vm295, %v544, %v548
      %v550 = vshrl.u32 %v244, 16
      %v552 = vrot.slane %v550, 4
      %v553 = vor.u32 %v552, %v548
      %v554 = vrot.slane %v553, 4
      %v556 = vshll.u32 %v285, 16
      %v558 = vrot.slane %v556, 5
      %v559 = vsel %vm295, %v554, %v558
      %v561 = vshrl.u32 %v245, 16
      %v563 = vrot.slane %v561, 4
      %v564 = vshll.u32 %v245, 16
      %v566 = vrot.slane %v564, 5
      %v567 = vor.u32 %v563, %v566
      %v568 = vrot.slane %v567, 4
      %v570 = vshll.u32 %v246, 16
      %v572 = vrot.slane %v570, 5
      %v573 = vsel %vm295, %v568, %v572
      %v574 = vshrl.u32 %v246, 16
      %v576 = vrot.slane %v574, 4
      %v577 = vor.u32 %v576, %v572
      %v578 = vrot.slane %v577, 4
      %v580 = vshll.u32 %v286, 16
      %v582 = vrot.slane %v580, 5
      %v583 = vsel %vm295, %v578, %v582
      %v585 = vshrl.u32 %v247, 16
      %v587 = vrot.slane %v585, 4
      %v588 = vshll.u32 %v247, 16
      %v590 = vrot.slane %v588, 5
      %v591 = vor.u32 %v587, %v590
      %v592 = vrot.slane %v591, 4
      %v594 = vshll.u32 %v248, 16
      %v596 = vrot.slane %v594, 5
      %v597 = vsel %vm295, %v592, %v596
      %v598 = vshrl.u32 %v248, 16
      %v600 = vrot.slane %v598, 4
      %v601 = vor.u32 %v600, %v596
      %v602 = vrot.slane %v601, 4
      %v604 = vshll.u32 %v287, 16
      %v606 = vrot.slane %v604, 5
      %v607 = vsel %vm295, %v602, %v606
      %v609 = vshrl.u32 %v249, 16
      %v611 = vrot.slane %v609, 4
      %v612 = vshll.u32 %v249, 16
      %v614 = vrot.slane %v612, 5
      %v615 = vor.u32 %v611, %v614
      %v616 = vrot.slane %v615, 4
      %v618 = vshll.u32 %v250, 16
      %v620 = vrot.slane %v618, 5
      %v621 = vsel %vm295, %v616, %v620
      %v622 = vshrl.u32 %v250, 16
      %v624 = vrot.slane %v622, 4
      %v625 = vor.u32 %v624, %v620
      %v626 = vrot.slane %v625, 4
      %v628 = vshll.u32 %v288, 16
      %v630 = vrot.slane %v628, 5
      %v631 = vsel %vm295, %v626, %v630
      %v633 = vshrl.u32 %v251, 16
      %v635 = vrot.slane %v633, 4
      %v636 = vshll.u32 %v251, 16
      %v638 = vrot.slane %v636, 5
      %v639 = vor.u32 %v635, %v638
      %v640 = vrot.slane %v639, 4
      %v642 = vshll.u32 %v252, 16
      %v644 = vrot.slane %v642, 5
      %v645 = vsel %vm295, %v640, %v644
      %v646 = vshrl.u32 %v252, 16
      %v648 = vrot.slane %v646, 4
      %v649 = vor.u32 %v648, %v644
      %v650 = vrot.slane %v649, 4
      %v652 = vshll.u32 %v289, 16
      %v654 = vrot.slane %v652, 5
      %v655 = vsel %vm295, %v650, %v654
      %v657 = vshrl.u32 %v253, 16
      %v659 = vrot.slane %v657, 4
      %v660 = vshll.u32 %v253, 16
      %v662 = vrot.slane %v660, 5
      %v663 = vor.u32 %v659, %v662
      %v664 = vrot.slane %v663, 4
      %v666 = vshll.u32 %v254, 16
      %v668 = vrot.slane %v666, 5
      %v669 = vsel %vm295, %v664, %v668
      %v670 = vshrl.u32 %v254, 16
      %v672 = vrot.slane %v670, 4
      %v673 = vor.u32 %v672, %v668
      %v674 = vrot.slane %v673, 4
      %v676 = vshll.u32 %v290, 16
      %v678 = vrot.slane %v676, 5
      %v679 = vsel %vm295, %v674, %v678
      %v681 = vshrl.u32 %v255, 16
      %v683 = vrot.slane %v681, 4
      %v684 = vshll.u32 %v255, 16
      %v686 = vrot.slane %v684, 5
      %v687 = vor.u32 %v683, %v686
      %v688 = vrot.slane %v687, 4
      %v690 = vshll.u32 %v256, 16
      %v692 = vrot.slane %v690, 5
      %v693 = vsel %vm295, %v688, %v692
      %v694 = vshrl.u32 %v256, 16
      %v696 = vrot.slane %v694, 4
      %v697 = vor.u32 %v696, %v692
      %v698 = vrot.slane %v697, 4
      %v700 = vshll.u32 %v291, 16
      %v702 = vrot.slane %v700, 5
      %v703 = vsel %vm295, %v698, %v702
      %v705 = vshrl.u32 %v257, 16
      %v707 = vrot.slane %v705, 4
      %v708 = vshll.u32 %v257, 16
      %v710 = vrot.slane %v708, 5
      %v711 = vor.u32 %v707, %v710
      %v712 = vrot.slane %v711, 4
      %v714 = vshll.u32 %v258, 16
      %v716 = vrot.slane %v714, 5
      %v717 = vsel %vm295, %v712, %v716
      %v718 = vshrl.u32 %v258, 16
      %v720 = vrot.slane %v718, 4
      %v721 = vor.u32 %v720, %v716
      %v722 = vrot.slane %v721, 4
      %v724 = vshll.u32 %v292, 16
      %v726 = vrot.slane %v724, 5
      %v727 = vsel %vm295, %v722, %v726
      %s728 = scalar_lea.vmem %s210, 64
      %v729 = vld [vmem:[%s728] sm:$0xf]
      %v730 = vld [vmem:[%s728 + $0x4] sm:$0xf]
      %v731 = vld [vmem:[%s728 + $0x8] sm:$0xf]
      %v732 = vld [vmem:[%s728 + $0xc] sm:$0xf]
      %v733 = vld [vmem:[%s728 + $0x10] sm:$0xf]
      %v734 = vld [vmem:[%s728 + $0x14] sm:$0xf]
      %v735 = vld [vmem:[%s728 + $0x18] sm:$0xf]
      %v736 = vld [vmem:[%s728 + $0x1c] sm:$0xf]
      %v737 = vld [vmem:[%s728 + $0x20] sm:$0xf]
      %v738 = vld [vmem:[%s728 + $0x24] sm:$0xf]
      %v739 = vld [vmem:[%s728 + $0x28] sm:$0xf]
      %v740 = vld [vmem:[%s728 + $0x2c] sm:$0xf]
      %v741 = vld [vmem:[%s728 + $0x30] sm:$0xf]
      %v742 = vld [vmem:[%s728 + $0x34] sm:$0xf]
      %v743 = vld [vmem:[%s728 + $0x38] sm:$0xf]
      %v744 = vld [vmem:[%s728 + $0x3c] sm:$0xf]
      %v745 = vunpack.c.l.b16 %v309
      %v746 = vunpack.c.l.b16 %v319
      %v747 = vunpack.c.l.b16 %v333
      %v748 = vunpack.c.l.b16 %v343
      %v749 = vunpack.c.l.b16 %v357
      %v750 = vunpack.c.l.b16 %v367
      %v751 = vunpack.c.l.b16 %v381
      %v752 = vunpack.c.l.b16 %v391
      %v753 = vunpack.c.l.b16 %v405
      %v754 = vunpack.c.l.b16 %v415
      %v755 = vunpack.c.l.b16 %v429
      %v756 = vunpack.c.l.b16 %v439
      %v757 = vunpack.c.l.b16 %v453
      %v758 = vunpack.c.l.b16 %v463
      %v759 = vunpack.c.l.b16 %v477
      %v760 = vunpack.c.l.b16 %v487
      %v761 = vunpack.c.l.b16 %v501
      %v762 = vunpack.c.l.b16 %v511
      %v763 = vunpack.c.l.b16 %v525
      %v764 = vunpack.c.l.b16 %v535
      %v765 = vunpack.c.l.b16 %v549
      %v766 = vunpack.c.l.b16 %v559
      %v767 = vunpack.c.l.b16 %v573
      %v768 = vunpack.c.l.b16 %v583
      %v769 = vunpack.c.l.b16 %v597
      %v770 = vunpack.c.l.b16 %v607
      %v771 = vunpack.c.l.b16 %v621
      %v772 = vunpack.c.l.b16 %v631
      %v773 = vunpack.c.l.b16 %v645
      %v774 = vunpack.c.l.b16 %v655
      %v775 = vunpack.c.l.b16 %v669
      %v776 = vunpack.c.l.b16 %v679
      %v777 = vpack.c.b16 %v746, %v745
      %v778 = vpack.c.b16 %v748, %v747
      %v779 = vpack.c.b16 %v750, %v749
      %v780 = vpack.c.b16 %v752, %v751
      %v781 = vpack.c.b16 %v754, %v753
      %v782 = vpack.c.b16 %v756, %v755
      %v783 = vpack.c.b16 %v758, %v757
      %v784 = vpack.c.b16 %v760, %v759
      %v785 = vpack.c.b16 %v762, %v761
      %v786 = vpack.c.b16 %v764, %v763
      %v787 = vpack.c.b16 %v766, %v765
      %v788 = vpack.c.b16 %v768, %v767
      %v789 = vpack.c.b16 %v770, %v769
      %v790 = vpack.c.b16 %v772, %v771
      %v791 = vpack.c.b16 %v774, %v773
      %v792 = vpack.c.b16 %v776, %v775
      %v825 = vunpack.c.l.b16 %v729
      %v826 = vunpack.c.l.b16 %v730
      %v827 = vunpack.c.l.b16 %v731
      %v828 = vunpack.c.l.b16 %v732
      %v829 = vunpack.c.l.b16 %v733
      %v830 = vunpack.c.l.b16 %v734
      %v831 = vunpack.c.l.b16 %v735
      %v832 = vunpack.c.l.b16 %v736
      %v833 = vunpack.c.l.b16 %v737
      %v834 = vunpack.c.l.b16 %v738
      %v835 = vunpack.c.l.b16 %v739
      %v836 = vunpack.c.l.b16 %v740
      %v837 = vunpack.c.l.b16 %v741
      %v838 = vunpack.c.l.b16 %v742
      %v839 = vunpack.c.l.b16 %v743
      %v840 = vunpack.c.l.b16 %v744
      %v841 = vpack.c.b16 %v826, %v825
      %v842 = vpack.c.b16 %v828, %v827
      %v843 = vpack.c.b16 %v830, %v829
      %v844 = vpack.c.b16 %v832, %v831
      %v845 = vpack.c.b16 %v834, %v833
      %v846 = vpack.c.b16 %v836, %v835
      %v847 = vpack.c.b16 %v838, %v837
      %v848 = vpack.c.b16 %v840, %v839
      %857 = vmatprep.subr.bf16.mxu0 0
      %858 = vmatpush1.bf16.msra.mxu0 %v841
      %859 = vmatprep.subr.bf16.mxu0 0
      %860 = vmatpush1.bf16.msra.mxu0 %v842
      %861 = vmatprep.subr.bf16.mxu0 0
      %862 = vmatpush1.bf16.msra.mxu0 %v843
      %863 = vmatprep.subr.bf16.mxu0 0
      %864 = vmatpush1.bf16.msra.mxu0 %v844
      %865 = vmatprep.subr.bf16.mxu0 0
      %866 = vmatpush1.bf16.msra.mxu0 %v845
      %867 = vmatprep.subr.bf16.mxu0 0
      %868 = vmatpush1.bf16.msra.mxu0 %v846
      %869 = vmatprep.subr.bf16.mxu0 0
      %870 = vmatpush1.bf16.msra.mxu0 %v847
      %871 = vmatprep.subr.bf16.mxu0 0
      %872 = vmatpush1.bf16.msra.mxu0 %v848
      %873 = vmatprep.subr.bf16.mxu0 0
      %874 = vmatpush1.bf16.msra.mxu0 0
      %875 = vmatprep.subr.bf16.mxu0 0
      %876 = vmatpush1.bf16.msra.mxu0 0
      %877 = vmatprep.subr.bf16.mxu0 0
      %878 = vmatpush1.bf16.msra.mxu0 0
      %879 = vmatprep.subr.bf16.mxu0 0
      %880 = vmatpush1.bf16.msra.mxu0 0
      %881 = vmatprep.subr.bf16.mxu0 0
      %882 = vmatpush1.bf16.msra.mxu0 0
      %883 = vmatprep.subr.bf16.mxu0 0
      %884 = vmatpush1.bf16.msra.mxu0 0
      %885 = vmatprep.subr.bf16.mxu0 0
      %886 = vmatpush1.bf16.msra.mxu0 0
      %887 = vmatprep.subr.bf16.mxu0 0
      %888 = vmatpush1.bf16.msra.mxu0 0
      %889 = vmatprep.mubr.bf16.mxu0 0
      %890 = vmatmul.mubr.bf16.gmra.mrb[0].mxu0 %v777
      %v891 = vpop.f32.mrb[0].mxu0
      %v892 = vadd.f32 0.0, %v891
      %v893 = vpop.f32.mrb[0].mxu0
      %v894 = vpop.f32.mrb[0].mxu0
      %v895 = vadd.f32 0.0, %v894
      %v896 = vpop.f32.mrb[0].mxu0
      %897 = vmatprep.mubr.bf16.mxu0 0
      %898 = vmatmul.mubr.bf16.gmra.mrb[0].mxu0 %v778
      %v899 = vpop.f32.mrb[0].mxu0
      %v900 = vadd.f32 0.0, %v899
      %v901 = vpop.f32.mrb[0].mxu0
      %v902 = vpop.f32.mrb[0].mxu0
      %v903 = vadd.f32 0.0, %v902
      %v904 = vpop.f32.mrb[0].mxu0
      %905 = vmatprep.mubr.bf16.mxu0 0
      %906 = vmatmul.mubr.bf16.gmra.mrb[0].mxu0 %v779
      %v907 = vpop.f32.mrb[0].mxu0
      %v908 = vadd.f32 0.0, %v907
      %v909 = vpop.f32.mrb[0].mxu0
      %v910 = vpop.f32.mrb[0].mxu0
      %v911 = vadd.f32 0.0, %v910
      %v912 = vpop.f32.mrb[0].mxu0
      %913 = vmatprep.mubr.bf16.mxu0 0
      %914 = vmatmul.mubr.bf16.gmra.mrb[0].mxu0 %v780
      %v915 = vpop.f32.mrb[0].mxu0
      %v916 = vadd.f32 0.0, %v915
      %v917 = vpop.f32.mrb[0].mxu0
      %v918 = vpop.f32.mrb[0].mxu0
      %v919 = vadd.f32 0.0, %v918
      %v920 = vpop.f32.mrb[0].mxu0
      %921 = vmatprep.mubr.bf16.mxu0 0
      %922 = vmatmul.mubr.bf16.gmra.mrb[0].mxu0 %v781
      %v923 = vpop.f32.mrb[0].mxu0
      %v924 = vadd.f32 0.0, %v923
      %v925 = vpop.f32.mrb[0].mxu0
      %v926 = vpop.f32.mrb[0].mxu0
      %v927 = vadd.f32 0.0, %v926
      %v928 = vpop.f32.mrb[0].mxu0
      %929 = vmatprep.mubr.bf16.mxu0 0
      %930 = vmatmul.mubr.bf16.gmra.mrb[0].mxu0 %v782
      %v931 = vpop.f32.mrb[0].mxu0
      %v932 = vadd.f32 0.0, %v931
      %v933 = vpop.f32.mrb[0].mxu0
      %v934 = vpop.f32.mrb[0].mxu0
      %v935 = vadd.f32 0.0, %v934
      %v936 = vpop.f32.mrb[0].mxu0
      %937 = vmatprep.mubr.bf16.mxu0 0
      %938 = vmatmul.mubr.bf16.gmra.mrb[0].mxu0 %v783
      %v939 = vpop.f32.mrb[0].mxu0
      %v940 = vadd.f32 0.0, %v939
      %v941 = vpop.f32.mrb[0].mxu0
      %v942 = vpop.f32.mrb[0].mxu0
      %v943 = vadd.f32 0.0, %v942
      %v944 = vpop.f32.mrb[0].mxu0
      %945 = vmatprep.mubr.bf16.mxu0 0
      %946 = vmatmul.mubr.bf16.gmra.mrb[0].mxu0 %v784
      %v947 = vpop.f32.mrb[0].mxu0
      %v948 = vadd.f32 0.0, %v947
      %v949 = vpop.f32.mrb[0].mxu0
      %v950 = vpop.f32.mrb[0].mxu0
      %v951 = vadd.f32 0.0, %v950
      %v952 = vpop.f32.mrb[0].mxu0
      %953 = vmatprep.mubr.bf16.mxu0 0
      %954 = vmatmul.mubr.bf16.gmra.mrb[0].mxu0 %v785
      %v955 = vpop.f32.mrb[0].mxu0
      %v956 = vadd.f32 0.0, %v955
      %v957 = vpop.f32.mrb[0].mxu0
      %v958 = vpop.f32.mrb[0].mxu0
      %v959 = vadd.f32 0.0, %v958
      %v960 = vpop.f32.mrb[0].mxu0
      %961 = vmatprep.mubr.bf16.mxu0 0
      %962 = vmatmul.mubr.bf16.gmra.mrb[0].mxu0 %v786
      %v963 = vpop.f32.mrb[0].mxu0
      %v964 = vadd.f32 0.0, %v963
      %v965 = vpop.f32.mrb[0].mxu0
      %v966 = vpop.f32.mrb[0].mxu0
      %v967 = vadd.f32 0.0, %v966
      %v968 = vpop.f32.mrb[0].mxu0
      %969 = vmatprep.mubr.bf16.mxu0 0
      %970 = vmatmul.mubr.bf16.gmra.mrb[0].mxu0 %v787
      %v971 = vpop.f32.mrb[0].mxu0
      %v972 = vadd.f32 0.0, %v971
      %v973 = vpop.f32.mrb[0].mxu0
      %v974 = vpop.f32.mrb[0].mxu0
      %v975 = vadd.f32 0.0, %v974
      %v976 = vpop.f32.mrb[0].mxu0
      %977 = vmatprep.mubr.bf16.mxu0 0
      %978 = vmatmul.mubr.bf16.gmra.mrb[0].mxu0 %v788
      %v979 = vpop.f32.mrb[0].mxu0
      %v980 = vadd.f32 0.0, %v979
      %v981 = vpop.f32.mrb[0].mxu0
      %v982 = vpop.f32.mrb[0].mxu0
      %v983 = vadd.f32 0.0, %v982
      %v984 = vpop.f32.mrb[0].mxu0
      %985 = vmatprep.mubr.bf16.mxu0 0
      %986 = vmatmul.mubr.bf16.gmra.mrb[0].mxu0 %v789
      %v987 = vpop.f32.mrb[0].mxu0
      %v988 = vadd.f32 0.0, %v987
      %v989 = vpop.f32.mrb[0].mxu0
      %v990 = vpop.f32.mrb[0].mxu0
      %v991 = vadd.f32 0.0, %v990
      %v992 = vpop.f32.mrb[0].mxu0
      %993 = vmatprep.mubr.bf16.mxu0 0
      %994 = vmatmul.mubr.bf16.gmra.mrb[0].mxu0 %v790
      %v995 = vpop.f32.mrb[0].mxu0
      %v996 = vadd.f32 0.0, %v995
      %v997 = vpop.f32.mrb[0].mxu0
      %v998 = vpop.f32.mrb[0].mxu0
      %v999 = vadd.f32 0.0, %v998
      %v1000 = vpop.f32.mrb[0].mxu0
      %1001 = vmatprep.mubr.bf16.mxu0 0
      %1002 = vmatmul.mubr.bf16.gmra.mrb[0].mxu0 %v791
      %v1003 = vpop.f32.mrb[0].mxu0
      %v1004 = vadd.f32 0.0, %v1003
      %v1005 = vpop.f32.mrb[0].mxu0
      %v1006 = vpop.f32.mrb[0].mxu0
      %v1007 = vadd.f32 0.0, %v1006
      %v1008 = vpop.f32.mrb[0].mxu0
      %1009 = vmatprep.mubr.bf16.mxu0 0
      %1010 = vmatmul.mubr.bf16.gmra.mrb[0].mxu0 %v792
      %v1011 = vpop.f32.mrb[0].mxu0
      %v1012 = vadd.f32 0.0, %v1011
      %v1013 = vpop.f32.mrb[0].mxu0
      %v1014 = vpop.f32.mrb[0].mxu0
      %v1015 = vadd.f32 0.0, %v1014
      %v1016 = vpop.f32.mrb[0].mxu0
      %1017 = vdwg.mxu0
      %v1050 = vunpack.c.l.b16 %v223
      %v1051 = vunpack.c.l.b16 %v224
      %v1052 = vunpack.c.l.b16 %v225
      %v1053 = vunpack.c.l.b16 %v226
      %v1054 = vunpack.c.l.b16 %v227
      %v1055 = vunpack.c.l.b16 %v228
      %v1056 = vunpack.c.l.b16 %v229
      %v1057 = vunpack.c.l.b16 %v230
      %v1058 = vunpack.c.l.b16 %v231
      %v1059 = vunpack.c.l.b16 %v232
      %v1060 = vunpack.c.l.b16 %v233
      %v1061 = vunpack.c.l.b16 %v234
      %v1062 = vunpack.c.l.b16 %v235
      %v1063 = vunpack.c.l.b16 %v236
      %v1064 = vunpack.c.l.b16 %v237
      %v1065 = vunpack.c.l.b16 %v238
      %v1066 = vunpack.c.l.b16 %v239
      %v1067 = vunpack.c.l.b16 %v240
      %v1068 = vunpack.c.l.b16 %v241
      %v1069 = vunpack.c.l.b16 %v242
      %v1070 = vunpack.c.l.b16 %v243
      %v1071 = vunpack.c.l.b16 %v244
      %v1072 = vunpack.c.l.b16 %v245
      %v1073 = vunpack.c.l.b16 %v246
      %v1074 = vunpack.c.l.b16 %v247
      %v1075 = vunpack.c.l.b16 %v248
      %v1076 = vunpack.c.l.b16 %v249
      %v1077 = vunpack.c.l.b16 %v250
      %v1078 = vunpack.c.l.b16 %v251
      %v1079 = vunpack.c.l.b16 %v252
      %v1080 = vunpack.c.l.b16 %v253
      %v1081 = vunpack.c.l.b16 %v254
      %v1082 = vpack.c.b16 %v1051, %v1050
      %v1083 = vpack.c.b16 %v1053, %v1052
      %v1084 = vpack.c.b16 %v1055, %v1054
      %v1085 = vpack.c.b16 %v1057, %v1056
      %v1086 = vpack.c.b16 %v1059, %v1058
      %v1087 = vpack.c.b16 %v1061, %v1060
      %v1088 = vpack.c.b16 %v1063, %v1062
      %v1089 = vpack.c.b16 %v1065, %v1064
      %v1090 = vpack.c.b16 %v1067, %v1066
      %v1091 = vpack.c.b16 %v1069, %v1068
      %v1092 = vpack.c.b16 %v1071, %v1070
      %v1093 = vpack.c.b16 %v1073, %v1072
      %v1094 = vpack.c.b16 %v1075, %v1074
      %v1095 = vpack.c.b16 %v1077, %v1076
      %v1096 = vpack.c.b16 %v1079, %v1078
      %v1097 = vpack.c.b16 %v1081, %v1080
      %v1130 = vunpack.c.l.b16 %v259
      %v1131 = vunpack.c.l.b16 %v260
      %v1132 = vunpack.c.l.b16 %v261
      %v1133 = vunpack.c.l.b16 %v262
      %v1134 = vunpack.c.l.b16 %v263
      %v1135 = vunpack.c.l.b16 %v264
      %v1136 = vunpack.c.l.b16 %v265
      %v1137 = vunpack.c.l.b16 %v266
      %v1138 = vunpack.c.l.b16 %v267
      %v1139 = vunpack.c.l.b16 %v268
      %v1140 = vunpack.c.l.b16 %v269
      %v1141 = vunpack.c.l.b16 %v270
      %v1142 = vunpack.c.l.b16 %v271
      %v1143 = vunpack.c.l.b16 %v272
      %v1144 = vunpack.c.l.b16 %v273
      %v1145 = vunpack.c.l.b16 %v274
      %v1146 = vpack.c.b16 %v1131, %v1130
      %v1147 = vpack.c.b16 %v1133, %v1132
      %v1148 = vpack.c.b16 %v1135, %v1134
      %v1149 = vpack.c.b16 %v1137, %v1136
      %v1150 = vpack.c.b16 %v1139, %v1138
      %v1151 = vpack.c.b16 %v1141, %v1140
      %v1152 = vpack.c.b16 %v1143, %v1142
      %v1153 = vpack.c.b16 %v1145, %v1144
      %1162 = vmatprep.subr.bf16.mxu0 0
      %1163 = vmatpush1.bf16.msra.mxu0 %v1146
      %1164 = vmatprep.subr.bf16.mxu0 0
      %1165 = vmatpush1.bf16.msra.mxu0 %v1147
      %1166 = vmatprep.subr.bf16.mxu0 0
      %1167 = vmatpush1.bf16.msra.mxu0 %v1148
      %1168 = vmatprep.subr.bf16.mxu0 0
      %1169 = vmatpush1.bf16.msra.mxu0 %v1149
      %1170 = vmatprep.subr.bf16.mxu0 0
      %1171 = vmatpush1.bf16.msra.mxu0 %v1150
      %1172 = vmatprep.subr.bf16.mxu0 0
      %1173 = vmatpush1.bf16.msra.mxu0 %v1151
      %1174 = vmatprep.subr.bf16.mxu0 0
      %1175 = vmatpush1.bf16.msra.mxu0 %v1152
      %1176 = vmatprep.subr.bf16.mxu0 0
      %1177 = vmatpush1.bf16.msra.mxu0 %v1153
      %1178 = vmatprep.subr.bf16.mxu0 0
      %1179 = vmatpush1.bf16.msra.mxu0 0
      %1180 = vmatprep.subr.bf16.mxu0 0
      %1181 = vmatpush1.bf16.msra.mxu0 0
      %1182 = vmatprep.subr.bf16.mxu0 0
      %1183 = vmatpush1.bf16.msra.mxu0 0
      %1184 = vmatprep.subr.bf16.mxu0 0
      %1185 = vmatpush1.bf16.msra.mxu0 0
      %1186 = vmatprep.subr.bf16.mxu0 0
      %1187 = vmatpush1.bf16.msra.mxu0 0
      %1188 = vmatprep.subr.bf16.mxu0 0
      %1189 = vmatpush1.bf16.msra.mxu0 0
      %1190 = vmatprep.subr.bf16.mxu0 0
      %1191 = vmatpush1.bf16.msra.mxu0 0
      %1192 = vmatprep.subr.bf16.mxu0 0
      %1193 = vmatpush1.bf16.msra.mxu0 0
      %1194 = vmatprep.mubr.bf16.mxu0 0
      %1195 = vmatmul.mubr.bf16.gmra.mrb[0].mxu0 %v1082
      %v1196 = vpop.f32.mrb[0].mxu0
      %v1197 = vadd.f32 %v892, %v1196
      %v1198 = vpop.f32.mrb[0].mxu0
      %v1199 = vpop.f32.mrb[0].mxu0
      %v1200 = vadd.f32 %v895, %v1199
      %v1201 = vpop.f32.mrb[0].mxu0
      %1202 = vmatprep.mubr.bf16.mxu0 0
      %1203 = vmatmul.mubr.bf16.gmra.mrb[0].mxu0 %v1083
      %v1204 = vpop.f32.mrb[0].mxu0
      %v1205 = vadd.f32 %v900, %v1204
      %v1206 = vpop.f32.mrb[0].mxu0
      %v1207 = vpop.f32.mrb[0].mxu0
      %v1208 = vadd.f32 %v903, %v1207
      %v1209 = vpop.f32.mrb[0].mxu0
      %1210 = vmatprep.mubr.bf16.mxu0 0
      %1211 = vmatmul.mubr.bf16.gmra.mrb[0].mxu0 %v1084
      %v1212 = vpop.f32.mrb[0].mxu0
      %v1213 = vadd.f32 %v908, %v1212
      %v1214 = vpop.f32.mrb[0].mxu0
      %v1215 = vpop.f32.mrb[0].mxu0
      %v1216 = vadd.f32 %v911, %v1215
      %v1217 = vpop.f32.mrb[0].mxu0
      %1218 = vmatprep.mubr.bf16.mxu0 0
      %1219 = vmatmul.mubr.bf16.gmra.mrb[0].mxu0 %v1085
      %v1220 = vpop.f32.mrb[0].mxu0
      %v1221 = vadd.f32 %v916, %v1220
      %v1222 = vpop.f32.mrb[0].mxu0
      %v1223 = vpop.f32.mrb[0].mxu0
      %v1224 = vadd.f32 %v919, %v1223
      %v1225 = vpop.f32.mrb[0].mxu0
      %1226 = vmatprep.mubr.bf16.mxu0 0
      %1227 = vmatmul.mubr.bf16.gmra.mrb[0].mxu0 %v1086
      %v1228 = vpop.f32.mrb[0].mxu0
      %v1229 = vadd.f32 %v924, %v1228
      %v1230 = vpop.f32.mrb[0].mxu0
      %v1231 = vpop.f32.mrb[0].mxu0
      %v1232 = vadd.f32 %v927, %v1231
      %v1233 = vpop.f32.mrb[0].mxu0
      %1234 = vmatprep.mubr.bf16.mxu0 0
      %1235 = vmatmul.mubr.bf16.gmra.mrb[0].mxu0 %v1087
      %v1236 = vpop.f32.mrb[0].mxu0
      %v1237 = vadd.f32 %v932, %v1236
      %v1238 = vpop.f32.mrb[0].mxu0
      %v1239 = vpop.f32.mrb[0].mxu0
      %v1240 = vadd.f32 %v935, %v1239
      %v1241 = vpop.f32.mrb[0].mxu0
      %1242 = vmatprep.mubr.bf16.mxu0 0
      %1243 = vmatmul.mubr.bf16.gmra.mrb[0].mxu0 %v1088
      %v1244 = vpop.f32.mrb[0].mxu0
      %v1245 = vadd.f32 %v940, %v1244
      %v1246 = vpop.f32.mrb[0].mxu0
      %v1247 = vpop.f32.mrb[0].mxu0
      %v1248 = vadd.f32 %v943, %v1247
      %v1249 = vpop.f32.mrb[0].mxu0
      %1250 = vmatprep.mubr.bf16.mxu0 0
      %1251 = vmatmul.mubr.bf16.gmra.mrb[0].mxu0 %v1089
      %v1252 = vpop.f32.mrb[0].mxu0
      %v1253 = vadd.f32 %v948, %v1252
      %v1254 = vpop.f32.mrb[0].mxu0
      %v1255 = vpop.f32.mrb[0].mxu0
      %v1256 = vadd.f32 %v951, %v1255
      %v1257 = vpop.f32.mrb[0].mxu0
      %1258 = vmatprep.mubr.bf16.mxu0 0
      %1259 = vmatmul.mubr.bf16.gmra.mrb[0].mxu0 %v1090
      %v1260 = vpop.f32.mrb[0].mxu0
      %v1261 = vadd.f32 %v956, %v1260
      %v1262 = vpop.f32.mrb[0].mxu0
      %v1263 = vpop.f32.mrb[0].mxu0
      %v1264 = vadd.f32 %v959, %v1263
      %v1265 = vpop.f32.mrb[0].mxu0
      %1266 = vmatprep.mubr.bf16.mxu0 0
      %1267 = vmatmul.mubr.bf16.gmra.mrb[0].mxu0 %v1091
      %v1268 = vpop.f32.mrb[0].mxu0
      %v1269 = vadd.f32 %v964, %v1268
      %v1270 = vpop.f32.mrb[0].mxu0
      %v1271 = vpop.f32.mrb[0].mxu0
      %v1272 = vadd.f32 %v967, %v1271
      %v1273 = vpop.f32.mrb[0].mxu0
      %1274 = vmatprep.mubr.bf16.mxu0 0
      %1275 = vmatmul.mubr.bf16.gmra.mrb[0].mxu0 %v1092
      %v1276 = vpop.f32.mrb[0].mxu0
      %v1277 = vadd.f32 %v972, %v1276
      %v1278 = vpop.f32.mrb[0].mxu0
      %v1279 = vpop.f32.mrb[0].mxu0
      %v1280 = vadd.f32 %v975, %v1279
      %v1281 = vpop.f32.mrb[0].mxu0
      %1282 = vmatprep.mubr.bf16.mxu0 0
      %1283 = vmatmul.mubr.bf16.gmra.mrb[0].mxu0 %v1093
      %v1284 = vpop.f32.mrb[0].mxu0
      %v1285 = vadd.f32 %v980, %v1284
      %v1286 = vpop.f32.mrb[0].mxu0
      %v1287 = vpop.f32.mrb[0].mxu0
      %v1288 = vadd.f32 %v983, %v1287
      %v1289 = vpop.f32.mrb[0].mxu0
      %1290 = vmatprep.mubr.bf16.mxu0 0
      %1291 = vmatmul.mubr.bf16.gmra.mrb[0].mxu0 %v1094
      %v1292 = vpop.f32.mrb[0].mxu0
      %v1293 = vadd.f32 %v988, %v1292
      %v1294 = vpop.f32.mrb[0].mxu0
      %v1295 = vpop.f32.mrb[0].mxu0
      %v1296 = vadd.f32 %v991, %v1295
      %v1297 = vpop.f32.mrb[0].mxu0
      %1298 = vmatprep.mubr.bf16.mxu0 0
      %1299 = vmatmul.mubr.bf16.gmra.mrb[0].mxu0 %v1095
      %v1300 = vpop.f32.mrb[0].mxu0
      %v1301 = vadd.f32 %v996, %v1300
      %v1302 = vpop.f32.mrb[0].mxu0
      %v1303 = vpop.f32.mrb[0].mxu0
      %v1304 = vadd.f32 %v999, %v1303
      %v1305 = vpop.f32.mrb[0].mxu0
      %1306 = vmatprep.mubr.bf16.mxu0 0
      %1307 = vmatmul.mubr.bf16.gmra.mrb[0].mxu0 %v1096
      %v1308 = vpop.f32.mrb[0].mxu0
      %v1309 = vadd.f32 %v1004, %v1308
      %v1310 = vpop.f32.mrb[0].mxu0
      %v1311 = vpop.f32.mrb[0].mxu0
      %v1312 = vadd.f32 %v1007, %v1311
      %v1313 = vpop.f32.mrb[0].mxu0
      %1314 = vmatprep.mubr.bf16.mxu0 0
      %1315 = vmatmul.mubr.bf16.gmra.mrb[0].mxu0 %v1097
      %v1316 = vpop.f32.mrb[0].mxu0
      %v1317 = vadd.f32 %v1012, %v1316
      %v1318 = vpop.f32.mrb[0].mxu0
      %v1319 = vpop.f32.mrb[0].mxu0
      %v1320 = vadd.f32 %v1015, %v1319
      %v1321 = vpop.f32.mrb[0].mxu0
      %1322 = vdwg.mxu0
      %v1323 = vld [vmem:[%s206] sm:$0xe]
      %v1324 = vld [vmem:[%s206 + $0xc] sm:$0xe]
      %v1325 = vld [vmem:[%s206 + $0x18] sm:$0xe]
      %v1326 = vld [vmem:[%s206 + $0x24] sm:$0xe]
      %v1327 = vld [vmem:[%s206 + $0x30] sm:$0xe]
      %v1328 = vld [vmem:[%s206 + $0x3c] sm:$0xe]
      %v1329 = vld [vmem:[%s206 + $0x48] sm:$0xe]
      %v1330 = vld [vmem:[%s206 + $0x54] sm:$0xe]
      %v1331 = vld [vmem:[%s206 + $0x60] sm:$0xe]
      %v1332 = vld [vmem:[%s206 + $0x6c] sm:$0xe]
      %v1333 = vld [vmem:[%s206 + $0x78] sm:$0xe]
      %v1334 = vld [vmem:[%s206 + $0x84] sm:$0xe]
      %v1335 = vld [vmem:[%s206 + $0x90] sm:$0xe]
      %v1336 = vld [vmem:[%s206 + $0x9c] sm:$0xe]
      %v1337 = vld [vmem:[%s206 + $0xa8] sm:$0xe]
      %v1338 = vld [vmem:[%s206 + $0xb4] sm:$0xe]
      %v1339 = vld [vmem:[%s206 + $0xc0] sm:$0xe]
      %v1340 = vld [vmem:[%s206 + $0xcc] sm:$0xe]
      %vm1379 = vcmask 1042432
      %vm1380 = vcmask 1046532
      %vm1381 = vmor %vm1379, %vm1380
      %v1382 = vrot.slane %v1323, 5
      %v1383 = vrot.slane %v1382, 4
      %v1384 = vrot.slane %v224, 5
      %v1385 = vsel %vm1381, %v1383, %v1384
      %v1386 = vrot.slane %v1384, 4
      %v1387 = vrot.slane %v275, 5
      %v1388 = vsel %vm1381, %v1386, %v1387
      %v1389 = vrot.slane %v1324, 5
      %v1390 = vrot.slane %v1389, 4
      %v1391 = vrot.slane %v226, 5
      %v1392 = vsel %vm1381, %v1390, %v1391
      %v1393 = vrot.slane %v1391, 4
      %v1394 = vrot.slane %v276, 5
      %v1395 = vsel %vm1381, %v1393, %v1394
      %v1396 = vrot.slane %v1325, 5
      %v1397 = vrot.slane %v1396, 4
      %v1398 = vrot.slane %v228, 5
      %v1399 = vsel %vm1381, %v1397, %v1398
      %v1400 = vrot.slane %v1398, 4
      %v1401 = vrot.slane %v277, 5
      %v1402 = vsel %vm1381, %v1400, %v1401
      %v1403 = vrot.slane %v1326, 5
      %v1404 = vrot.slane %v1403, 4
      %v1405 = vrot.slane %v230, 5
      %v1406 = vsel %vm1381, %v1404, %v1405
      %v1407 = vrot.slane %v1405, 4
      %v1408 = vrot.slane %v278, 5
      %v1409 = vsel %vm1381, %v1407, %v1408
      %v1410 = vrot.slane %v1327, 5
      %v1411 = vrot.slane %v1410, 4
      %v1412 = vrot.slane %v232, 5
      %v1413 = vsel %vm1381, %v1411, %v1412
      %v1414 = vrot.slane %v1412, 4
      %v1415 = vrot.slane %v279, 5
      %v1416 = vsel %vm1381, %v1414, %v1415
      %v1417 = vrot.slane %v1328, 5
      %v1418 = vrot.slane %v1417, 4
      %v1419 = vrot.slane %v234, 5
      %v1420 = vsel %vm1381, %v1418, %v1419
      %v1421 = vrot.slane %v1419, 4
      %v1422 = vrot.slane %v280, 5
      %v1423 = vsel %vm1381, %v1421, %v1422
      %v1424 = vrot.slane %v1329, 5
      %v1425 = vrot.slane %v1424, 4
      %v1426 = vrot.slane %v236, 5
      %v1427 = vsel %vm1381, %v1425, %v1426
      %v1428 = vrot.slane %v1426, 4
      %v1429 = vrot.slane %v281, 5
      %v1430 = vsel %vm1381, %v1428, %v1429
      %v1431 = vrot.slane %v1330, 5
      %v1432 = vrot.slane %v1431, 4
      %v1433 = vrot.slane %v238, 5
      %v1434 = vsel %vm1381, %v1432, %v1433
      %v1435 = vrot.slane %v1433, 4
      %v1436 = vrot.slane %v282, 5
      %v1437 = vsel %vm1381, %v1435, %v1436
      %v1438 = vrot.slane %v1331, 5
      %v1439 = vrot.slane %v1438, 4
      %v1440 = vrot.slane %v240, 5
      %v1441 = vsel %vm1381, %v1439, %v1440
      %v1442 = vrot.slane %v1440, 4
      %v1443 = vrot.slane %v283, 5
      %v1444 = vsel %vm1381, %v1442, %v1443
      %v1445 = vrot.slane %v1332, 5
      %v1446 = vrot.slane %v1445, 4
      %v1447 = vrot.slane %v242, 5
      %v1448 = vsel %vm1381, %v1446, %v1447
      %v1449 = vrot.slane %v1447, 4
      %v1450 = vrot.slane %v284, 5
      %v1451 = vsel %vm1381, %v1449, %v1450
      %v1452 = vrot.slane %v1333, 5
      %v1453 = vrot.slane %v1452, 4
      %v1454 = vrot.slane %v244, 5
      %v1455 = vsel %vm1381, %v1453, %v1454
      %v1456 = vrot.slane %v1454, 4
      %v1457 = vrot.slane %v285, 5
      %v1458 = vsel %vm1381, %v1456, %v1457
      %v1459 = vrot.slane %v1334, 5
      %v1460 = vrot.slane %v1459, 4
      %v1461 = vrot.slane %v246, 5
      %v1462 = vsel %vm1381, %v1460, %v1461
      %v1463 = vrot.slane %v1461, 4
      %v1464 = vrot.slane %v286, 5
      %v1465 = vsel %vm1381, %v1463, %v1464
      %v1466 = vrot.slane %v1335, 5
      %v1467 = vrot.slane %v1466, 4
      %v1468 = vrot.slane %v248, 5
      %v1469 = vsel %vm1381, %v1467, %v1468
      %v1470 = vrot.slane %v1468, 4
      %v1471 = vrot.slane %v287, 5
      %v1472 = vsel %vm1381, %v1470, %v1471
      %v1473 = vrot.slane %v1336, 5
      %v1474 = vrot.slane %v1473, 4
      %v1475 = vrot.slane %v250, 5
      %v1476 = vsel %vm1381, %v1474, %v1475
      %v1477 = vrot.slane %v1475, 4
      %v1478 = vrot.slane %v288, 5
      %v1479 = vsel %vm1381, %v1477, %v1478
      %v1480 = vrot.slane %v1337, 5
      %v1481 = vrot.slane %v1480, 4
      %v1482 = vrot.slane %v252, 5
      %v1483 = vsel %vm1381, %v1481, %v1482
      %v1484 = vrot.slane %v1482, 4
      %v1485 = vrot.slane %v289, 5
      %v1486 = vsel %vm1381, %v1484, %v1485
      %v1487 = vrot.slane %v1338, 5
      %v1488 = vrot.slane %v1487, 4
      %v1489 = vrot.slane %v254, 5
      %v1490 = vsel %vm1381, %v1488, %v1489
      %v1491 = vrot.slane %v1489, 4
      %v1492 = vrot.slane %v290, 5
      %v1493 = vsel %vm1381, %v1491, %v1492
      %v1494 = vrot.slane %v1339, 5
      %v1495 = vrot.slane %v1494, 4
      %v1496 = vrot.slane %v256, 5
      %v1497 = vsel %vm1381, %v1495, %v1496
      %v1498 = vrot.slane %v1496, 4
      %v1499 = vrot.slane %v291, 5
      %v1500 = vsel %vm1381, %v1498, %v1499
      %v1501 = vrot.slane %v1340, 5
      %v1502 = vrot.slane %v1501, 4
      %v1503 = vrot.slane %v258, 5
      %v1504 = vsel %vm1381, %v1502, %v1503
      %v1505 = vrot.slane %v1503, 4
      %v1506 = vrot.slane %v292, 5
      %v1507 = vsel %vm1381, %v1505, %v1506
      %s1508 = scalar_lea.vmem %s210, 128
      %v1509 = vld [vmem:[%s1508] sm:$0xf]
      %v1510 = vld [vmem:[%s1508 + $0x4] sm:$0xf]
      %v1511 = vld [vmem:[%s1508 + $0x8] sm:$0xf]
      %v1512 = vld [vmem:[%s1508 + $0xc] sm:$0xf]
      %v1513 = vld [vmem:[%s1508 + $0x10] sm:$0xf]
      %v1514 = vld [vmem:[%s1508 + $0x14] sm:$0xf]
      %v1515 = vld [vmem:[%s1508 + $0x18] sm:$0xf]
      %v1516 = vld [vmem:[%s1508 + $0x1c] sm:$0xf]
      %v1517 = vld [vmem:[%s1508 + $0x20] sm:$0xf]
      %v1518 = vld [vmem:[%s1508 + $0x24] sm:$0xf]
      %v1519 = vld [vmem:[%s1508 + $0x28] sm:$0xf]
      %v1520 = vld [vmem:[%s1508 + $0x2c] sm:$0xf]
      %v1521 = vld [vmem:[%s1508 + $0x30] sm:$0xf]
      %v1522 = vld [vmem:[%s1508 + $0x34] sm:$0xf]
      %v1523 = vld [vmem:[%s1508 + $0x38] sm:$0xf]
      %v1524 = vld [vmem:[%s1508 + $0x3c] sm:$0xf]
      %v1525 = vunpack.c.l.b16 %v1385
      %v1526 = vunpack.c.l.b16 %v1388
      %v1527 = vunpack.c.l.b16 %v1392
      %v1528 = vunpack.c.l.b16 %v1395
      %v1529 = vunpack.c.l.b16 %v1399
      %v1530 = vunpack.c.l.b16 %v1402
      %v1531 = vunpack.c.l.b16 %v1406
      %v1532 = vunpack.c.l.b16 %v1409
      %v1533 = vunpack.c.l.b16 %v1413
      %v1534 = vunpack.c.l.b16 %v1416
      %v1535 = vunpack.c.l.b16 %v1420
      %v1536 = vunpack.c.l.b16 %v1423
      %v1537 = vunpack.c.l.b16 %v1427
      %v1538 = vunpack.c.l.b16 %v1430
      %v1539 = vunpack.c.l.b16 %v1434
      %v1540 = vunpack.c.l.b16 %v1437
      %v1541 = vunpack.c.l.b16 %v1441
      %v1542 = vunpack.c.l.b16 %v1444
      %v1543 = vunpack.c.l.b16 %v1448
      %v1544 = vunpack.c.l.b16 %v1451
      %v1545 = vunpack.c.l.b16 %v1455
      %v1546 = vunpack.c.l.b16 %v1458
      %v1547 = vunpack.c.l.b16 %v1462
      %v1548 = vunpack.c.l.b16 %v1465
      %v1549 = vunpack.c.l.b16 %v1469
      %v1550 = vunpack.c.l.b16 %v1472
      %v1551 = vunpack.c.l.b16 %v1476
      %v1552 = vunpack.c.l.b16 %v1479
      %v1553 = vunpack.c.l.b16 %v1483
      %v1554 = vunpack.c.l.b16 %v1486
      %v1555 = vunpack.c.l.b16 %v1490
      %v1556 = vunpack.c.l.b16 %v1493
      %v1557 = vpack.c.b16 %v1526, %v1525
      %v1558 = vpack.c.b16 %v1528, %v1527
      %v1559 = vpack.c.b16 %v1530, %v1529
      %v1560 = vpack.c.b16 %v1532, %v1531
      %v1561 = vpack.c.b16 %v1534, %v1533
      %v1562 = vpack.c.b16 %v1536, %v1535
      %v1563 = vpack.c.b16 %v1538, %v1537
      %v1564 = vpack.c.b16 %v1540, %v1539
      %v1565 = vpack.c.b16 %v1542, %v1541
      %v1566 = vpack.c.b16 %v1544, %v1543
      %v1567 = vpack.c.b16 %v1546, %v1545
      %v1568 = vpack.c.b16 %v1548, %v1547
      %v1569 = vpack.c.b16 %v1550, %v1549
      %v1570 = vpack.c.b16 %v1552, %v1551
      %v1571 = vpack.c.b16 %v1554, %v1553
      %v1572 = vpack.c.b16 %v1556, %v1555
      %v1605 = vunpack.c.l.b16 %v1509
      %v1606 = vunpack.c.l.b16 %v1510
      %v1607 = vunpack.c.l.b16 %v1511
      %v1608 = vunpack.c.l.b16 %v1512
      %v1609 = vunpack.c.l.b16 %v1513
      %v1610 = vunpack.c.l.b16 %v1514
      %v1611 = vunpack.c.l.b16 %v1515
      %v1612 = vunpack.c.l.b16 %v1516
      %v1613 = vunpack.c.l.b16 %v1517
      %v1614 = vunpack.c.l.b16 %v1518
      %v1615 = vunpack.c.l.b16 %v1519
      %v1616 = vunpack.c.l.b16 %v1520
      %v1617 = vunpack.c.l.b16 %v1521
      %v1618 = vunpack.c.l.b16 %v1522
      %v1619 = vunpack.c.l.b16 %v1523
      %v1620 = vunpack.c.l.b16 %v1524
      %v1621 = vpack.c.b16 %v1606, %v1605
      %v1622 = vpack.c.b16 %v1608, %v1607
      %v1623 = vpack.c.b16 %v1610, %v1609
      %v1624 = vpack.c.b16 %v1612, %v1611
      %v1625 = vpack.c.b16 %v1614, %v1613
      %v1626 = vpack.c.b16 %v1616, %v1615
      %v1627 = vpack.c.b16 %v1618, %v1617
      %v1628 = vpack.c.b16 %v1620, %v1619
      %1637 = vmatprep.subr.bf16.mxu0 0
      %1638 = vmatpush1.bf16.msra.mxu0 %v1621
      %1639 = vmatprep.subr.bf16.mxu0 0
      %1640 = vmatpush1.bf16.msra.mxu0 %v1622
      %1641 = vmatprep.subr.bf16.mxu0 0
      %1642 = vmatpush1.bf16.msra.mxu0 %v1623
      %1643 = vmatprep.subr.bf16.mxu0 0
      %1644 = vmatpush1.bf16.msra.mxu0 %v1624
      %1645 = vmatprep.subr.bf16.mxu0 0
      %1646 = vmatpush1.bf16.msra.mxu0 %v1625
      %1647 = vmatprep.subr.bf16.mxu0 0
      %1648 = vmatpush1.bf16.msra.mxu0 %v1626
      %1649 = vmatprep.subr.bf16.mxu0 0
      %1650 = vmatpush1.bf16.msra.mxu0 %v1627
      %1651 = vmatprep.subr.bf16.mxu0 0
      %1652 = vmatpush1.bf16.msra.mxu0 %v1628
      %1653 = vmatprep.subr.bf16.mxu0 0
      %1654 = vmatpush1.bf16.msra.mxu0 0
      %1655 = vmatprep.subr.bf16.mxu0 0
      %1656 = vmatpush1.bf16.msra.mxu0 0
      %1657 = vmatprep.subr.bf16.mxu0 0
      %1658 = vmatpush1.bf16.msra.mxu0 0
      %1659 = vmatprep.subr.bf16.mxu0 0
      %1660 = vmatpush1.bf16.msra.mxu0 0
      %1661 = vmatprep.subr.bf16.mxu0 0
      %1662 = vmatpush1.bf16.msra.mxu0 0
      %1663 = vmatprep.subr.bf16.mxu0 0
      %1664 = vmatpush1.bf16.msra.mxu0 0
      %1665 = vmatprep.subr.bf16.mxu0 0
      %1666 = vmatpush1.bf16.msra.mxu0 0
      %1667 = vmatprep.subr.bf16.mxu0 0
      %1668 = vmatpush1.bf16.msra.mxu0 0
      %1669 = vmatprep.mubr.bf16.mxu0 0
      %1670 = vmatmul.mubr.bf16.gmra.mrb[0].mxu0 %v1557
      %v1671 = vpop.f32.mrb[0].mxu0
      %v1672 = vadd.f32 0.0, %v1671
      %v1673 = vpop.f32.mrb[0].mxu0
      %v1674 = vpop.f32.mrb[0].mxu0
      %v1675 = vadd.f32 0.0, %v1674
      %v1676 = vpop.f32.mrb[0].mxu0
      %1677 = vmatprep.mubr.bf16.mxu0 0
      %1678 = vmatmul.mubr.bf16.gmra.mrb[0].mxu0 %v1558
      %v1679 = vpop.f32.mrb[0].mxu0
      %v1680 = vadd.f32 0.0, %v1679
      %v1681 = vpop.f32.mrb[0].mxu0
      %v1682 = vpop.f32.mrb[0].mxu0
      %v1683 = vadd.f32 0.0, %v1682
      %v1684 = vpop.f32.mrb[0].mxu0
      %1685 = vmatprep.mubr.bf16.mxu0 0
      %1686 = vmatmul.mubr.bf16.gmra.mrb[0].mxu0 %v1559
      %v1687 = vpop.f32.mrb[0].mxu0
      %v1688 = vadd.f32 0.0, %v1687
      %v1689 = vpop.f32.mrb[0].mxu0
      %v1690 = vpop.f32.mrb[0].mxu0
      %v1691 = vadd.f32 0.0, %v1690
      %v1692 = vpop.f32.mrb[0].mxu0
      %1693 = vmatprep.mubr.bf16.mxu0 0
      %1694 = vmatmul.mubr.bf16.gmra.mrb[0].mxu0 %v1560
      %v1695 = vpop.f32.mrb[0].mxu0
      %v1696 = vadd.f32 0.0, %v1695
      %v1697 = vpop.f32.mrb[0].mxu0
      %v1698 = vpop.f32.mrb[0].mxu0
      %v1699 = vadd.f32 0.0, %v1698
      %v1700 = vpop.f32.mrb[0].mxu0
      %1701 = vmatprep.mubr.bf16.mxu0 0
      %1702 = vmatmul.mubr.bf16.gmra.mrb[0].mxu0 %v1561
      %v1703 = vpop.f32.mrb[0].mxu0
      %v1704 = vadd.f32 0.0, %v1703
      %v1705 = vpop.f32.mrb[0].mxu0
      %v1706 = vpop.f32.mrb[0].mxu0
      %v1707 = vadd.f32 0.0, %v1706
      %v1708 = vpop.f32.mrb[0].mxu0
      %1709 = vmatprep.mubr.bf16.mxu0 0
      %1710 = vmatmul.mubr.bf16.gmra.mrb[0].mxu0 %v1562
      %v1711 = vpop.f32.mrb[0].mxu0
      %v1712 = vadd.f32 0.0, %v1711
      %v1713 = vpop.f32.mrb[0].mxu0
      %v1714 = vpop.f32.mrb[0].mxu0
      %v1715 = vadd.f32 0.0, %v1714
      %v1716 = vpop.f32.mrb[0].mxu0
      %1717 = vmatprep.mubr.bf16.mxu0 0
      %1718 = vmatmul.mubr.bf16.gmra.mrb[0].mxu0 %v1563
      %v1719 = vpop.f32.mrb[0].mxu0
      %v1720 = vadd.f32 0.0, %v1719
      %v1721 = vpop.f32.mrb[0].mxu0
      %v1722 = vpop.f32.mrb[0].mxu0
      %v1723 = vadd.f32 0.0, %v1722
      %v1724 = vpop.f32.mrb[0].mxu0
      %1725 = vmatprep.mubr.bf16.mxu0 0
      %1726 = vmatmul.mubr.bf16.gmra.mrb[0].mxu0 %v1564
      %v1727 = vpop.f32.mrb[0].mxu0
      %v1728 = vadd.f32 0.0, %v1727
      %v1729 = vpop.f32.mrb[0].mxu0
      %v1730 = vpop.f32.mrb[0].mxu0
      %v1731 = vadd.f32 0.0, %v1730
      %v1732 = vpop.f32.mrb[0].mxu0
      %1733 = vmatprep.mubr.bf16.mxu0 0
      %1734 = vmatmul.mubr.bf16.gmra.mrb[0].mxu0 %v1565
      %v1735 = vpop.f32.mrb[0].mxu0
      %v1736 = vadd.f32 0.0, %v1735
      %v1737 = vpop.f32.mrb[0].mxu0
      %v1738 = vpop.f32.mrb[0].mxu0
      %v1739 = vadd.f32 0.0, %v1738
      %v1740 = vpop.f32.mrb[0].mxu0
      %1741 = vmatprep.mubr.bf16.mxu0 0
      %1742 = vmatmul.mubr.bf16.gmra.mrb[0].mxu0 %v1566
      %v1743 = vpop.f32.mrb[0].mxu0
      %v1744 = vadd.f32 0.0, %v1743
      %v1745 = vpop.f32.mrb[0].mxu0
      %v1746 = vpop.f32.mrb[0].mxu0
      %v1747 = vadd.f32 0.0, %v1746
      %v1748 = vpop.f32.mrb[0].mxu0
      %1749 = vmatprep.mubr.bf16.mxu0 0
      %1750 = vmatmul.mubr.bf16.gmra.mrb[0].mxu0 %v1567
      %v1751 = vpop.f32.mrb[0].mxu0
      %v1752 = vadd.f32 0.0, %v1751
      %v1753 = vpop.f32.mrb[0].mxu0
      %v1754 = vpop.f32.mrb[0].mxu0
      %v1755 = vadd.f32 0.0, %v1754
      %v1756 = vpop.f32.mrb[0].mxu0
      %1757 = vmatprep.mubr.bf16.mxu0 0
      %1758 = vmatmul.mubr.bf16.gmra.mrb[0].mxu0 %v1568
      %v1759 = vpop.f32.mrb[0].mxu0
      %v1760 = vadd.f32 0.0, %v1759
      %v1761 = vpop.f32.mrb[0].mxu0
      %v1762 = vpop.f32.mrb[0].mxu0
      %v1763 = vadd.f32 0.0, %v1762
      %v1764 = vpop.f32.mrb[0].mxu0
      %1765 = vmatprep.mubr.bf16.mxu0 0
      %1766 = vmatmul.mubr.bf16.gmra.mrb[0].mxu0 %v1569
      %v1767 = vpop.f32.mrb[0].mxu0
      %v1768 = vadd.f32 0.0, %v1767
      %v1769 = vpop.f32.mrb[0].mxu0
      %v1770 = vpop.f32.mrb[0].mxu0
      %v1771 = vadd.f32 0.0, %v1770
      %v1772 = vpop.f32.mrb[0].mxu0
      %1773 = vmatprep.mubr.bf16.mxu0 0
      %1774 = vmatmul.mubr.bf16.gmra.mrb[0].mxu0 %v1570
      %v1775 = vpop.f32.mrb[0].mxu0
      %v1776 = vadd.f32 0.0, %v1775
      %v1777 = vpop.f32.mrb[0].mxu0
      %v1778 = vpop.f32.mrb[0].mxu0
      %v1779 = vadd.f32 0.0, %v1778
      %v1780 = vpop.f32.mrb[0].mxu0
      %1781 = vmatprep.mubr.bf16.mxu0 0
      %1782 = vmatmul.mubr.bf16.gmra.mrb[0].mxu0 %v1571
      %v1783 = vpop.f32.mrb[0].mxu0
      %v1784 = vadd.f32 0.0, %v1783
      %v1785 = vpop.f32.mrb[0].mxu0
      %v1786 = vpop.f32.mrb[0].mxu0
      %v1787 = vadd.f32 0.0, %v1786
      %v1788 = vpop.f32.mrb[0].mxu0
      %1789 = vmatprep.mubr.bf16.mxu0 0
      %1790 = vmatmul.mubr.bf16.gmra.mrb[0].mxu0 %v1572
      %v1791 = vpop.f32.mrb[0].mxu0
      %v1792 = vadd.f32 0.0, %v1791
      %v1793 = vpop.f32.mrb[0].mxu0
      %v1794 = vpop.f32.mrb[0].mxu0
      %v1795 = vadd.f32 0.0, %v1794
      %v1796 = vpop.f32.mrb[0].mxu0
      %1797 = vdwg.mxu0
      %v1798 = vadd.f32 %v1197, %v1672
      %v1799 = vadd.f32 %v1200, %v1675
      %v1800 = vadd.f32 %v1205, %v1680
      %v1801 = vadd.f32 %v1208, %v1683
      %v1802 = vadd.f32 %v1213, %v1688
      %v1803 = vadd.f32 %v1216, %v1691
      %v1804 = vadd.f32 %v1221, %v1696
      %v1805 = vadd.f32 %v1224, %v1699
      %v1806 = vadd.f32 %v1229, %v1704
      %v1807 = vadd.f32 %v1232, %v1707
      %v1808 = vadd.f32 %v1237, %v1712
      %v1809 = vadd.f32 %v1240, %v1715
      %v1810 = vadd.f32 %v1245, %v1720
      %v1811 = vadd.f32 %v1248, %v1723
      %v1812 = vadd.f32 %v1253, %v1728
      %v1813 = vadd.f32 %v1256, %v1731
      %v1814 = vadd.f32 %v1261, %v1736
      %v1815 = vadd.f32 %v1264, %v1739
      %v1816 = vadd.f32 %v1269, %v1744
      %v1817 = vadd.f32 %v1272, %v1747
      %v1818 = vadd.f32 %v1277, %v1752
      %v1819 = vadd.f32 %v1280, %v1755
      %v1820 = vadd.f32 %v1285, %v1760
      %v1821 = vadd.f32 %v1288, %v1763
      %v1822 = vadd.f32 %v1293, %v1768
      %v1823 = vadd.f32 %v1296, %v1771
      %v1824 = vadd.f32 %v1301, %v1776
      %v1825 = vadd.f32 %v1304, %v1779
      %v1826 = vadd.f32 %v1309, %v1784
      %v1827 = vadd.f32 %v1312, %v1787
      %v1828 = vadd.f32 %v1317, %v1792
      %v1829 = vadd.f32 %v1320, %v1795
      %1830 = vst [vmem:[#allocation2] sm:$0xff] %v1798
      %1831 = vst [vmem:[#allocation2 + $0x8] sm:$0xff] %v1799
      %1832 = vst [vmem:[#allocation2 + $0x10] sm:$0xff] %v1800
      %1833 = vst [vmem:[#allocation2 + $0x18] sm:$0xff] %v1801
      %1834 = vst [vmem:[#allocation2 + $0x20] sm:$0xff] %v1802
      %1835 = vst [vmem:[#allocation2 + $0x28] sm:$0xff] %v1803
      %1836 = vst [vmem:[#allocation2 + $0x30] sm:$0xff] %v1804
      %1837 = vst [vmem:[#allocation2 + $0x38] sm:$0xff] %v1805
      %1838 = vst [vmem:[#allocation2 + $0x40] sm:$0xff] %v1806
      %1839 = vst [vmem:[#allocation2 + $0x48] sm:$0xff] %v1807
      %1840 = vst [vmem:[#allocation2 + $0x50] sm:$0xff] %v1808
      %1841 = vst [vmem:[#allocation2 + $0x58] sm:$0xff] %v1809
      %1842 = vst [vmem:[#allocation2 + $0x60] sm:$0xff] %v1810
      %1843 = vst [vmem:[#allocation2 + $0x68] sm:$0xff] %v1811
      %1844 = vst [vmem:[#allocation2 + $0x70] sm:$0xff] %v1812
      %1845 = vst [vmem:[#allocation2 + $0x78] sm:$0xff] %v1813
      %1846 = vst [vmem:[#allocation2 + $0x80] sm:$0xff] %v1814
      %1847 = vst [vmem:[#allocation2 + $0x88] sm:$0xff] %v1815
      %1848 = vst [vmem:[#allocation2 + $0x90] sm:$0xff] %v1816
      %1849 = vst [vmem:[#allocation2 + $0x98] sm:$0xff] %v1817
      %1850 = vst [vmem:[#allocation2 + $0xa0] sm:$0xff] %v1818
      %1851 = vst [vmem:[#allocation2 + $0xa8] sm:$0xff] %v1819
      %1852 = vst [vmem:[#allocation2 + $0xb0] sm:$0xff] %v1820
      %1853 = vst [vmem:[#allocation2 + $0xb8] sm:$0xff] %v1821
      %1854 = vst [vmem:[#allocation2 + $0xc0] sm:$0xff] %v1822
      %1855 = vst [vmem:[#allocation2 + $0xc8] sm:$0xff] %v1823
      %1856 = vst [vmem:[#allocation2 + $0xd0] sm:$0xff] %v1824
      %1857 = vst [vmem:[#allocation2 + $0xd8] sm:$0xff] %v1825
      %1858 = vst [vmem:[#allocation2 + $0xe0] sm:$0xff] %v1826
      %1859 = vst [vmem:[#allocation2 + $0xe8] sm:$0xff] %v1827
      %1860 = vst [vmem:[#allocation2 + $0xf0] sm:$0xff] %v1828
      %1861 = vst [vmem:[#allocation2 + $0xf8] sm:$0xff] %v1829
      %s1862 = scalar_lea.vmem %s210, 192
      %v1863 = vld [vmem:[%s1862] sm:$0xf]
      %v1864 = vld [vmem:[%s1862 + $0x4] sm:$0xf]
      %v1865 = vld [vmem:[%s1862 + $0x8] sm:$0xf]
      %v1866 = vld [vmem:[%s1862 + $0xc] sm:$0xf]
      %v1867 = vld [vmem:[%s1862 + $0x10] sm:$0xf]
      %v1868 = vld [vmem:[%s1862 + $0x14] sm:$0xf]
      %v1869 = vld [vmem:[%s1862 + $0x18] sm:$0xf]
      %v1870 = vld [vmem:[%s1862 + $0x1c] sm:$0xf]
      %v1871 = vld [vmem:[%s1862 + $0x20] sm:$0xf]
      %v1872 = vld [vmem:[%s1862 + $0x24] sm:$0xf]
      %v1873 = vld [vmem:[%s1862 + $0x28] sm:$0xf]
      %v1874 = vld [vmem:[%s1862 + $0x2c] sm:$0xf]
      %v1875 = vld [vmem:[%s1862 + $0x30] sm:$0xf]
      %v1876 = vld [vmem:[%s1862 + $0x34] sm:$0xf]
      %v1877 = vld [vmem:[%s1862 + $0x38] sm:$0xf]
      %v1878 = vld [vmem:[%s1862 + $0x3c] sm:$0xf]
      %s1879 = scalar_lea.vmem %s210, 256
      %v1880 = vld [vmem:[%s1879] sm:$0xf]
      %v1881 = vld [vmem:[%s1879 + $0x4] sm:$0xf]
      %v1882 = vld [vmem:[%s1879 + $0x8] sm:$0xf]
      %v1883 = vld [vmem:[%s1879 + $0xc] sm:$0xf]
      %v1884 = vld [vmem:[%s1879 + $0x10] sm:$0xf]
      %v1885 = vld [vmem:[%s1879 + $0x14] sm:$0xf]
      %v1886 = vld [vmem:[%s1879 + $0x18] sm:$0xf]
      %v1887 = vld [vmem:[%s1879 + $0x1c] sm:$0xf]
      %v1888 = vld [vmem:[%s1879 + $0x20] sm:$0xf]
      %v1889 = vld [vmem:[%s1879 + $0x24] sm:$0xf]
      %v1890 = vld [vmem:[%s1879 + $0x28] sm:$0xf]
      %v1891 = vld [vmem:[%s1879 + $0x2c] sm:$0xf]
      %v1892 = vld [vmem:[%s1879 + $0x30] sm:$0xf]
      %v1893 = vld [vmem:[%s1879 + $0x34] sm:$0xf]
      %v1894 = vld [vmem:[%s1879 + $0x38] sm:$0xf]
      %v1895 = vld [vmem:[%s1879 + $0x3c] sm:$0xf]
      %v1896 = vunpack.c.l.b16 %v693
      %v1897 = vunpack.c.l.b16 %v703
      %v1898 = vpack.c.b16 %v1897, %v1896
      %v1916 = vunpack.c.l.b16 %v1880
      %v1917 = vunpack.c.l.b16 %v1881
      %v1918 = vunpack.c.l.b16 %v1882
      %v1919 = vunpack.c.l.b16 %v1883
      %v1920 = vunpack.c.l.b16 %v1884
      %v1921 = vunpack.c.l.b16 %v1885
      %v1922 = vunpack.c.l.b16 %v1886
      %v1923 = vunpack.c.l.b16 %v1887
      %v1924 = vunpack.c.l.b16 %v1888
      %v1925 = vunpack.c.l.b16 %v1889
      %v1926 = vunpack.c.l.b16 %v1890
      %v1927 = vunpack.c.l.b16 %v1891
      %v1928 = vunpack.c.l.b16 %v1892
      %v1929 = vunpack.c.l.b16 %v1893
      %v1930 = vunpack.c.l.b16 %v1894
      %v1931 = vunpack.c.l.b16 %v1895
      %v1932 = vpack.c.b16 %v1917, %v1916
      %v1933 = vpack.c.b16 %v1919, %v1918
      %v1934 = vpack.c.b16 %v1921, %v1920
      %v1935 = vpack.c.b16 %v1923, %v1922
      %v1936 = vpack.c.b16 %v1925, %v1924
      %v1937 = vpack.c.b16 %v1927, %v1926
      %v1938 = vpack.c.b16 %v1929, %v1928
      %v1939 = vpack.c.b16 %v1931, %v1930
      %1948 = vmatprep.subr.bf16.mxu0 0
      %1949 = vmatpush1.bf16.msra.mxu0 %v1932
      %1950 = vmatprep.subr.bf16.mxu0 0
      %1951 = vmatpush1.bf16.msra.mxu0 %v1933
      %1952 = vmatprep.subr.bf16.mxu0 0
      %1953 = vmatpush1.bf16.msra.mxu0 %v1934
      %1954 = vmatprep.subr.bf16.mxu0 0
      %1955 = vmatpush1.bf16.msra.mxu0 %v1935
      %1956 = vmatprep.subr.bf16.mxu0 0
      %1957 = vmatpush1.bf16.msra.mxu0 %v1936
      %1958 = vmatprep.subr.bf16.mxu0 0
      %1959 = vmatpush1.bf16.msra.mxu0 %v1937
      %1960 = vmatprep.subr.bf16.mxu0 0
      %1961 = vmatpush1.bf16.msra.mxu0 %v1938
      %1962 = vmatprep.subr.bf16.mxu0 0
      %1963 = vmatpush1.bf16.msra.mxu0 %v1939
      %1964 = vmatprep.subr.bf16.mxu0 0
      %1965 = vmatpush1.bf16.msra.mxu0 0
      %1966 = vmatprep.subr.bf16.mxu0 0
      %1967 = vmatpush1.bf16.msra.mxu0 0
      %1968 = vmatprep.subr.bf16.mxu0 0
      %1969 = vmatpush1.bf16.msra.mxu0 0
      %1970 = vmatprep.subr.bf16.mxu0 0
      %1971 = vmatpush1.bf16.msra.mxu0 0
      %1972 = vmatprep.subr.bf16.mxu0 0
      %1973 = vmatpush1.bf16.msra.mxu0 0
      %1974 = vmatprep.subr.bf16.mxu0 0
      %1975 = vmatpush1.bf16.msra.mxu0 0
      %1976 = vmatprep.subr.bf16.mxu0 0
      %1977 = vmatpush1.bf16.msra.mxu0 0
      %1978 = vmatprep.subr.bf16.mxu0 0
      %1979 = vmatpush1.bf16.msra.mxu0 0
      %1980 = vmatprep.mubr.bf16.mxu0 0
      %1981 = vmatmul.mubr.bf16.gmra.mrb[0].mxu0 %v778
      %v1982 = vpop.f32.mrb[0].mxu0
      %v1983 = vadd.f32 0.0, %v1982
      %v1984 = vpop.f32.mrb[0].mxu0
      %v1985 = vpop.f32.mrb[0].mxu0
      %v1986 = vadd.f32 0.0, %v1985
      %v1987 = vpop.f32.mrb[0].mxu0
      %1988 = vmatprep.mubr.bf16.mxu0 0
      %1989 = vmatmul.mubr.bf16.gmra.mrb[0].mxu0 %v779
      %v1990 = vpop.f32.mrb[0].mxu0
      %v1991 = vadd.f32 0.0, %v1990
      %v1992 = vpop.f32.mrb[0].mxu0
      %v1993 = vpop.f32.mrb[0].mxu0
      %v1994 = vadd.f32 0.0, %v1993
      %v1995 = vpop.f32.mrb[0].mxu0
      %1996 = vmatprep.mubr.bf16.mxu0 0
      %1997 = vmatmul.mubr.bf16.gmra.mrb[0].mxu0 %v780
      %v1998 = vpop.f32.mrb[0].mxu0
      %v1999 = vadd.f32 0.0, %v1998
      %v2000 = vpop.f32.mrb[0].mxu0
      %v2001 = vpop.f32.mrb[0].mxu0
      %v2002 = vadd.f32 0.0, %v2001
      %v2003 = vpop.f32.mrb[0].mxu0
      %2004 = vmatprep.mubr.bf16.mxu0 0
      %2005 = vmatmul.mubr.bf16.gmra.mrb[0].mxu0 %v781
      %v2006 = vpop.f32.mrb[0].mxu0
      %v2007 = vadd.f32 0.0, %v2006
      %v2008 = vpop.f32.mrb[0].mxu0
      %v2009 = vpop.f32.mrb[0].mxu0
      %v2010 = vadd.f32 0.0, %v2009
      %v2011 = vpop.f32.mrb[0].mxu0
      %2012 = vmatprep.mubr.bf16.mxu0 0
      %2013 = vmatmul.mubr.bf16.gmra.mrb[0].mxu0 %v782
      %v2014 = vpop.f32.mrb[0].mxu0
      %v2015 = vadd.f32 0.0, %v2014
      %v2016 = vpop.f32.mrb[0].mxu0
      %v2017 = vpop.f32.mrb[0].mxu0
      %v2018 = vadd.f32 0.0, %v2017
      %v2019 = vpop.f32.mrb[0].mxu0
      %2020 = vmatprep.mubr.bf16.mxu0 0
      %2021 = vmatmul.mubr.bf16.gmra.mrb[0].mxu0 %v783
      %v2022 = vpop.f32.mrb[0].mxu0
      %v2023 = vadd.f32 0.0, %v2022
      %v2024 = vpop.f32.mrb[0].mxu0
      %v2025 = vpop.f32.mrb[0].mxu0
      %v2026 = vadd.f32 0.0, %v2025
      %v2027 = vpop.f32.mrb[0].mxu0
      %2028 = vmatprep.mubr.bf16.mxu0 0
      %2029 = vmatmul.mubr.bf16.gmra.mrb[0].mxu0 %v784
      %v2030 = vpop.f32.mrb[0].mxu0
      %v2031 = vadd.f32 0.0, %v2030
      %v2032 = vpop.f32.mrb[0].mxu0
      %v2033 = vpop.f32.mrb[0].mxu0
      %v2034 = vadd.f32 0.0, %v2033
      %v2035 = vpop.f32.mrb[0].mxu0
      %2036 = vmatprep.mubr.bf16.mxu0 0
      %2037 = vmatmul.mubr.bf16.gmra.mrb[0].mxu0 %v785
      %v2038 = vpop.f32.mrb[0].mxu0
      %v2039 = vadd.f32 0.0, %v2038
      %v2040 = vpop.f32.mrb[0].mxu0
      %v2041 = vpop.f32.mrb[0].mxu0
      %v2042 = vadd.f32 0.0, %v2041
      %v2043 = vpop.f32.mrb[0].mxu0
      %2044 = vmatprep.mubr.bf16.mxu0 0
      %2045 = vmatmul.mubr.bf16.gmra.mrb[0].mxu0 %v786
      %v2046 = vpop.f32.mrb[0].mxu0
      %v2047 = vadd.f32 0.0, %v2046
      %v2048 = vpop.f32.mrb[0].mxu0
      %v2049 = vpop.f32.mrb[0].mxu0
      %v2050 = vadd.f32 0.0, %v2049
      %v2051 = vpop.f32.mrb[0].mxu0
      %2052 = vmatprep.mubr.bf16.mxu0 0
      %2053 = vmatmul.mubr.bf16.gmra.mrb[0].mxu0 %v787
      %v2054 = vpop.f32.mrb[0].mxu0
      %v2055 = vadd.f32 0.0, %v2054
      %v2056 = vpop.f32.mrb[0].mxu0
      %v2057 = vpop.f32.mrb[0].mxu0
      %v2058 = vadd.f32 0.0, %v2057
      %v2059 = vpop.f32.mrb[0].mxu0
      %2060 = vmatprep.mubr.bf16.mxu0 0
      %2061 = vmatmul.mubr.bf16.gmra.mrb[0].mxu0 %v788
      %v2062 = vpop.f32.mrb[0].mxu0
      %v2063 = vadd.f32 0.0, %v2062
      %v2064 = vpop.f32.mrb[0].mxu0
      %v2065 = vpop.f32.mrb[0].mxu0
      %v2066 = vadd.f32 0.0, %v2065
      %v2067 = vpop.f32.mrb[0].mxu0
      %2068 = vmatprep.mubr.bf16.mxu0 0
      %2069 = vmatmul.mubr.bf16.gmra.mrb[0].mxu0 %v789
      %v2070 = vpop.f32.mrb[0].mxu0
      %v2071 = vadd.f32 0.0, %v2070
      %v2072 = vpop.f32.mrb[0].mxu0
      %v2073 = vpop.f32.mrb[0].mxu0
      %v2074 = vadd.f32 0.0, %v2073
      %v2075 = vpop.f32.mrb[0].mxu0
      %2076 = vmatprep.mubr.bf16.mxu0 0
      %2077 = vmatmul.mubr.bf16.gmra.mrb[0].mxu0 %v790
      %v2078 = vpop.f32.mrb[0].mxu0
      %v2079 = vadd.f32 0.0, %v2078
      %v2080 = vpop.f32.mrb[0].mxu0
      %v2081 = vpop.f32.mrb[0].mxu0
      %v2082 = vadd.f32 0.0, %v2081
      %v2083 = vpop.f32.mrb[0].mxu0
      %2084 = vmatprep.mubr.bf16.mxu0 0
      %2085 = vmatmul.mubr.bf16.gmra.mrb[0].mxu0 %v791
      %v2086 = vpop.f32.mrb[0].mxu0
      %v2087 = vadd.f32 0.0, %v2086
      %v2088 = vpop.f32.mrb[0].mxu0
      %v2089 = vpop.f32.mrb[0].mxu0
      %v2090 = vadd.f32 0.0, %v2089
      %v2091 = vpop.f32.mrb[0].mxu0
      %2092 = vmatprep.mubr.bf16.mxu0 0
      %2093 = vmatmul.mubr.bf16.gmra.mrb[0].mxu0 %v792
      %v2094 = vpop.f32.mrb[0].mxu0
      %v2095 = vadd.f32 0.0, %v2094
      %v2096 = vpop.f32.mrb[0].mxu0
      %v2097 = vpop.f32.mrb[0].mxu0
      %v2098 = vadd.f32 0.0, %v2097
      %v2099 = vpop.f32.mrb[0].mxu0
      %2100 = vmatprep.mubr.bf16.mxu0 0
      %2101 = vmatmul.mubr.bf16.gmra.mrb[0].mxu0 %v1898
      %v2102 = vpop.f32.mrb[0].mxu0
      %v2103 = vadd.f32 0.0, %v2102
      %v2104 = vpop.f32.mrb[0].mxu0
      %v2105 = vpop.f32.mrb[0].mxu0
      %v2106 = vadd.f32 0.0, %v2105
      %v2107 = vpop.f32.mrb[0].mxu0
      %2108 = vdwg.mxu0
      %v2110 = vunpack.c.l.b16 %v255
      %v2111 = vunpack.c.l.b16 %v256
      %v2112 = vpack.c.b16 %v2111, %v2110
      %v2130 = vunpack.c.l.b16 %v1863
      %v2131 = vunpack.c.l.b16 %v1864
      %v2132 = vunpack.c.l.b16 %v1865
      %v2133 = vunpack.c.l.b16 %v1866
      %v2134 = vunpack.c.l.b16 %v1867
      %v2135 = vunpack.c.l.b16 %v1868
      %v2136 = vunpack.c.l.b16 %v1869
      %v2137 = vunpack.c.l.b16 %v1870
      %v2138 = vunpack.c.l.b16 %v1871
      %v2139 = vunpack.c.l.b16 %v1872
      %v2140 = vunpack.c.l.b16 %v1873
      %v2141 = vunpack.c.l.b16 %v1874
      %v2142 = vunpack.c.l.b16 %v1875
      %v2143 = vunpack.c.l.b16 %v1876
      %v2144 = vunpack.c.l.b16 %v1877
      %v2145 = vunpack.c.l.b16 %v1878
      %v2146 = vpack.c.b16 %v2131, %v2130
      %v2147 = vpack.c.b16 %v2133, %v2132
      %v2148 = vpack.c.b16 %v2135, %v2134
      %v2149 = vpack.c.b16 %v2137, %v2136
      %v2150 = vpack.c.b16 %v2139, %v2138
      %v2151 = vpack.c.b16 %v2141, %v2140
      %v2152 = vpack.c.b16 %v2143, %v2142
      %v2153 = vpack.c.b16 %v2145, %v2144
      %2162 = vmatprep.subr.bf16.mxu0 0
      %2163 = vmatpush1.bf16.msra.mxu0 %v2146
      %2164 = vmatprep.subr.bf16.mxu0 0
      %2165 = vmatpush1.bf16.msra.mxu0 %v2147
      %2166 = vmatprep.subr.bf16.mxu0 0
      %2167 = vmatpush1.bf16.msra.mxu0 %v2148
      %2168 = vmatprep.subr.bf16.mxu0 0
      %2169 = vmatpush1.bf16.msra.mxu0 %v2149
      %2170 = vmatprep.subr.bf16.mxu0 0
      %2171 = vmatpush1.bf16.msra.mxu0 %v2150
      %2172 = vmatprep.subr.bf16.mxu0 0
      %2173 = vmatpush1.bf16.msra.mxu0 %v2151
      %2174 = vmatprep.subr.bf16.mxu0 0
      %2175 = vmatpush1.bf16.msra.mxu0 %v2152
      %2176 = vmatprep.subr.bf16.mxu0 0
      %2177 = vmatpush1.bf16.msra.mxu0 %v2153
      %2178 = vmatprep.subr.bf16.mxu0 0
      %2179 = vmatpush1.bf16.msra.mxu0 0
      %2180 = vmatprep.subr.bf16.mxu0 0
      %2181 = vmatpush1.bf16.msra.mxu0 0
      %2182 = vmatprep.subr.bf16.mxu0 0
      %2183 = vmatpush1.bf16.msra.mxu0 0
      %2184 = vmatprep.subr.bf16.mxu0 0
      %2185 = vmatpush1.bf16.msra.mxu0 0
      %2186 = vmatprep.subr.bf16.mxu0 0
      %2187 = vmatpush1.bf16.msra.mxu0 0
      %2188 = vmatprep.subr.bf16.mxu0 0
      %2189 = vmatpush1.bf16.msra.mxu0 0
      %2190 = vmatprep.subr.bf16.mxu0 0
      %2191 = vmatpush1.bf16.msra.mxu0 0
      %2192 = vmatprep.subr.bf16.mxu0 0
      %2193 = vmatpush1.bf16.msra.mxu0 0
      %2194 = vmatprep.mubr.bf16.mxu0 0
      %2195 = vmatmul.mubr.bf16.gmra.mrb[0].mxu0 %v1083
      %v2196 = vpop.f32.mrb[0].mxu0
      %v2197 = vadd.f32 %v1983, %v2196
      %v2198 = vpop.f32.mrb[0].mxu0
      %v2199 = vpop.f32.mrb[0].mxu0
      %v2200 = vadd.f32 %v1986, %v2199
      %v2201 = vpop.f32.mrb[0].mxu0
      %2202 = vmatprep.mubr.bf16.mxu0 0
      %2203 = vmatmul.mubr.bf16.gmra.mrb[0].mxu0 %v1084
      %v2204 = vpop.f32.mrb[0].mxu0
      %v2205 = vadd.f32 %v1991, %v2204
      %v2206 = vpop.f32.mrb[0].mxu0
      %v2207 = vpop.f32.mrb[0].mxu0
      %v2208 = vadd.f32 %v1994, %v2207
      %v2209 = vpop.f32.mrb[0].mxu0
      %2210 = vmatprep.mubr.bf16.mxu0 0
      %2211 = vmatmul.mubr.bf16.gmra.mrb[0].mxu0 %v1085
      %v2212 = vpop.f32.mrb[0].mxu0
      %v2213 = vadd.f32 %v1999, %v2212
      %v2214 = vpop.f32.mrb[0].mxu0
      %v2215 = vpop.f32.mrb[0].mxu0
      %v2216 = vadd.f32 %v2002, %v2215
      %v2217 = vpop.f32.mrb[0].mxu0
      %2218 = vmatprep.mubr.bf16.mxu0 0
      %2219 = vmatmul.mubr.bf16.gmra.mrb[0].mxu0 %v1086
      %v2220 = vpop.f32.mrb[0].mxu0
      %v2221 = vadd.f32 %v2007, %v2220
      %v2222 = vpop.f32.mrb[0].mxu0
      %v2223 = vpop.f32.mrb[0].mxu0
      %v2224 = vadd.f32 %v2010, %v2223
      %v2225 = vpop.f32.mrb[0].mxu0
      %2226 = vmatprep.mubr.bf16.mxu0 0
      %2227 = vmatmul.mubr.bf16.gmra.mrb[0].mxu0 %v1087
      %v2228 = vpop.f32.mrb[0].mxu0
      %v2229 = vadd.f32 %v2015, %v2228
      %v2230 = vpop.f32.mrb[0].mxu0
      %v2231 = vpop.f32.mrb[0].mxu0
      %v2232 = vadd.f32 %v2018, %v2231
      %v2233 = vpop.f32.mrb[0].mxu0
      %2234 = vmatprep.mubr.bf16.mxu0 0
      %2235 = vmatmul.mubr.bf16.gmra.mrb[0].mxu0 %v1088
      %v2236 = vpop.f32.mrb[0].mxu0
      %v2237 = vadd.f32 %v2023, %v2236
      %v2238 = vpop.f32.mrb[0].mxu0
      %v2239 = vpop.f32.mrb[0].mxu0
      %v2240 = vadd.f32 %v2026, %v2239
      %v2241 = vpop.f32.mrb[0].mxu0
      %2242 = vmatprep.mubr.bf16.mxu0 0
      %2243 = vmatmul.mubr.bf16.gmra.mrb[0].mxu0 %v1089
      %v2244 = vpop.f32.mrb[0].mxu0
      %v2245 = vadd.f32 %v2031, %v2244
      %v2246 = vpop.f32.mrb[0].mxu0
      %v2247 = vpop.f32.mrb[0].mxu0
      %v2248 = vadd.f32 %v2034, %v2247
      %v2249 = vpop.f32.mrb[0].mxu0
      %2250 = vmatprep.mubr.bf16.mxu0 0
      %2251 = vmatmul.mubr.bf16.gmra.mrb[0].mxu0 %v1090
      %v2252 = vpop.f32.mrb[0].mxu0
      %v2253 = vadd.f32 %v2039, %v2252
      %v2254 = vpop.f32.mrb[0].mxu0
      %v2255 = vpop.f32.mrb[0].mxu0
      %v2256 = vadd.f32 %v2042, %v2255
      %v2257 = vpop.f32.mrb[0].mxu0
      %2258 = vmatprep.mubr.bf16.mxu0 0
      %2259 = vmatmul.mubr.bf16.gmra.mrb[0].mxu0 %v1091
      %v2260 = vpop.f32.mrb[0].mxu0
      %v2261 = vadd.f32 %v2047, %v2260
      %v2262 = vpop.f32.mrb[0].mxu0
      %v2263 = vpop.f32.mrb[0].mxu0
      %v2264 = vadd.f32 %v2050, %v2263
      %v2265 = vpop.f32.mrb[0].mxu0
      %2266 = vmatprep.mubr.bf16.mxu0 0
      %2267 = vmatmul.mubr.bf16.gmra.mrb[0].mxu0 %v1092
      %v2268 = vpop.f32.mrb[0].mxu0
      %v2269 = vadd.f32 %v2055, %v2268
      %v2270 = vpop.f32.mrb[0].mxu0
      %v2271 = vpop.f32.mrb[0].mxu0
      %v2272 = vadd.f32 %v2058, %v2271
      %v2273 = vpop.f32.mrb[0].mxu0
      %2274 = vmatprep.mubr.bf16.mxu0 0
      %2275 = vmatmul.mubr.bf16.gmra.mrb[0].mxu0 %v1093
      %v2276 = vpop.f32.mrb[0].mxu0
      %v2277 = vadd.f32 %v2063, %v2276
      %v2278 = vpop.f32.mrb[0].mxu0
      %v2279 = vpop.f32.mrb[0].mxu0
      %v2280 = vadd.f32 %v2066, %v2279
      %v2281 = vpop.f32.mrb[0].mxu0
      %2282 = vmatprep.mubr.bf16.mxu0 0
      %2283 = vmatmul.mubr.bf16.gmra.mrb[0].mxu0 %v1094
      %v2284 = vpop.f32.mrb[0].mxu0
      %v2285 = vadd.f32 %v2071, %v2284
      %v2286 = vpop.f32.mrb[0].mxu0
      %v2287 = vpop.f32.mrb[0].mxu0
      %v2288 = vadd.f32 %v2074, %v2287
      %v2289 = vpop.f32.mrb[0].mxu0
      %2290 = vmatprep.mubr.bf16.mxu0 0
      %2291 = vmatmul.mubr.bf16.gmra.mrb[0].mxu0 %v1095
      %v2292 = vpop.f32.mrb[0].mxu0
      %v2293 = vadd.f32 %v2079, %v2292
      %v2294 = vpop.f32.mrb[0].mxu0
      %v2295 = vpop.f32.mrb[0].mxu0
      %v2296 = vadd.f32 %v2082, %v2295
      %v2297 = vpop.f32.mrb[0].mxu0
      %2298 = vmatprep.mubr.bf16.mxu0 0
      %2299 = vmatmul.mubr.bf16.gmra.mrb[0].mxu0 %v1096
      %v2300 = vpop.f32.mrb[0].mxu0
      %v2301 = vadd.f32 %v2087, %v2300
      %v2302 = vpop.f32.mrb[0].mxu0
      %v2303 = vpop.f32.mrb[0].mxu0
      %v2304 = vadd.f32 %v2090, %v2303
      %v2305 = vpop.f32.mrb[0].mxu0
      %2306 = vmatprep.mubr.bf16.mxu0 0
      %2307 = vmatmul.mubr.bf16.gmra.mrb[0].mxu0 %v1097
      %v2308 = vpop.f32.mrb[0].mxu0
      %v2309 = vadd.f32 %v2095, %v2308
      %v2310 = vpop.f32.mrb[0].mxu0
      %v2311 = vpop.f32.mrb[0].mxu0
      %v2312 = vadd.f32 %v2098, %v2311
      %v2313 = vpop.f32.mrb[0].mxu0
      %2314 = vmatprep.mubr.bf16.mxu0 0
      %2315 = vmatmul.mubr.bf16.gmra.mrb[0].mxu0 %v2112
      %v2316 = vpop.f32.mrb[0].mxu0
      %v2317 = vadd.f32 %v2103, %v2316
      %v2318 = vpop.f32.mrb[0].mxu0
      %v2319 = vpop.f32.mrb[0].mxu0
      %v2320 = vadd.f32 %v2106, %v2319
      %v2321 = vpop.f32.mrb[0].mxu0
      %2322 = vdwg.mxu0
      %s2323 = scalar_lea.vmem %s210, 320
      %v2324 = vld [vmem:[%s2323] sm:$0xf]
      %v2325 = vld [vmem:[%s2323 + $0x4] sm:$0xf]
      %v2326 = vld [vmem:[%s2323 + $0x8] sm:$0xf]
      %v2327 = vld [vmem:[%s2323 + $0xc] sm:$0xf]
      %v2328 = vld [vmem:[%s2323 + $0x10] sm:$0xf]
      %v2329 = vld [vmem:[%s2323 + $0x14] sm:$0xf]
      %v2330 = vld [vmem:[%s2323 + $0x18] sm:$0xf]
      %v2331 = vld [vmem:[%s2323 + $0x1c] sm:$0xf]
      %v2332 = vld [vmem:[%s2323 + $0x20] sm:$0xf]
      %v2333 = vld [vmem:[%s2323 + $0x24] sm:$0xf]
      %v2334 = vld [vmem:[%s2323 + $0x28] sm:$0xf]
      %v2335 = vld [vmem:[%s2323 + $0x2c] sm:$0xf]
      %v2336 = vld [vmem:[%s2323 + $0x30] sm:$0xf]
      %v2337 = vld [vmem:[%s2323 + $0x34] sm:$0xf]
      %v2338 = vld [vmem:[%s2323 + $0x38] sm:$0xf]
      %v2339 = vld [vmem:[%s2323 + $0x3c] sm:$0xf]
      %v2340 = vunpack.c.l.b16 %v1497
      %v2341 = vunpack.c.l.b16 %v1500
      %v2342 = vpack.c.b16 %v2341, %v2340
      %v2360 = vunpack.c.l.b16 %v2324
      %v2361 = vunpack.c.l.b16 %v2325
      %v2362 = vunpack.c.l.b16 %v2326
      %v2363 = vunpack.c.l.b16 %v2327
      %v2364 = vunpack.c.l.b16 %v2328
      %v2365 = vunpack.c.l.b16 %v2329
      %v2366 = vunpack.c.l.b16 %v2330
      %v2367 = vunpack.c.l.b16 %v2331
      %v2368 = vunpack.c.l.b16 %v2332
      %v2369 = vunpack.c.l.b16 %v2333
      %v2370 = vunpack.c.l.b16 %v2334
      %v2371 = vunpack.c.l.b16 %v2335
      %v2372 = vunpack.c.l.b16 %v2336
      %v2373 = vunpack.c.l.b16 %v2337
      %v2374 = vunpack.c.l.b16 %v2338
      %v2375 = vunpack.c.l.b16 %v2339
      %v2376 = vpack.c.b16 %v2361, %v2360
      %v2377 = vpack.c.b16 %v2363, %v2362
      %v2378 = vpack.c.b16 %v2365, %v2364
      %v2379 = vpack.c.b16 %v2367, %v2366
      %v2380 = vpack.c.b16 %v2369, %v2368
      %v2381 = vpack.c.b16 %v2371, %v2370
      %v2382 = vpack.c.b16 %v2373, %v2372
      %v2383 = vpack.c.b16 %v2375, %v2374
      %2392 = vmatprep.subr.bf16.mxu0 0
      %2393 = vmatpush1.bf16.msra.mxu0 %v2376
      %2394 = vmatprep.subr.bf16.mxu0 0
      %2395 = vmatpush1.bf16.msra.mxu0 %v2377
      %2396 = vmatprep.subr.bf16.mxu0 0
      %2397 = vmatpush1.bf16.msra.mxu0 %v2378
      %2398 = vmatprep.subr.bf16.mxu0 0
      %2399 = vmatpush1.bf16.msra.mxu0 %v2379
      %2400 = vmatprep.subr.bf16.mxu0 0
      %2401 = vmatpush1.bf16.msra.mxu0 %v2380
      %2402 = vmatprep.subr.bf16.mxu0 0
      %2403 = vmatpush1.bf16.msra.mxu0 %v2381
      %2404 = vmatprep.subr.bf16.mxu0 0
      %2405 = vmatpush1.bf16.msra.mxu0 %v2382
      %2406 = vmatprep.subr.bf16.mxu0 0
      %2407 = vmatpush1.bf16.msra.mxu0 %v2383
      %2408 = vmatprep.subr.bf16.mxu0 0
      %2409 = vmatpush1.bf16.msra.mxu0 0
      %2410 = vmatprep.subr.bf16.mxu0 0
      %2411 = vmatpush1.bf16.msra.mxu0 0
      %2412 = vmatprep.subr.bf16.mxu0 0
      %2413 = vmatpush1.bf16.msra.mxu0 0
      %2414 = vmatprep.subr.bf16.mxu0 0
      %2415 = vmatpush1.bf16.msra.mxu0 0
      %2416 = vmatprep.subr.bf16.mxu0 0
      %2417 = vmatpush1.bf16.msra.mxu0 0
      %2418 = vmatprep.subr.bf16.mxu0 0
      %2419 = vmatpush1.bf16.msra.mxu0 0
      %2420 = vmatprep.subr.bf16.mxu0 0
      %2421 = vmatpush1.bf16.msra.mxu0 0
      %2422 = vmatprep.subr.bf16.mxu0 0
      %2423 = vmatpush1.bf16.msra.mxu0 0
      %2424 = vmatprep.mubr.bf16.mxu0 0
      %2425 = vmatmul.mubr.bf16.gmra.mrb[0].mxu0 %v1558
      %v2426 = vpop.f32.mrb[0].mxu0
      %v2427 = vadd.f32 0.0, %v2426
      %v2428 = vpop.f32.mrb[0].mxu0
      %v2429 = vpop.f32.mrb[0].mxu0
      %v2430 = vadd.f32 0.0, %v2429
      %v2431 = vpop.f32.mrb[0].mxu0
      %2432 = vmatprep.mubr.bf16.mxu0 0
      %2433 = vmatmul.mubr.bf16.gmra.mrb[0].mxu0 %v1559
      %v2434 = vpop.f32.mrb[0].mxu0
      %v2435 = vadd.f32 0.0, %v2434
      %v2436 = vpop.f32.mrb[0].mxu0
      %v2437 = vpop.f32.mrb[0].mxu0
      %v2438 = vadd.f32 0.0, %v2437
      %v2439 = vpop.f32.mrb[0].mxu0
      %2440 = vmatprep.mubr.bf16.mxu0 0
      %2441 = vmatmul.mubr.bf16.gmra.mrb[0].mxu0 %v1560
      %v2442 = vpop.f32.mrb[0].mxu0
      %v2443 = vadd.f32 0.0, %v2442
      %v2444 = vpop.f32.mrb[0].mxu0
      %v2445 = vpop.f32.mrb[0].mxu0
      %v2446 = vadd.f32 0.0, %v2445
      %v2447 = vpop.f32.mrb[0].mxu0
      %2448 = vmatprep.mubr.bf16.mxu0 0
      %2449 = vmatmul.mubr.bf16.gmra.mrb[0].mxu0 %v1561
      %v2450 = vpop.f32.mrb[0].mxu0
      %v2451 = vadd.f32 0.0, %v2450
      %v2452 = vpop.f32.mrb[0].mxu0
      %v2453 = vpop.f32.mrb[0].mxu0
      %v2454 = vadd.f32 0.0, %v2453
      %v2455 = vpop.f32.mrb[0].mxu0
      %2456 = vmatprep.mubr.bf16.mxu0 0
      %2457 = vmatmul.mubr.bf16.gmra.mrb[0].mxu0 %v1562
      %v2458 = vpop.f32.mrb[0].mxu0
      %v2459 = vadd.f32 0.0, %v2458
      %v2460 = vpop.f32.mrb[0].mxu0
      %v2461 = vpop.f32.mrb[0].mxu0
      %v2462 = vadd.f32 0.0, %v2461
      %v2463 = vpop.f32.mrb[0].mxu0
      %2464 = vmatprep.mubr.bf16.mxu0 0
      %2465 = vmatmul.mubr.bf16.gmra.mrb[0].mxu0 %v1563
      %v2466 = vpop.f32.mrb[0].mxu0
      %v2467 = vadd.f32 0.0, %v2466
      %v2468 = vpop.f32.mrb[0].mxu0
      %v2469 = vpop.f32.mrb[0].mxu0
      %v2470 = vadd.f32 0.0, %v2469
      %v2471 = vpop.f32.mrb[0].mxu0
      %2472 = vmatprep.mubr.bf16.mxu0 0
      %2473 = vmatmul.mubr.bf16.gmra.mrb[0].mxu0 %v1564
      %v2474 = vpop.f32.mrb[0].mxu0
      %v2475 = vadd.f32 0.0, %v2474
      %v2476 = vpop.f32.mrb[0].mxu0
      %v2477 = vpop.f32.mrb[0].mxu0
      %v2478 = vadd.f32 0.0, %v2477
      %v2479 = vpop.f32.mrb[0].mxu0
      %2480 = vmatprep.mubr.bf16.mxu0 0
      %2481 = vmatmul.mubr.bf16.gmra.mrb[0].mxu0 %v1565
      %v2482 = vpop.f32.mrb[0].mxu0
      %v2483 = vadd.f32 0.0, %v2482
      %v2484 = vpop.f32.mrb[0].mxu0
      %v2485 = vpop.f32.mrb[0].mxu0
      %v2486 = vadd.f32 0.0, %v2485
      %v2487 = vpop.f32.mrb[0].mxu0
      %2488 = vmatprep.mubr.bf16.mxu0 0
      %2489 = vmatmul.mubr.bf16.gmra.mrb[0].mxu0 %v1566
      %v2490 = vpop.f32.mrb[0].mxu0
      %v2491 = vadd.f32 0.0, %v2490
      %v2492 = vpop.f32.mrb[0].mxu0
      %v2493 = vpop.f32.mrb[0].mxu0
      %v2494 = vadd.f32 0.0, %v2493
      %v2495 = vpop.f32.mrb[0].mxu0
      %2496 = vmatprep.mubr.bf16.mxu0 0
      %2497 = vmatmul.mubr.bf16.gmra.mrb[0].mxu0 %v1567
      %v2498 = vpop.f32.mrb[0].mxu0
      %v2499 = vadd.f32 0.0, %v2498
      %v2500 = vpop.f32.mrb[0].mxu0
      %v2501 = vpop.f32.mrb[0].mxu0
      %v2502 = vadd.f32 0.0, %v2501
      %v2503 = vpop.f32.mrb[0].mxu0
      %2504 = vmatprep.mubr.bf16.mxu0 0
      %2505 = vmatmul.mubr.bf16.gmra.mrb[0].mxu0 %v1568
      %v2506 = vpop.f32.mrb[0].mxu0
      %v2507 = vadd.f32 0.0, %v2506
      %v2508 = vpop.f32.mrb[0].mxu0
      %v2509 = vpop.f32.mrb[0].mxu0
      %v2510 = vadd.f32 0.0, %v2509
      %v2511 = vpop.f32.mrb[0].mxu0
      %2512 = vmatprep.mubr.bf16.mxu0 0
      %2513 = vmatmul.mubr.bf16.gmra.mrb[0].mxu0 %v1569
      %v2514 = vpop.f32.mrb[0].mxu0
      %v2515 = vadd.f32 0.0, %v2514
      %v2516 = vpop.f32.mrb[0].mxu0
      %v2517 = vpop.f32.mrb[0].mxu0
      %v2518 = vadd.f32 0.0, %v2517
      %v2519 = vpop.f32.mrb[0].mxu0
      %2520 = vmatprep.mubr.bf16.mxu0 0
      %2521 = vmatmul.mubr.bf16.gmra.mrb[0].mxu0 %v1570
      %v2522 = vpop.f32.mrb[0].mxu0
      %v2523 = vadd.f32 0.0, %v2522
      %v2524 = vpop.f32.mrb[0].mxu0
      %v2525 = vpop.f32.mrb[0].mxu0
      %v2526 = vadd.f32 0.0, %v2525
      %v2527 = vpop.f32.mrb[0].mxu0
      %2528 = vmatprep.mubr.bf16.mxu0 0
      %2529 = vmatmul.mubr.bf16.gmra.mrb[0].mxu0 %v1571
      %v2530 = vpop.f32.mrb[0].mxu0
      %v2531 = vadd.f32 0.0, %v2530
      %v2532 = vpop.f32.mrb[0].mxu0
      %v2533 = vpop.f32.mrb[0].mxu0
      %v2534 = vadd.f32 0.0, %v2533
      %v2535 = vpop.f32.mrb[0].mxu0
      %2536 = vmatprep.mubr.bf16.mxu0 0
      %2537 = vmatmul.mubr.bf16.gmra.mrb[0].mxu0 %v1572
      %v2538 = vpop.f32.mrb[0].mxu0
      %v2539 = vadd.f32 0.0, %v2538
      %v2540 = vpop.f32.mrb[0].mxu0
      %v2541 = vpop.f32.mrb[0].mxu0
      %v2542 = vadd.f32 0.0, %v2541
      %v2543 = vpop.f32.mrb[0].mxu0
      %2544 = vmatprep.mubr.bf16.mxu0 0
      %2545 = vmatmul.mubr.bf16.gmra.mrb[0].mxu0 %v2342
      %v2546 = vpop.f32.mrb[0].mxu0
      %v2547 = vadd.f32 0.0, %v2546
      %v2548 = vpop.f32.mrb[0].mxu0
      %v2549 = vpop.f32.mrb[0].mxu0
      %v2550 = vadd.f32 0.0, %v2549
      %v2551 = vpop.f32.mrb[0].mxu0
      %2552 = vdwg.mxu0
      %v2553 = vadd.f32 %v2197, %v2427
      %v2554 = vadd.f32 %v2200, %v2430
      %v2555 = vadd.f32 %v2205, %v2435
      %v2556 = vadd.f32 %v2208, %v2438
      %v2557 = vadd.f32 %v2213, %v2443
      %v2558 = vadd.f32 %v2216, %v2446
      %v2559 = vadd.f32 %v2221, %v2451
      %v2560 = vadd.f32 %v2224, %v2454
      %v2561 = vadd.f32 %v2229, %v2459
      %v2562 = vadd.f32 %v2232, %v2462
      %v2563 = vadd.f32 %v2237, %v2467
      %v2564 = vadd.f32 %v2240, %v2470
      %v2565 = vadd.f32 %v2245, %v2475
      %v2566 = vadd.f32 %v2248, %v2478
      %v2567 = vadd.f32 %v2253, %v2483
      %v2568 = vadd.f32 %v2256, %v2486
      %v2569 = vadd.f32 %v2261, %v2491
      %v2570 = vadd.f32 %v2264, %v2494
      %v2571 = vadd.f32 %v2269, %v2499
      %v2572 = vadd.f32 %v2272, %v2502
      %v2573 = vadd.f32 %v2277, %v2507
      %v2574 = vadd.f32 %v2280, %v2510
      %v2575 = vadd.f32 %v2285, %v2515
      %v2576 = vadd.f32 %v2288, %v2518
      %v2577 = vadd.f32 %v2293, %v2523
      %v2578 = vadd.f32 %v2296, %v2526
      %v2579 = vadd.f32 %v2301, %v2531
      %v2580 = vadd.f32 %v2304, %v2534
      %v2581 = vadd.f32 %v2309, %v2539
      %v2582 = vadd.f32 %v2312, %v2542
      %v2583 = vadd.f32 %v2317, %v2547
      %v2584 = vadd.f32 %v2320, %v2550
      %v2585 = vld [vmem:[#allocation2] sm:$0xff]
      %v2586 = vld [vmem:[#allocation2 + $0x8] sm:$0xff]
      %v2587 = vld [vmem:[#allocation2 + $0x10] sm:$0xff]
      %v2588 = vld [vmem:[#allocation2 + $0x18] sm:$0xff]
      %v2589 = vld [vmem:[#allocation2 + $0x20] sm:$0xff]
      %v2590 = vld [vmem:[#allocation2 + $0x28] sm:$0xff]
      %v2591 = vld [vmem:[#allocation2 + $0x30] sm:$0xff]
      %v2592 = vld [vmem:[#allocation2 + $0x38] sm:$0xff]
      %v2593 = vld [vmem:[#allocation2 + $0x40] sm:$0xff]
      %v2594 = vld [vmem:[#allocation2 + $0x48] sm:$0xff]
      %v2595 = vld [vmem:[#allocation2 + $0x50] sm:$0xff]
      %v2596 = vld [vmem:[#allocation2 + $0x58] sm:$0xff]
      %v2597 = vld [vmem:[#allocation2 + $0x60] sm:$0xff]
      %v2598 = vld [vmem:[#allocation2 + $0x68] sm:$0xff]
      %v2599 = vld [vmem:[#allocation2 + $0x70] sm:$0xff]
      %v2600 = vld [vmem:[#allocation2 + $0x78] sm:$0xff]
      %v2601 = vld [vmem:[#allocation2 + $0x80] sm:$0xff]
      %v2602 = vld [vmem:[#allocation2 + $0x88] sm:$0xff]
      %v2603 = vld [vmem:[#allocation2 + $0x90] sm:$0xff]
      %v2604 = vld [vmem:[#allocation2 + $0x98] sm:$0xff]
      %v2605 = vld [vmem:[#allocation2 + $0xa0] sm:$0xff]
      %v2606 = vld [vmem:[#allocation2 + $0xa8] sm:$0xff]
      %v2607 = vld [vmem:[#allocation2 + $0xb0] sm:$0xff]
      %v2608 = vld [vmem:[#allocation2 + $0xb8] sm:$0xff]
      %v2609 = vld [vmem:[#allocation2 + $0xc0] sm:$0xff]
      %v2610 = vld [vmem:[#allocation2 + $0xc8] sm:$0xff]
      %v2611 = vld [vmem:[#allocation2 + $0xd0] sm:$0xff]
      %v2612 = vld [vmem:[#allocation2 + $0xd8] sm:$0xff]
      %v2613 = vld [vmem:[#allocation2 + $0xe0] sm:$0xff]
      %v2614 = vld [vmem:[#allocation2 + $0xe8] sm:$0xff]
      %v2615 = vld [vmem:[#allocation2 + $0xf0] sm:$0xff]
      %v2616 = vld [vmem:[#allocation2 + $0xf8] sm:$0xff]
      %v2617 = vadd.f32 %v2585, %v2553
      %v2618 = vadd.f32 %v2586, %v2554
      %v2619 = vadd.f32 %v2587, %v2555
      %v2620 = vadd.f32 %v2588, %v2556
      %v2621 = vadd.f32 %v2589, %v2557
      %v2622 = vadd.f32 %v2590, %v2558
      %v2623 = vadd.f32 %v2591, %v2559
      %v2624 = vadd.f32 %v2592, %v2560
      %v2625 = vadd.f32 %v2593, %v2561
      %v2626 = vadd.f32 %v2594, %v2562
      %v2627 = vadd.f32 %v2595, %v2563
      %v2628 = vadd.f32 %v2596, %v2564
      %v2629 = vadd.f32 %v2597, %v2565
      %v2630 = vadd.f32 %v2598, %v2566
      %v2631 = vadd.f32 %v2599, %v2567
      %v2632 = vadd.f32 %v2600, %v2568
      %v2633 = vadd.f32 %v2601, %v2569
      %v2634 = vadd.f32 %v2602, %v2570
      %v2635 = vadd.f32 %v2603, %v2571
      %v2636 = vadd.f32 %v2604, %v2572
      %v2637 = vadd.f32 %v2605, %v2573
      %v2638 = vadd.f32 %v2606, %v2574
      %v2639 = vadd.f32 %v2607, %v2575
      %v2640 = vadd.f32 %v2608, %v2576
      %v2641 = vadd.f32 %v2609, %v2577
      %v2642 = vadd.f32 %v2610, %v2578
      %v2643 = vadd.f32 %v2611, %v2579
      %v2644 = vadd.f32 %v2612, %v2580
      %v2645 = vadd.f32 %v2613, %v2581
      %v2646 = vadd.f32 %v2614, %v2582
      %v2647 = vadd.f32 %v2615, %v2583
      %v2648 = vadd.f32 %v2616, %v2584
      %2649 = vst [vmem:[#allocation2] sm:$0xff] %v2617
      %2650 = vst [vmem:[#allocation2 + $0x8] sm:$0xff] %v2618
      %2651 = vst [vmem:[#allocation2 + $0x10] sm:$0xff] %v2619
      %2652 = vst [vmem:[#allocation2 + $0x18] sm:$0xff] %v2620
      %2653 = vst [vmem:[#allocation2 + $0x20] sm:$0xff] %v2621
      %2654 = vst [vmem:[#allocation2 + $0x28] sm:$0xff] %v2622
      %2655 = vst [vmem:[#allocation2 + $0x30] sm:$0xff] %v2623
      %2656 = vst [vmem:[#allocation2 + $0x38] sm:$0xff] %v2624
      %2657 = vst [vmem:[#allocation2 + $0x40] sm:$0xff] %v2625
      %2658 = vst [vmem:[#allocation2 + $0x48] sm:$0xff] %v2626
      %2659 = vst [vmem:[#allocation2 + $0x50] sm:$0xff] %v2627
      %2660 = vst [vmem:[#allocation2 + $0x58] sm:$0xff] %v2628
      %2661 = vst [vmem:[#allocation2 + $0x60] sm:$0xff] %v2629
      %2662 = vst [vmem:[#allocation2 + $0x68] sm:$0xff] %v2630
      %2663 = vst [vmem:[#allocation2 + $0x70] sm:$0xff] %v2631
      %2664 = vst [vmem:[#allocation2 + $0x78] sm:$0xff] %v2632
      %2665 = vst [vmem:[#allocation2 + $0x80] sm:$0xff] %v2633
      %2666 = vst [vmem:[#allocation2 + $0x88] sm:$0xff] %v2634
      %2667 = vst [vmem:[#allocation2 + $0x90] sm:$0xff] %v2635
      %2668 = vst [vmem:[#allocation2 + $0x98] sm:$0xff] %v2636
      %2669 = vst [vmem:[#allocation2 + $0xa0] sm:$0xff] %v2637
      %2670 = vst [vmem:[#allocation2 + $0xa8] sm:$0xff] %v2638
      %2671 = vst [vmem:[#allocation2 + $0xb0] sm:$0xff] %v2639
      %2672 = vst [vmem:[#allocation2 + $0xb8] sm:$0xff] %v2640
      %2673 = vst [vmem:[#allocation2 + $0xc0] sm:$0xff] %v2641
      %2674 = vst [vmem:[#allocation2 + $0xc8] sm:$0xff] %v2642
      %2675 = vst [vmem:[#allocation2 + $0xd0] sm:$0xff] %v2643
      %2676 = vst [vmem:[#allocation2 + $0xd8] sm:$0xff] %v2644
      %2677 = vst [vmem:[#allocation2 + $0xe0] sm:$0xff] %v2645
      %2678 = vst [vmem:[#allocation2 + $0xe8] sm:$0xff] %v2646
      %2679 = vst [vmem:[#allocation2 + $0xf0] sm:$0xff] %v2647
      %2680 = vst [vmem:[#allocation2 + $0xf8] sm:$0xff] %v2648
      %s2681 = scalar_lea.vmem %s210, 384
      %v2682 = vld [vmem:[%s2681] sm:$0xf]
      %v2683 = vld [vmem:[%s2681 + $0x4] sm:$0xf]
      %v2684 = vld [vmem:[%s2681 + $0x8] sm:$0xf]
      %v2685 = vld [vmem:[%s2681 + $0xc] sm:$0xf]
      %v2686 = vld [vmem:[%s2681 + $0x10] sm:$0xf]
      %v2687 = vld [vmem:[%s2681 + $0x14] sm:$0xf]
      %v2688 = vld [vmem:[%s2681 + $0x18] sm:$0xf]
      %v2689 = vld [vmem:[%s2681 + $0x1c] sm:$0xf]
      %v2690 = vld [vmem:[%s2681 + $0x20] sm:$0xf]
      %v2691 = vld [vmem:[%s2681 + $0x24] sm:$0xf]
      %v2692 = vld [vmem:[%s2681 + $0x28] sm:$0xf]
      %v2693 = vld [vmem:[%s2681 + $0x2c] sm:$0xf]
      %v2694 = vld [vmem:[%s2681 + $0x30] sm:$0xf]
      %v2695 = vld [vmem:[%s2681 + $0x34] sm:$0xf]
      %v2696 = vld [vmem:[%s2681 + $0x38] sm:$0xf]
      %v2697 = vld [vmem:[%s2681 + $0x3c] sm:$0xf]
      %s2698 = scalar_lea.vmem %s210, 448
      %v2699 = vld [vmem:[%s2698] sm:$0xf]
      %v2700 = vld [vmem:[%s2698 + $0x4] sm:$0xf]
      %v2701 = vld [vmem:[%s2698 + $0x8] sm:$0xf]
      %v2702 = vld [vmem:[%s2698 + $0xc] sm:$0xf]
      %v2703 = vld [vmem:[%s2698 + $0x10] sm:$0xf]
      %v2704 = vld [vmem:[%s2698 + $0x14] sm:$0xf]
      %v2705 = vld [vmem:[%s2698 + $0x18] sm:$0xf]
      %v2706 = vld [vmem:[%s2698 + $0x1c] sm:$0xf]
      %v2707 = vld [vmem:[%s2698 + $0x20] sm:$0xf]
      %v2708 = vld [vmem:[%s2698 + $0x24] sm:$0xf]
      %v2709 = vld [vmem:[%s2698 + $0x28] sm:$0xf]
      %v2710 = vld [vmem:[%s2698 + $0x2c] sm:$0xf]
      %v2711 = vld [vmem:[%s2698 + $0x30] sm:$0xf]
      %v2712 = vld [vmem:[%s2698 + $0x34] sm:$0xf]
      %v2713 = vld [vmem:[%s2698 + $0x38] sm:$0xf]
      %v2714 = vld [vmem:[%s2698 + $0x3c] sm:$0xf]
      %v2715 = vunpack.c.l.b16 %v717
      %v2716 = vunpack.c.l.b16 %v727
      %v2717 = vpack.c.b16 %v2716, %v2715
      %v2735 = vunpack.c.l.b16 %v2699
      %v2736 = vunpack.c.l.b16 %v2700
      %v2737 = vunpack.c.l.b16 %v2701
      %v2738 = vunpack.c.l.b16 %v2702
      %v2739 = vunpack.c.l.b16 %v2703
      %v2740 = vunpack.c.l.b16 %v2704
      %v2741 = vunpack.c.l.b16 %v2705
      %v2742 = vunpack.c.l.b16 %v2706
      %v2743 = vunpack.c.l.b16 %v2707
      %v2744 = vunpack.c.l.b16 %v2708
      %v2745 = vunpack.c.l.b16 %v2709
      %v2746 = vunpack.c.l.b16 %v2710
      %v2747 = vunpack.c.l.b16 %v2711
      %v2748 = vunpack.c.l.b16 %v2712
      %v2749 = vunpack.c.l.b16 %v2713
      %v2750 = vunpack.c.l.b16 %v2714
      %v2751 = vpack.c.b16 %v2736, %v2735
      %v2752 = vpack.c.b16 %v2738, %v2737
      %v2753 = vpack.c.b16 %v2740, %v2739
      %v2754 = vpack.c.b16 %v2742, %v2741
      %v2755 = vpack.c.b16 %v2744, %v2743
      %v2756 = vpack.c.b16 %v2746, %v2745
      %v2757 = vpack.c.b16 %v2748, %v2747
      %v2758 = vpack.c.b16 %v2750, %v2749
      %2767 = vmatprep.subr.bf16.mxu0 0
      %2768 = vmatpush1.bf16.msra.mxu0 %v2751
      %2769 = vmatprep.subr.bf16.mxu0 0
      %2770 = vmatpush1.bf16.msra.mxu0 %v2752
      %2771 = vmatprep.subr.bf16.mxu0 0
      %2772 = vmatpush1.bf16.msra.mxu0 %v2753
      %2773 = vmatprep.subr.bf16.mxu0 0
      %2774 = vmatpush1.bf16.msra.mxu0 %v2754
      %2775 = vmatprep.subr.bf16.mxu0 0
      %2776 = vmatpush1.bf16.msra.mxu0 %v2755
      %2777 = vmatprep.subr.bf16.mxu0 0
      %2778 = vmatpush1.bf16.msra.mxu0 %v2756
      %2779 = vmatprep.subr.bf16.mxu0 0
      %2780 = vmatpush1.bf16.msra.mxu0 %v2757
      %2781 = vmatprep.subr.bf16.mxu0 0
      %2782 = vmatpush1.bf16.msra.mxu0 %v2758
      %2783 = vmatprep.subr.bf16.mxu0 0
      %2784 = vmatpush1.bf16.msra.mxu0 0
      %2785 = vmatprep.subr.bf16.mxu0 0
      %2786 = vmatpush1.bf16.msra.mxu0 0
      %2787 = vmatprep.subr.bf16.mxu0 0
      %2788 = vmatpush1.bf16.msra.mxu0 0
      %2789 = vmatprep.subr.bf16.mxu0 0
      %2790 = vmatpush1.bf16.msra.mxu0 0
      %2791 = vmatprep.subr.bf16.mxu0 0
      %2792 = vmatpush1.bf16.msra.mxu0 0
      %2793 = vmatprep.subr.bf16.mxu0 0
      %2794 = vmatpush1.bf16.msra.mxu0 0
      %2795 = vmatprep.subr.bf16.mxu0 0
      %2796 = vmatpush1.bf16.msra.mxu0 0
      %2797 = vmatprep.subr.bf16.mxu0 0
      %2798 = vmatpush1.bf16.msra.mxu0 0
      %2799 = vmatprep.mubr.bf16.mxu0 0
      %2800 = vmatmul.mubr.bf16.gmra.mrb[0].mxu0 %v779
      %v2801 = vpop.f32.mrb[0].mxu0
      %v2802 = vadd.f32 0.0, %v2801
      %v2803 = vpop.f32.mrb[0].mxu0
      %v2804 = vpop.f32.mrb[0].mxu0
      %v2805 = vadd.f32 0.0, %v2804
      %v2806 = vpop.f32.mrb[0].mxu0
      %2807 = vmatprep.mubr.bf16.mxu0 0
      %2808 = vmatmul.mubr.bf16.gmra.mrb[0].mxu0 %v780
      %v2809 = vpop.f32.mrb[0].mxu0
      %v2810 = vadd.f32 0.0, %v2809
      %v2811 = vpop.f32.mrb[0].mxu0
      %v2812 = vpop.f32.mrb[0].mxu0
      %v2813 = vadd.f32 0.0, %v2812
      %v2814 = vpop.f32.mrb[0].mxu0
      %2815 = vmatprep.mubr.bf16.mxu0 0
      %2816 = vmatmul.mubr.bf16.gmra.mrb[0].mxu0 %v781
      %v2817 = vpop.f32.mrb[0].mxu0
      %v2818 = vadd.f32 0.0, %v2817
      %v2819 = vpop.f32.mrb[0].mxu0
      %v2820 = vpop.f32.mrb[0].mxu0
      %v2821 = vadd.f32 0.0, %v2820
      %v2822 = vpop.f32.mrb[0].mxu0
      %2823 = vmatprep.mubr.bf16.mxu0 0
      %2824 = vmatmul.mubr.bf16.gmra.mrb[0].mxu0 %v782
      %v2825 = vpop.f32.mrb[0].mxu0
      %v2826 = vadd.f32 0.0, %v2825
      %v2827 = vpop.f32.mrb[0].mxu0
      %v2828 = vpop.f32.mrb[0].mxu0
      %v2829 = vadd.f32 0.0, %v2828
      %v2830 = vpop.f32.mrb[0].mxu0
      %2831 = vmatprep.mubr.bf16.mxu0 0
      %2832 = vmatmul.mubr.bf16.gmra.mrb[0].mxu0 %v783
      %v2833 = vpop.f32.mrb[0].mxu0
      %v2834 = vadd.f32 0.0, %v2833
      %v2835 = vpop.f32.mrb[0].mxu0
      %v2836 = vpop.f32.mrb[0].mxu0
      %v2837 = vadd.f32 0.0, %v2836
      %v2838 = vpop.f32.mrb[0].mxu0
      %2839 = vmatprep.mubr.bf16.mxu0 0
      %2840 = vmatmul.mubr.bf16.gmra.mrb[0].mxu0 %v784
      %v2841 = vpop.f32.mrb[0].mxu0
      %v2842 = vadd.f32 0.0, %v2841
      %v2843 = vpop.f32.mrb[0].mxu0
      %v2844 = vpop.f32.mrb[0].mxu0
      %v2845 = vadd.f32 0.0, %v2844
      %v2846 = vpop.f32.mrb[0].mxu0
      %2847 = vmatprep.mubr.bf16.mxu0 0
      %2848 = vmatmul.mubr.bf16.gmra.mrb[0].mxu0 %v785
      %v2849 = vpop.f32.mrb[0].mxu0
      %v2850 = vadd.f32 0.0, %v2849
      %v2851 = vpop.f32.mrb[0].mxu0
      %v2852 = vpop.f32.mrb[0].mxu0
      %v2853 = vadd.f32 0.0, %v2852
      %v2854 = vpop.f32.mrb[0].mxu0
      %2855 = vmatprep.mubr.bf16.mxu0 0
      %2856 = vmatmul.mubr.bf16.gmra.mrb[0].mxu0 %v786
      %v2857 = vpop.f32.mrb[0].mxu0
      %v2858 = vadd.f32 0.0, %v2857
      %v2859 = vpop.f32.mrb[0].mxu0
      %v2860 = vpop.f32.mrb[0].mxu0
      %v2861 = vadd.f32 0.0, %v2860
      %v2862 = vpop.f32.mrb[0].mxu0
      %2863 = vmatprep.mubr.bf16.mxu0 0
      %2864 = vmatmul.mubr.bf16.gmra.mrb[0].mxu0 %v787
      %v2865 = vpop.f32.mrb[0].mxu0
      %v2866 = vadd.f32 0.0, %v2865
      %v2867 = vpop.f32.mrb[0].mxu0
      %v2868 = vpop.f32.mrb[0].mxu0
      %v2869 = vadd.f32 0.0, %v2868
      %v2870 = vpop.f32.mrb[0].mxu0
      %2871 = vmatprep.mubr.bf16.mxu0 0
      %2872 = vmatmul.mubr.bf16.gmra.mrb[0].mxu0 %v788
      %v2873 = vpop.f32.mrb[0].mxu0
      %v2874 = vadd.f32 0.0, %v2873
      %v2875 = vpop.f32.mrb[0].mxu0
      %v2876 = vpop.f32.mrb[0].mxu0
      %v2877 = vadd.f32 0.0, %v2876
      %v2878 = vpop.f32.mrb[0].mxu0
      %2879 = vmatprep.mubr.bf16.mxu0 0
      %2880 = vmatmul.mubr.bf16.gmra.mrb[0].mxu0 %v789
      %v2881 = vpop.f32.mrb[0].mxu0
      %v2882 = vadd.f32 0.0, %v2881
      %v2883 = vpop.f32.mrb[0].mxu0
      %v2884 = vpop.f32.mrb[0].mxu0
      %v2885 = vadd.f32 0.0, %v2884
      %v2886 = vpop.f32.mrb[0].mxu0
      %2887 = vmatprep.mubr.bf16.mxu0 0
      %2888 = vmatmul.mubr.bf16.gmra.mrb[0].mxu0 %v790
      %v2889 = vpop.f32.mrb[0].mxu0
      %v2890 = vadd.f32 0.0, %v2889
      %v2891 = vpop.f32.mrb[0].mxu0
      %v2892 = vpop.f32.mrb[0].mxu0
      %v2893 = vadd.f32 0.0, %v2892
      %v2894 = vpop.f32.mrb[0].mxu0
      %2895 = vmatprep.mubr.bf16.mxu0 0
      %2896 = vmatmul.mubr.bf16.gmra.mrb[0].mxu0 %v791
      %v2897 = vpop.f32.mrb[0].mxu0
      %v2898 = vadd.f32 0.0, %v2897
      %v2899 = vpop.f32.mrb[0].mxu0
      %v2900 = vpop.f32.mrb[0].mxu0
      %v2901 = vadd.f32 0.0, %v2900
      %v2902 = vpop.f32.mrb[0].mxu0
      %2903 = vmatprep.mubr.bf16.mxu0 0
      %2904 = vmatmul.mubr.bf16.gmra.mrb[0].mxu0 %v792
      %v2905 = vpop.f32.mrb[0].mxu0
      %v2906 = vadd.f32 0.0, %v2905
      %v2907 = vpop.f32.mrb[0].mxu0
      %v2908 = vpop.f32.mrb[0].mxu0
      %v2909 = vadd.f32 0.0, %v2908
      %v2910 = vpop.f32.mrb[0].mxu0
      %2911 = vmatprep.mubr.bf16.mxu0 0
      %2912 = vmatmul.mubr.bf16.gmra.mrb[0].mxu0 %v1898
      %v2913 = vpop.f32.mrb[0].mxu0
      %v2914 = vadd.f32 0.0, %v2913
      %v2915 = vpop.f32.mrb[0].mxu0
      %v2916 = vpop.f32.mrb[0].mxu0
      %v2917 = vadd.f32 0.0, %v2916
      %v2918 = vpop.f32.mrb[0].mxu0
      %2919 = vmatprep.mubr.bf16.mxu0 0
      %2920 = vmatmul.mubr.bf16.gmra.mrb[0].mxu0 %v2717
      %v2921 = vpop.f32.mrb[0].mxu0
      %v2922 = vadd.f32 0.0, %v2921
      %v2923 = vpop.f32.mrb[0].mxu0
      %v2924 = vpop.f32.mrb[0].mxu0
      %v2925 = vadd.f32 0.0, %v2924
      %v2926 = vpop.f32.mrb[0].mxu0
      %2927 = vdwg.mxu0
      %v2929 = vunpack.c.l.b16 %v257
      %v2930 = vunpack.c.l.b16 %v258
      %v2931 = vpack.c.b16 %v2930, %v2929
      %v2949 = vunpack.c.l.b16 %v2682
      %v2950 = vunpack.c.l.b16 %v2683
      %v2951 = vunpack.c.l.b16 %v2684
      %v2952 = vunpack.c.l.b16 %v2685
      %v2953 = vunpack.c.l.b16 %v2686
      %v2954 = vunpack.c.l.b16 %v2687
      %v2955 = vunpack.c.l.b16 %v2688
      %v2956 = vunpack.c.l.b16 %v2689
      %v2957 = vunpack.c.l.b16 %v2690
      %v2958 = vunpack.c.l.b16 %v2691
      %v2959 = vunpack.c.l.b16 %v2692
      %v2960 = vunpack.c.l.b16 %v2693
      %v2961 = vunpack.c.l.b16 %v2694
      %v2962 = vunpack.c.l.b16 %v2695
      %v2963 = vunpack.c.l.b16 %v2696
      %v2964 = vunpack.c.l.b16 %v2697
      %v2965 = vpack.c.b16 %v2950, %v2949
      %v2966 = vpack.c.b16 %v2952, %v2951
      %v2967 = vpack.c.b16 %v2954, %v2953
      %v2968 = vpack.c.b16 %v2956, %v2955
      %v2969 = vpack.c.b16 %v2958, %v2957
      %v2970 = vpack.c.b16 %v2960, %v2959
      %v2971 = vpack.c.b16 %v2962, %v2961
      %v2972 = vpack.c.b16 %v2964, %v2963
      %2981 = vmatprep.subr.bf16.mxu0 0
      %2982 = vmatpush1.bf16.msra.mxu0 %v2965
      %2983 = vmatprep.subr.bf16.mxu0 0
      %2984 = vmatpush1.bf16.msra.mxu0 %v2966
      %2985 = vmatprep.subr.bf16.mxu0 0
      %2986 = vmatpush1.bf16.msra.mxu0 %v2967
      %2987 = vmatprep.subr.bf16.mxu0 0
      %2988 = vmatpush1.bf16.msra.mxu0 %v2968
      %2989 = vmatprep.subr.bf16.mxu0 0
      %2990 = vmatpush1.bf16.msra.mxu0 %v2969
      %2991 = vmatprep.subr.bf16.mxu0 0
      %2992 = vmatpush1.bf16.msra.mxu0 %v2970
      %2993 = vmatprep.subr.bf16.mxu0 0
      %2994 = vmatpush1.bf16.msra.mxu0 %v2971
      %2995 = vmatprep.subr.bf16.mxu0 0
      %2996 = vmatpush1.bf16.msra.mxu0 %v2972
      %2997 = vmatprep.subr.bf16.mxu0 0
      %2998 = vmatpush1.bf16.msra.mxu0 0
      %2999 = vmatprep.subr.bf16.mxu0 0
      %3000 = vmatpush1.bf16.msra.mxu0 0
      %3001 = vmatprep.subr.bf16.mxu0 0
      %3002 = vmatpush1.bf16.msra.mxu0 0
      %3003 = vmatprep.subr.bf16.mxu0 0
      %3004 = vmatpush1.bf16.msra.mxu0 0
      %3005 = vmatprep.subr.bf16.mxu0 0
      %3006 = vmatpush1.bf16.msra.mxu0 0
      %3007 = vmatprep.subr.bf16.mxu0 0
      %3008 = vmatpush1.bf16.msra.mxu0 0
      %3009 = vmatprep.subr.bf16.mxu0 0
      %3010 = vmatpush1.bf16.msra.mxu0 0
      %3011 = vmatprep.subr.bf16.mxu0 0
      %3012 = vmatpush1.bf16.msra.mxu0 0
      %3013 = vmatprep.mubr.bf16.mxu0 0
      %3014 = vmatmul.mubr.bf16.gmra.mrb[0].mxu0 %v1084
      %v3015 = vpop.f32.mrb[0].mxu0
      %v3016 = vadd.f32 %v2802, %v3015
      %v3017 = vpop.f32.mrb[0].mxu0
      %v3018 = vpop.f32.mrb[0].mxu0
      %v3019 = vadd.f32 %v2805, %v3018
      %v3020 = vpop.f32.mrb[0].mxu0
      %3021 = vmatprep.mubr.bf16.mxu0 0
      %3022 = vmatmul.mubr.bf16.gmra.mrb[0].mxu0 %v1085
      %v3023 = vpop.f32.mrb[0].mxu0
      %v3024 = vadd.f32 %v2810, %v3023
      %v3025 = vpop.f32.mrb[0].mxu0
      %v3026 = vpop.f32.mrb[0].mxu0
      %v3027 = vadd.f32 %v2813, %v3026
      %v3028 = vpop.f32.mrb[0].mxu0
      %3029 = vmatprep.mubr.bf16.mxu0 0
      %3030 = vmatmul.mubr.bf16.gmra.mrb[0].mxu0 %v1086
      %v3031 = vpop.f32.mrb[0].mxu0
      %v3032 = vadd.f32 %v2818, %v3031
      %v3033 = vpop.f32.mrb[0].mxu0
      %v3034 = vpop.f32.mrb[0].mxu0
      %v3035 = vadd.f32 %v2821, %v3034
      %v3036 = vpop.f32.mrb[0].mxu0
      %3037 = vmatprep.mubr.bf16.mxu0 0
      %3038 = vmatmul.mubr.bf16.gmra.mrb[0].mxu0 %v1087
      %v3039 = vpop.f32.mrb[0].mxu0
      %v3040 = vadd.f32 %v2826, %v3039
      %v3041 = vpop.f32.mrb[0].mxu0
      %v3042 = vpop.f32.mrb[0].mxu0
      %v3043 = vadd.f32 %v2829, %v3042
      %v3044 = vpop.f32.mrb[0].mxu0
      %3045 = vmatprep.mubr.bf16.mxu0 0
      %3046 = vmatmul.mubr.bf16.gmra.mrb[0].mxu0 %v1088
      %v3047 = vpop.f32.mrb[0].mxu0
      %v3048 = vadd.f32 %v2834, %v3047
      %v3049 = vpop.f32.mrb[0].mxu0
      %v3050 = vpop.f32.mrb[0].mxu0
      %v3051 = vadd.f32 %v2837, %v3050
      %v3052 = vpop.f32.mrb[0].mxu0
      %3053 = vmatprep.mubr.bf16.mxu0 0
      %3054 = vmatmul.mubr.bf16.gmra.mrb[0].mxu0 %v1089
      %v3055 = vpop.f32.mrb[0].mxu0
      %v3056 = vadd.f32 %v2842, %v3055
      %v3057 = vpop.f32.mrb[0].mxu0
      %v3058 = vpop.f32.mrb[0].mxu0
      %v3059 = vadd.f32 %v2845, %v3058
      %v3060 = vpop.f32.mrb[0].mxu0
      %3061 = vmatprep.mubr.bf16.mxu0 0
      %3062 = vmatmul.mubr.bf16.gmra.mrb[0].mxu0 %v1090
      %v3063 = vpop.f32.mrb[0].mxu0
      %v3064 = vadd.f32 %v2850, %v3063
      %v3065 = vpop.f32.mrb[0].mxu0
      %v3066 = vpop.f32.mrb[0].mxu0
      %v3067 = vadd.f32 %v2853, %v3066
      %v3068 = vpop.f32.mrb[0].mxu0
      %3069 = vmatprep.mubr.bf16.mxu0 0
      %3070 = vmatmul.mubr.bf16.gmra.mrb[0].mxu0 %v1091
      %v3071 = vpop.f32.mrb[0].mxu0
      %v3072 = vadd.f32 %v2858, %v3071
      %v3073 = vpop.f32.mrb[0].mxu0
      %v3074 = vpop.f32.mrb[0].mxu0
      %v3075 = vadd.f32 %v2861, %v3074
      %v3076 = vpop.f32.mrb[0].mxu0
      %3077 = vmatprep.mubr.bf16.mxu0 0
      %3078 = vmatmul.mubr.bf16.gmra.mrb[0].mxu0 %v1092
      %v3079 = vpop.f32.mrb[0].mxu0
      %v3080 = vadd.f32 %v2866, %v3079
      %v3081 = vpop.f32.mrb[0].mxu0
      %v3082 = vpop.f32.mrb[0].mxu0
      %v3083 = vadd.f32 %v2869, %v3082
      %v3084 = vpop.f32.mrb[0].mxu0
      %3085 = vmatprep.mubr.bf16.mxu0 0
      %3086 = vmatmul.mubr.bf16.gmra.mrb[0].mxu0 %v1093
      %v3087 = vpop.f32.mrb[0].mxu0
      %v3088 = vadd.f32 %v2874, %v3087
      %v3089 = vpop.f32.mrb[0].mxu0
      %v3090 = vpop.f32.mrb[0].mxu0
      %v3091 = vadd.f32 %v2877, %v3090
      %v3092 = vpop.f32.mrb[0].mxu0
      %3093 = vmatprep.mubr.bf16.mxu0 0
      %3094 = vmatmul.mubr.bf16.gmra.mrb[0].mxu0 %v1094
      %v3095 = vpop.f32.mrb[0].mxu0
      %v3096 = vadd.f32 %v2882, %v3095
      %v3097 = vpop.f32.mrb[0].mxu0
      %v3098 = vpop.f32.mrb[0].mxu0
      %v3099 = vadd.f32 %v2885, %v3098
      %v3100 = vpop.f32.mrb[0].mxu0
      %3101 = vmatprep.mubr.bf16.mxu0 0
      %3102 = vmatmul.mubr.bf16.gmra.mrb[0].mxu0 %v1095
      %v3103 = vpop.f32.mrb[0].mxu0
      %v3104 = vadd.f32 %v2890, %v3103
      %v3105 = vpop.f32.mrb[0].mxu0
      %v3106 = vpop.f32.mrb[0].mxu0
      %v3107 = vadd.f32 %v2893, %v3106
      %v3108 = vpop.f32.mrb[0].mxu0
      %3109 = vmatprep.mubr.bf16.mxu0 0
      %3110 = vmatmul.mubr.bf16.gmra.mrb[0].mxu0 %v1096
      %v3111 = vpop.f32.mrb[0].mxu0
      %v3112 = vadd.f32 %v2898, %v3111
      %v3113 = vpop.f32.mrb[0].mxu0
      %v3114 = vpop.f32.mrb[0].mxu0
      %v3115 = vadd.f32 %v2901, %v3114
      %v3116 = vpop.f32.mrb[0].mxu0
      %3117 = vmatprep.mubr.bf16.mxu0 0
      %3118 = vmatmul.mubr.bf16.gmra.mrb[0].mxu0 %v1097
      %v3119 = vpop.f32.mrb[0].mxu0
      %v3120 = vadd.f32 %v2906, %v3119
      %v3121 = vpop.f32.mrb[0].mxu0
      %v3122 = vpop.f32.mrb[0].mxu0
      %v3123 = vadd.f32 %v2909, %v3122
      %v3124 = vpop.f32.mrb[0].mxu0
      %3125 = vmatprep.mubr.bf16.mxu0 0
      %3126 = vmatmul.mubr.bf16.gmra.mrb[0].mxu0 %v2112
      %v3127 = vpop.f32.mrb[0].mxu0
      %v3128 = vadd.f32 %v2914, %v3127
      %v3129 = vpop.f32.mrb[0].mxu0
      %v3130 = vpop.f32.mrb[0].mxu0
      %v3131 = vadd.f32 %v2917, %v3130
      %v3132 = vpop.f32.mrb[0].mxu0
      %3133 = vmatprep.mubr.bf16.mxu0 0
      %3134 = vmatmul.mubr.bf16.gmra.mrb[0].mxu0 %v2931
      %v3135 = vpop.f32.mrb[0].mxu0
      %v3136 = vadd.f32 %v2922, %v3135
      %v3137 = vpop.f32.mrb[0].mxu0
      %v3138 = vpop.f32.mrb[0].mxu0
      %v3139 = vadd.f32 %v2925, %v3138
      %v3140 = vpop.f32.mrb[0].mxu0
      %3141 = vdwg.mxu0
      %s3142 = scalar_lea.vmem %s210, 512
      %v3143 = vld [vmem:[%s3142] sm:$0xf]
      %v3144 = vld [vmem:[%s3142 + $0x4] sm:$0xf]
      %v3145 = vld [vmem:[%s3142 + $0x8] sm:$0xf]
      %v3146 = vld [vmem:[%s3142 + $0xc] sm:$0xf]
      %v3147 = vld [vmem:[%s3142 + $0x10] sm:$0xf]
      %v3148 = vld [vmem:[%s3142 + $0x14] sm:$0xf]
      %v3149 = vld [vmem:[%s3142 + $0x18] sm:$0xf]
      %v3150 = vld [vmem:[%s3142 + $0x1c] sm:$0xf]
      %v3151 = vld [vmem:[%s3142 + $0x20] sm:$0xf]
      %v3152 = vld [vmem:[%s3142 + $0x24] sm:$0xf]
      %v3153 = vld [vmem:[%s3142 + $0x28] sm:$0xf]
      %v3154 = vld [vmem:[%s3142 + $0x2c] sm:$0xf]
      %v3155 = vld [vmem:[%s3142 + $0x30] sm:$0xf]
      %v3156 = vld [vmem:[%s3142 + $0x34] sm:$0xf]
      %v3157 = vld [vmem:[%s3142 + $0x38] sm:$0xf]
      %v3158 = vld [vmem:[%s3142 + $0x3c] sm:$0xf]
      %v3159 = vunpack.c.l.b16 %v1504
      %v3160 = vunpack.c.l.b16 %v1507
      %v3161 = vpack.c.b16 %v3160, %v3159
      %v3179 = vunpack.c.l.b16 %v3143
      %v3180 = vunpack.c.l.b16 %v3144
      %v3181 = vunpack.c.l.b16 %v3145
      %v3182 = vunpack.c.l.b16 %v3146
      %v3183 = vunpack.c.l.b16 %v3147
      %v3184 = vunpack.c.l.b16 %v3148
      %v3185 = vunpack.c.l.b16 %v3149
      %v3186 = vunpack.c.l.b16 %v3150
      %v3187 = vunpack.c.l.b16 %v3151
      %v3188 = vunpack.c.l.b16 %v3152
      %v3189 = vunpack.c.l.b16 %v3153
      %v3190 = vunpack.c.l.b16 %v3154
      %v3191 = vunpack.c.l.b16 %v3155
      %v3192 = vunpack.c.l.b16 %v3156
      %v3193 = vunpack.c.l.b16 %v3157
      %v3194 = vunpack.c.l.b16 %v3158
      %v3195 = vpack.c.b16 %v3180, %v3179
      %v3196 = vpack.c.b16 %v3182, %v3181
      %v3197 = vpack.c.b16 %v3184, %v3183
      %v3198 = vpack.c.b16 %v3186, %v3185
      %v3199 = vpack.c.b16 %v3188, %v3187
      %v3200 = vpack.c.b16 %v3190, %v3189
      %v3201 = vpack.c.b16 %v3192, %v3191
      %v3202 = vpack.c.b16 %v3194, %v3193
      %3211 = vmatprep.subr.bf16.mxu0 0
      %3212 = vmatpush1.bf16.msra.mxu0 %v3195
      %3213 = vmatprep.subr.bf16.mxu0 0
      %3214 = vmatpush1.bf16.msra.mxu0 %v3196
      %3215 = vmatprep.subr.bf16.mxu0 0
      %3216 = vmatpush1.bf16.msra.mxu0 %v3197
      %3217 = vmatprep.subr.bf16.mxu0 0
      %3218 = vmatpush1.bf16.msra.mxu0 %v3198
      %3219 = vmatprep.subr.bf16.mxu0 0
      %3220 = vmatpush1.bf16.msra.mxu0 %v3199
      %3221 = vmatprep.subr.bf16.mxu0 0
      %3222 = vmatpush1.bf16.msra.mxu0 %v3200
      %3223 = vmatprep.subr.bf16.mxu0 0
      %3224 = vmatpush1.bf16.msra.mxu0 %v3201
      %3225 = vmatprep.subr.bf16.mxu0 0
      %3226 = vmatpush1.bf16.msra.mxu0 %v3202
      %3227 = vmatprep.subr.bf16.mxu0 0
      %3228 = vmatpush1.bf16.msra.mxu0 0
      %3229 = vmatprep.subr.bf16.mxu0 0
      %3230 = vmatpush1.bf16.msra.mxu0 0
      %3231 = vmatprep.subr.bf16.mxu0 0
      %3232 = vmatpush1.bf16.msra.mxu0 0
      %3233 = vmatprep.subr.bf16.mxu0 0
      %3234 = vmatpush1.bf16.msra.mxu0 0
      %3235 = vmatprep.subr.bf16.mxu0 0
      %3236 = vmatpush1.bf16.msra.mxu0 0
      %3237 = vmatprep.subr.bf16.mxu0 0
      %3238 = vmatpush1.bf16.msra.mxu0 0
      %3239 = vmatprep.subr.bf16.mxu0 0
      %3240 = vmatpush1.bf16.msra.mxu0 0
      %3241 = vmatprep.subr.bf16.mxu0 0
      %3242 = vmatpush1.bf16.msra.mxu0 0
      %3243 = vmatprep.mubr.bf16.mxu0 0
      %3244 = vmatmul.mubr.bf16.gmra.mrb[0].mxu0 %v1559
      %v3245 = vpop.f32.mrb[0].mxu0
      %v3246 = vadd.f32 0.0, %v3245
      %v3247 = vpop.f32.mrb[0].mxu0
      %v3248 = vpop.f32.mrb[0].mxu0
      %v3249 = vadd.f32 0.0, %v3248
      %v3250 = vpop.f32.mrb[0].mxu0
      %3251 = vmatprep.mubr.bf16.mxu0 0
      %3252 = vmatmul.mubr.bf16.gmra.mrb[0].mxu0 %v1560
      %v3253 = vpop.f32.mrb[0].mxu0
      %v3254 = vadd.f32 0.0, %v3253
      %v3255 = vpop.f32.mrb[0].mxu0
      %v3256 = vpop.f32.mrb[0].mxu0
      %v3257 = vadd.f32 0.0, %v3256
      %v3258 = vpop.f32.mrb[0].mxu0
      %3259 = vmatprep.mubr.bf16.mxu0 0
      %3260 = vmatmul.mubr.bf16.gmra.mrb[0].mxu0 %v1561
      %v3261 = vpop.f32.mrb[0].mxu0
      %v3262 = vadd.f32 0.0, %v3261
      %v3263 = vpop.f32.mrb[0].mxu0
      %v3264 = vpop.f32.mrb[0].mxu0
      %v3265 = vadd.f32 0.0, %v3264
      %v3266 = vpop.f32.mrb[0].mxu0
      %3267 = vmatprep.mubr.bf16.mxu0 0
      %3268 = vmatmul.mubr.bf16.gmra.mrb[0].mxu0 %v1562
      %v3269 = vpop.f32.mrb[0].mxu0
      %v3270 = vadd.f32 0.0, %v3269
      %v3271 = vpop.f32.mrb[0].mxu0
      %v3272 = vpop.f32.mrb[0].mxu0
      %v3273 = vadd.f32 0.0, %v3272
      %v3274 = vpop.f32.mrb[0].mxu0
      %3275 = vmatprep.mubr.bf16.mxu0 0
      %3276 = vmatmul.mubr.bf16.gmra.mrb[0].mxu0 %v1563
      %v3277 = vpop.f32.mrb[0].mxu0
      %v3278 = vadd.f32 0.0, %v3277
      %v3279 = vpop.f32.mrb[0].mxu0
      %v3280 = vpop.f32.mrb[0].mxu0
      %v3281 = vadd.f32 0.0, %v3280
      %v3282 = vpop.f32.mrb[0].mxu0
      %3283 = vmatprep.mubr.bf16.mxu0 0
      %3284 = vmatmul.mubr.bf16.gmra.mrb[0].mxu0 %v1564
      %v3285 = vpop.f32.mrb[0].mxu0
      %v3286 = vadd.f32 0.0, %v3285
      %v3287 = vpop.f32.mrb[0].mxu0
      %v3288 = vpop.f32.mrb[0].mxu0
      %v3289 = vadd.f32 0.0, %v3288
      %v3290 = vpop.f32.mrb[0].mxu0
      %3291 = vmatprep.mubr.bf16.mxu0 0
      %3292 = vmatmul.mubr.bf16.gmra.mrb[0].mxu0 %v1565
      %v3293 = vpop.f32.mrb[0].mxu0
      %v3294 = vadd.f32 0.0, %v3293
      %v3295 = vpop.f32.mrb[0].mxu0
      %v3296 = vpop.f32.mrb[0].mxu0
      %v3297 = vadd.f32 0.0, %v3296
      %v3298 = vpop.f32.mrb[0].mxu0
      %3299 = vmatprep.mubr.bf16.mxu0 0
      %3300 = vmatmul.mubr.bf16.gmra.mrb[0].mxu0 %v1566
      %v3301 = vpop.f32.mrb[0].mxu0
      %v3302 = vadd.f32 0.0, %v3301
      %v3303 = vpop.f32.mrb[0].mxu0
      %v3304 = vpop.f32.mrb[0].mxu0
      %v3305 = vadd.f32 0.0, %v3304
      %v3306 = vpop.f32.mrb[0].mxu0
      %3307 = vmatprep.mubr.bf16.mxu0 0
      %3308 = vmatmul.mubr.bf16.gmra.mrb[0].mxu0 %v1567
      %v3309 = vpop.f32.mrb[0].mxu0
      %v3310 = vadd.f32 0.0, %v3309
      %v3311 = vpop.f32.mrb[0].mxu0
      %v3312 = vpop.f32.mrb[0].mxu0
      %v3313 = vadd.f32 0.0, %v3312
      %v3314 = vpop.f32.mrb[0].mxu0
      %3315 = vmatprep.mubr.bf16.mxu0 0
      %3316 = vmatmul.mubr.bf16.gmra.mrb[0].mxu0 %v1568
      %v3317 = vpop.f32.mrb[0].mxu0
      %v3318 = vadd.f32 0.0, %v3317
      %v3319 = vpop.f32.mrb[0].mxu0
      %v3320 = vpop.f32.mrb[0].mxu0
      %v3321 = vadd.f32 0.0, %v3320
      %v3322 = vpop.f32.mrb[0].mxu0
      %3323 = vmatprep.mubr.bf16.mxu0 0
      %3324 = vmatmul.mubr.bf16.gmra.mrb[0].mxu0 %v1569
      %v3325 = vpop.f32.mrb[0].mxu0
      %v3326 = vadd.f32 0.0, %v3325
      %v3327 = vpop.f32.mrb[0].mxu0
      %v3328 = vpop.f32.mrb[0].mxu0
      %v3329 = vadd.f32 0.0, %v3328
      %v3330 = vpop.f32.mrb[0].mxu0
      %3331 = vmatprep.mubr.bf16.mxu0 0
      %3332 = vmatmul.mubr.bf16.gmra.mrb[0].mxu0 %v1570
      %v3333 = vpop.f32.mrb[0].mxu0
      %v3334 = vadd.f32 0.0, %v3333
      %v3335 = vpop.f32.mrb[0].mxu0
      %v3336 = vpop.f32.mrb[0].mxu0
      %v3337 = vadd.f32 0.0, %v3336
      %v3338 = vpop.f32.mrb[0].mxu0
      %3339 = vmatprep.mubr.bf16.mxu0 0
      %3340 = vmatmul.mubr.bf16.gmra.mrb[0].mxu0 %v1571
      %v3341 = vpop.f32.mrb[0].mxu0
      %v3342 = vadd.f32 0.0, %v3341
      %v3343 = vpop.f32.mrb[0].mxu0
      %v3344 = vpop.f32.mrb[0].mxu0
      %v3345 = vadd.f32 0.0, %v3344
      %v3346 = vpop.f32.mrb[0].mxu0
      %3347 = vmatprep.mubr.bf16.mxu0 0
      %3348 = vmatmul.mubr.bf16.gmra.mrb[0].mxu0 %v1572
      %v3349 = vpop.f32.mrb[0].mxu0
      %v3350 = vadd.f32 0.0, %v3349
      %v3351 = vpop.f32.mrb[0].mxu0
      %v3352 = vpop.f32.mrb[0].mxu0
      %v3353 = vadd.f32 0.0, %v3352
      %v3354 = vpop.f32.mrb[0].mxu0
      %3355 = vmatprep.mubr.bf16.mxu0 0
      %3356 = vmatmul.mubr.bf16.gmra.mrb[0].mxu0 %v2342
      %v3357 = vpop.f32.mrb[0].mxu0
      %v3358 = vadd.f32 0.0, %v3357
      %v3359 = vpop.f32.mrb[0].mxu0
      %v3360 = vpop.f32.mrb[0].mxu0
      %v3361 = vadd.f32 0.0, %v3360
      %v3362 = vpop.f32.mrb[0].mxu0
      %3363 = vmatprep.mubr.bf16.mxu0 0
      %3364 = vmatmul.mubr.bf16.gmra.mrb[0].mxu0 %v3161
      %v3365 = vpop.f32.mrb[0].mxu0
      %v3366 = vadd.f32 0.0, %v3365
      %v3367 = vpop.f32.mrb[0].mxu0
      %v3368 = vpop.f32.mrb[0].mxu0
      %v3369 = vadd.f32 0.0, %v3368
      %v3370 = vpop.f32.mrb[0].mxu0
      %3371 = vdwg.mxu0
      %v3372 = vadd.f32 %v3016, %v3246
      %v3373 = vadd.f32 %v3019, %v3249
      %v3374 = vadd.f32 %v3024, %v3254
      %v3375 = vadd.f32 %v3027, %v3257
      %v3376 = vadd.f32 %v3032, %v3262
      %v3377 = vadd.f32 %v3035, %v3265
      %v3378 = vadd.f32 %v3040, %v3270
      %v3379 = vadd.f32 %v3043, %v3273
      %v3380 = vadd.f32 %v3048, %v3278
      %v3381 = vadd.f32 %v3051, %v3281
      %v3382 = vadd.f32 %v3056, %v3286
      %v3383 = vadd.f32 %v3059, %v3289
      %v3384 = vadd.f32 %v3064, %v3294
      %v3385 = vadd.f32 %v3067, %v3297
      %v3386 = vadd.f32 %v3072, %v3302
      %v3387 = vadd.f32 %v3075, %v3305
      %v3388 = vadd.f32 %v3080, %v3310
      %v3389 = vadd.f32 %v3083, %v3313
      %v3390 = vadd.f32 %v3088, %v3318
      %v3391 = vadd.f32 %v3091, %v3321
      %v3392 = vadd.f32 %v3096, %v3326
      %v3393 = vadd.f32 %v3099, %v3329
      %v3394 = vadd.f32 %v3104, %v3334
      %v3395 = vadd.f32 %v3107, %v3337
      %v3396 = vadd.f32 %v3112, %v3342
      %v3397 = vadd.f32 %v3115, %v3345
      %v3398 = vadd.f32 %v3120, %v3350
      %v3399 = vadd.f32 %v3123, %v3353
      %v3400 = vadd.f32 %v3128, %v3358
      %v3401 = vadd.f32 %v3131, %v3361
      %v3402 = vadd.f32 %v3136, %v3366
      %v3403 = vadd.f32 %v3139, %v3369
      %v3404 = vld [vmem:[#allocation2] sm:$0xff]
      %v3405 = vld [vmem:[#allocation2 + $0x8] sm:$0xff]
      %v3406 = vld [vmem:[#allocation2 + $0x10] sm:$0xff]
      %v3407 = vld [vmem:[#allocation2 + $0x18] sm:$0xff]
      %v3408 = vld [vmem:[#allocation2 + $0x20] sm:$0xff]
      %v3409 = vld [vmem:[#allocation2 + $0x28] sm:$0xff]
      %v3410 = vld [vmem:[#allocation2 + $0x30] sm:$0xff]
      %v3411 = vld [vmem:[#allocation2 + $0x38] sm:$0xff]
      %v3412 = vld [vmem:[#allocation2 + $0x40] sm:$0xff]
      %v3413 = vld [vmem:[#allocation2 + $0x48] sm:$0xff]
      %v3414 = vld [vmem:[#allocation2 + $0x50] sm:$0xff]
      %v3415 = vld [vmem:[#allocation2 + $0x58] sm:$0xff]
      %v3416 = vld [vmem:[#allocation2 + $0x60] sm:$0xff]
      %v3417 = vld [vmem:[#allocation2 + $0x68] sm:$0xff]
      %v3418 = vld [vmem:[#allocation2 + $0x70] sm:$0xff]
      %v3419 = vld [vmem:[#allocation2 + $0x78] sm:$0xff]
      %v3420 = vld [vmem:[#allocation2 + $0x80] sm:$0xff]
      %v3421 = vld [vmem:[#allocation2 + $0x88] sm:$0xff]
      %v3422 = vld [vmem:[#allocation2 + $0x90] sm:$0xff]
      %v3423 = vld [vmem:[#allocation2 + $0x98] sm:$0xff]
      %v3424 = vld [vmem:[#allocation2 + $0xa0] sm:$0xff]
      %v3425 = vld [vmem:[#allocation2 + $0xa8] sm:$0xff]
      %v3426 = vld [vmem:[#allocation2 + $0xb0] sm:$0xff]
      %v3427 = vld [vmem:[#allocation2 + $0xb8] sm:$0xff]
      %v3428 = vld [vmem:[#allocation2 + $0xc0] sm:$0xff]
      %v3429 = vld [vmem:[#allocation2 + $0xc8] sm:$0xff]
      %v3430 = vld [vmem:[#allocation2 + $0xd0] sm:$0xff]
      %v3431 = vld [vmem:[#allocation2 + $0xd8] sm:$0xff]
      %v3432 = vld [vmem:[#allocation2 + $0xe0] sm:$0xff]
      %v3433 = vld [vmem:[#allocation2 + $0xe8] sm:$0xff]
      %v3434 = vld [vmem:[#allocation2 + $0xf0] sm:$0xff]
      %v3435 = vld [vmem:[#allocation2 + $0xf8] sm:$0xff]
      %v3436 = vadd.f32 %v3404, %v3372
      %v3437 = vadd.f32 %v3405, %v3373
      %v3438 = vadd.f32 %v3406, %v3374
      %v3439 = vadd.f32 %v3407, %v3375
      %v3440 = vadd.f32 %v3408, %v3376
      %v3441 = vadd.f32 %v3409, %v3377
      %v3442 = vadd.f32 %v3410, %v3378
      %v3443 = vadd.f32 %v3411, %v3379
      %v3444 = vadd.f32 %v3412, %v3380
      %v3445 = vadd.f32 %v3413, %v3381
      %v3446 = vadd.f32 %v3414, %v3382
      %v3447 = vadd.f32 %v3415, %v3383
      %v3448 = vadd.f32 %v3416, %v3384
      %v3449 = vadd.f32 %v3417, %v3385
      %v3450 = vadd.f32 %v3418, %v3386
      %v3451 = vadd.f32 %v3419, %v3387
      %v3452 = vadd.f32 %v3420, %v3388
      %v3453 = vadd.f32 %v3421, %v3389
      %v3454 = vadd.f32 %v3422, %v3390
      %v3455 = vadd.f32 %v3423, %v3391
      %v3456 = vadd.f32 %v3424, %v3392
      %v3457 = vadd.f32 %v3425, %v3393
      %v3458 = vadd.f32 %v3426, %v3394
      %v3459 = vadd.f32 %v3427, %v3395
      %v3460 = vadd.f32 %v3428, %v3396
      %v3461 = vadd.f32 %v3429, %v3397
      %v3462 = vadd.f32 %v3430, %v3398
      %v3463 = vadd.f32 %v3431, %v3399
      %v3464 = vadd.f32 %v3432, %v3400
      %v3465 = vadd.f32 %v3433, %v3401
      %v3466 = vadd.f32 %v3434, %v3402
      %v3467 = vadd.f32 %v3435, %v3403
      %3468 = vst [vmem:[#allocation2] sm:$0xff] %v3436
      %3469 = vst [vmem:[#allocation2 + $0x8] sm:$0xff] %v3437
      %3470 = vst [vmem:[#allocation2 + $0x10] sm:$0xff] %v3438
      %3471 = vst [vmem:[#allocation2 + $0x18] sm:$0xff] %v3439
      %3472 = vst [vmem:[#allocation2 + $0x20] sm:$0xff] %v3440
      %3473 = vst [vmem:[#allocation2 + $0x28] sm:$0xff] %v3441
      %3474 = vst [vmem:[#allocation2 + $0x30] sm:$0xff] %v3442
      %3475 = vst [vmem:[#allocation2 + $0x38] sm:$0xff] %v3443
      %3476 = vst [vmem:[#allocation2 + $0x40] sm:$0xff] %v3444
      %3477 = vst [vmem:[#allocation2 + $0x48] sm:$0xff] %v3445
      %3478 = vst [vmem:[#allocation2 + $0x50] sm:$0xff] %v3446
      %3479 = vst [vmem:[#allocation2 + $0x58] sm:$0xff] %v3447
      %3480 = vst [vmem:[#allocation2 + $0x60] sm:$0xff] %v3448
      %3481 = vst [vmem:[#allocation2 + $0x68] sm:$0xff] %v3449
      %3482 = vst [vmem:[#allocation2 + $0x70] sm:$0xff] %v3450
      %3483 = vst [vmem:[#allocation2 + $0x78] sm:$0xff] %v3451
      %3484 = vst [vmem:[#allocation2 + $0x80] sm:$0xff] %v3452
      %3485 = vst [vmem:[#allocation2 + $0x88] sm:$0xff] %v3453
      %3486 = vst [vmem:[#allocation2 + $0x90] sm:$0xff] %v3454
      %3487 = vst [vmem:[#allocation2 + $0x98] sm:$0xff] %v3455
      %3488 = vst [vmem:[#allocation2 + $0xa0] sm:$0xff] %v3456
      %3489 = vst [vmem:[#allocation2 + $0xa8] sm:$0xff] %v3457
      %3490 = vst [vmem:[#allocation2 + $0xb0] sm:$0xff] %v3458
      %3491 = vst [vmem:[#allocation2 + $0xb8] sm:$0xff] %v3459
      %3492 = vst [vmem:[#allocation2 + $0xc0] sm:$0xff] %v3460
      %3493 = vst [vmem:[#allocation2 + $0xc8] sm:$0xff] %v3461
      %3494 = vst [vmem:[#allocation2 + $0xd0] sm:$0xff] %v3462
      %3495 = vst [vmem:[#allocation2 + $0xd8] sm:$0xff] %v3463
      %3496 = vst [vmem:[#allocation2 + $0xe0] sm:$0xff] %v3464
      %3497 = vst [vmem:[#allocation2 + $0xe8] sm:$0xff] %v3465
      %3498 = vst [vmem:[#allocation2 + $0xf0] sm:$0xff] %v3466
      %3499 = vst [vmem:[#allocation2 + $0xf8] sm:$0xff] %v3467
      %v3500 = vld [vmem:[#allocation2] sm:$0xff]
      %v3501 = vld [vmem:[#allocation2 + $0x8] sm:$0xff]
      %v3502 = vld [vmem:[#allocation2 + $0x10] sm:$0xff]
      %v3503 = vld [vmem:[#allocation2 + $0x18] sm:$0xff]
      %v3504 = vld [vmem:[#allocation2 + $0x20] sm:$0xff]
      %v3505 = vld [vmem:[#allocation2 + $0x28] sm:$0xff]
      %v3506 = vld [vmem:[#allocation2 + $0x30] sm:$0xff]
      %v3507 = vld [vmem:[#allocation2 + $0x38] sm:$0xff]
      %v3508 = vld [vmem:[#allocation2 + $0x40] sm:$0xff]
      %v3509 = vld [vmem:[#allocation2 + $0x48] sm:$0xff]
      %v3510 = vld [vmem:[#allocation2 + $0x50] sm:$0xff]
      %v3511 = vld [vmem:[#allocation2 + $0x58] sm:$0xff]
      %v3512 = vld [vmem:[#allocation2 + $0x60] sm:$0xff]
      %v3513 = vld [vmem:[#allocation2 + $0x68] sm:$0xff]
      %v3514 = vld [vmem:[#allocation2 + $0x70] sm:$0xff]
      %v3515 = vld [vmem:[#allocation2 + $0x78] sm:$0xff]
      %v3516 = vld [vmem:[#allocation2 + $0x80] sm:$0xff]
      %v3517 = vld [vmem:[#allocation2 + $0x88] sm:$0xff]
      %v3518 = vld [vmem:[#allocation2 + $0x90] sm:$0xff]
      %v3519 = vld [vmem:[#allocation2 + $0x98] sm:$0xff]
      %v3520 = vld [vmem:[#allocation2 + $0xa0] sm:$0xff]
      %v3521 = vld [vmem:[#allocation2 + $0xa8] sm:$0xff]
      %v3522 = vld [vmem:[#allocation2 + $0xb0] sm:$0xff]
      %v3523 = vld [vmem:[#allocation2 + $0xb8] sm:$0xff]
      %v3524 = vld [vmem:[#allocation2 + $0xc0] sm:$0xff]
      %v3525 = vld [vmem:[#allocation2 + $0xc8] sm:$0xff]
      %v3526 = vld [vmem:[#allocation2 + $0xd0] sm:$0xff]
      %v3527 = vld [vmem:[#allocation2 + $0xd8] sm:$0xff]
      %v3528 = vld [vmem:[#allocation2 + $0xe0] sm:$0xff]
      %v3529 = vld [vmem:[#allocation2 + $0xe8] sm:$0xff]
      %v3530 = vld [vmem:[#allocation2 + $0xf0] sm:$0xff]
      %v3531 = vld [vmem:[#allocation2 + $0xf8] sm:$0xff]
      %v3532 = vld [vmem:[%s213] sm:$0x1]
      %v3534 = vlaneseq
      %v3535 = vshrl.u32 %v3534, 7
      %v3536 = vsub.s32 0, %v3535
      %v3537 = vrot.slane %v3532, %v3536
      %v3539 = vadd.f32 %v3500, %v3537
      %v3540 = vadd.f32 %v3501, %v3537
      %v3541 = vadd.f32 %v3502, %v3537
      %v3542 = vadd.f32 %v3503, %v3537
      %v3543 = vadd.f32 %v3504, %v3537
      %v3544 = vadd.f32 %v3505, %v3537
      %v3545 = vadd.f32 %v3506, %v3537
      %v3546 = vadd.f32 %v3507, %v3537
      %v3547 = vadd.f32 %v3508, %v3537
      %v3548 = vadd.f32 %v3509, %v3537
      %v3549 = vadd.f32 %v3510, %v3537
      %v3550 = vadd.f32 %v3511, %v3537
      %v3551 = vadd.f32 %v3512, %v3537
      %v3552 = vadd.f32 %v3513, %v3537
      %v3553 = vadd.f32 %v3514, %v3537
      %v3554 = vadd.f32 %v3515, %v3537
      %v3555 = vadd.f32 %v3516, %v3537
      %v3556 = vadd.f32 %v3517, %v3537
      %v3557 = vadd.f32 %v3518, %v3537
      %v3558 = vadd.f32 %v3519, %v3537
      %v3559 = vadd.f32 %v3520, %v3537
      %v3560 = vadd.f32 %v3521, %v3537
      %v3561 = vadd.f32 %v3522, %v3537
      %v3562 = vadd.f32 %v3523, %v3537
      %v3563 = vadd.f32 %v3524, %v3537
      %v3564 = vadd.f32 %v3525, %v3537
      %v3565 = vadd.f32 %v3526, %v3537
      %v3566 = vadd.f32 %v3527, %v3537
      %v3567 = vadd.f32 %v3528, %v3537
      %v3568 = vadd.f32 %v3529, %v3537
      %v3569 = vadd.f32 %v3530, %v3537
      %v3570 = vadd.f32 %v3531, %v3537
      %v3571 = vmax.f32 %v3539, 0.0
      %v3572 = vmax.f32 %v3540, 0.0
      %v3573 = vmax.f32 %v3541, 0.0
      %v3574 = vmax.f32 %v3542, 0.0
      %v3575 = vmax.f32 %v3543, 0.0
      %v3576 = vmax.f32 %v3544, 0.0
      %v3577 = vmax.f32 %v3545, 0.0
      %v3578 = vmax.f32 %v3546, 0.0
      %v3579 = vmax.f32 %v3547, 0.0
      %v3580 = vmax.f32 %v3548, 0.0
      %v3581 = vmax.f32 %v3549, 0.0
      %v3582 = vmax.f32 %v3550, 0.0
      %v3583 = vmax.f32 %v3551, 0.0
      %v3584 = vmax.f32 %v3552, 0.0
      %v3585 = vmax.f32 %v3553, 0.0
      %v3586 = vmax.f32 %v3554, 0.0
      %v3587 = vmax.f32 %v3555, 0.0
      %v3588 = vmax.f32 %v3556, 0.0
      %v3589 = vmax.f32 %v3557, 0.0
      %v3590 = vmax.f32 %v3558, 0.0
      %v3591 = vmax.f32 %v3559, 0.0
      %v3592 = vmax.f32 %v3560, 0.0
      %v3593 = vmax.f32 %v3561, 0.0
      %v3594 = vmax.f32 %v3562, 0.0
      %v3595 = vmax.f32 %v3563, 0.0
      %v3596 = vmax.f32 %v3564, 0.0
      %v3597 = vmax.f32 %v3565, 0.0
      %v3598 = vmax.f32 %v3566, 0.0
      %v3599 = vmax.f32 %v3567, 0.0
      %v3600 = vmax.f32 %v3568, 0.0
      %v3601 = vmax.f32 %v3569, 0.0
      %v3602 = vmax.f32 %v3570, 0.0
      %v3603 = vpack.c.bf16 %v3572, %v3571
      %v3604 = vpack.c.bf16 %v3574, %v3573
      %v3605 = vpack.c.bf16 %v3576, %v3575
      %v3606 = vpack.c.bf16 %v3578, %v3577
      %v3607 = vpack.c.bf16 %v3580, %v3579
      %v3608 = vpack.c.bf16 %v3582, %v3581
      %v3609 = vpack.c.bf16 %v3584, %v3583
      %v3610 = vpack.c.bf16 %v3586, %v3585
      %v3611 = vpack.c.bf16 %v3588, %v3587
      %v3612 = vpack.c.bf16 %v3590, %v3589
      %v3613 = vpack.c.bf16 %v3592, %v3591
      %v3614 = vpack.c.bf16 %v3594, %v3593
      %v3615 = vpack.c.bf16 %v3596, %v3595
      %v3616 = vpack.c.bf16 %v3598, %v3597
      %v3617 = vpack.c.bf16 %v3600, %v3599
      %v3618 = vpack.c.bf16 %v3602, %v3601
      %v3635 = vunpack.c.l.b16 %v3603
      %v3636 = vunpack.c.h.b16 %v3603
      %v3637 = vunpack.c.l.b16 %v3604
      %v3638 = vunpack.c.h.b16 %v3604
      %v3639 = vunpack.c.l.b16 %v3605
      %v3640 = vunpack.c.h.b16 %v3605
      %v3641 = vunpack.c.l.b16 %v3606
      %v3642 = vunpack.c.h.b16 %v3606
      %v3643 = vunpack.c.l.b16 %v3607
      %v3644 = vunpack.c.h.b16 %v3607
      %v3645 = vunpack.c.l.b16 %v3608
      %v3646 = vunpack.c.h.b16 %v3608
      %v3647 = vunpack.c.l.b16 %v3609
      %v3648 = vunpack.c.h.b16 %v3609
      %v3649 = vunpack.c.l.b16 %v3610
      %v3650 = vunpack.c.h.b16 %v3610
      %v3651 = vunpack.c.l.b16 %v3611
      %v3652 = vunpack.c.h.b16 %v3611
      %v3653 = vunpack.c.l.b16 %v3612
      %v3654 = vunpack.c.h.b16 %v3612
      %v3655 = vunpack.c.l.b16 %v3613
      %v3656 = vunpack.c.h.b16 %v3613
      %v3657 = vunpack.c.l.b16 %v3614
      %v3658 = vunpack.c.h.b16 %v3614
      %v3659 = vunpack.c.l.b16 %v3615
      %v3660 = vunpack.c.h.b16 %v3615
      %v3661 = vunpack.c.l.b16 %v3616
      %v3662 = vunpack.c.h.b16 %v3616
      %v3663 = vunpack.c.l.b16 %v3617
      %v3664 = vunpack.c.h.b16 %v3617
      %v3665 = vunpack.c.l.b16 %v3618
      %v3666 = vunpack.c.h.b16 %v3618
      %v3667 = vpack.c.b16 %v3635, %v3635
      %v3668 = vpack.c.b16 %v3636, %v3636
      %v3669 = vpack.c.b16 %v3637, %v3637
      %v3670 = vpack.c.b16 %v3638, %v3638
      %v3671 = vpack.c.b16 %v3639, %v3639
      %v3672 = vpack.c.b16 %v3640, %v3640
      %v3673 = vpack.c.b16 %v3641, %v3641
      %v3674 = vpack.c.b16 %v3642, %v3642
      %v3675 = vpack.c.b16 %v3643, %v3643
      %v3676 = vpack.c.b16 %v3644, %v3644
      %v3677 = vpack.c.b16 %v3645, %v3645
      %v3678 = vpack.c.b16 %v3646, %v3646
      %v3679 = vpack.c.b16 %v3647, %v3647
      %v3680 = vpack.c.b16 %v3648, %v3648
      %v3681 = vpack.c.b16 %v3649, %v3649
      %v3682 = vpack.c.b16 %v3650, %v3650
      %v3683 = vpack.c.b16 %v3651, %v3651
      %v3684 = vpack.c.b16 %v3652, %v3652
      %v3685 = vpack.c.b16 %v3653, %v3653
      %v3686 = vpack.c.b16 %v3654, %v3654
      %v3687 = vpack.c.b16 %v3655, %v3655
      %v3688 = vpack.c.b16 %v3656, %v3656
      %v3689 = vpack.c.b16 %v3657, %v3657
      %v3690 = vpack.c.b16 %v3658, %v3658
      %v3691 = vpack.c.b16 %v3659, %v3659
      %v3692 = vpack.c.b16 %v3660, %v3660
      %v3693 = vpack.c.b16 %v3661, %v3661
      %v3694 = vpack.c.b16 %v3662, %v3662
      %v3695 = vpack.c.b16 %v3663, %v3663
      %v3696 = vpack.c.b16 %v3664, %v3664
      %v3697 = vpack.c.b16 %v3665, %v3665
      %v3698 = vpack.c.b16 %v3666, %v3666
      %3731 = vst [vmem:[%s221] sm:$0xf] %v3667
      %3732 = vst [vmem:[%s221 + $0x4] sm:$0xf] %v3668
      %3733 = vst [vmem:[%s221 + $0x8] sm:$0xf] %v3669
      %3734 = vst [vmem:[%s221 + $0xc] sm:$0xf] %v3670
      %3735 = vst [vmem:[%s221 + $0x10] sm:$0xf] %v3671
      %3736 = vst [vmem:[%s221 + $0x14] sm:$0xf] %v3672
      %3737 = vst [vmem:[%s221 + $0x18] sm:$0xf] %v3673
      %3738 = vst [vmem:[%s221 + $0x1c] sm:$0xf] %v3674
      %3739 = vst [vmem:[%s221 + $0x20] sm:$0xf] %v3675
      %3740 = vst [vmem:[%s221 + $0x24] sm:$0xf] %v3676
      %3741 = vst [vmem:[%s221 + $0x28] sm:$0xf] %v3677
      %3742 = vst [vmem:[%s221 + $0x2c] sm:$0xf] %v3678
      %3743 = vst [vmem:[%s221 + $0x30] sm:$0xf] %v3679
      %3744 = vst [vmem:[%s221 + $0x34] sm:$0xf] %v3680
      %3745 = vst [vmem:[%s221 + $0x38] sm:$0xf] %v3681
      %3746 = vst [vmem:[%s221 + $0x3c] sm:$0xf] %v3682
      %3747 = vst [vmem:[%s221 + $0x40] sm:$0xf] %v3683
      %3748 = vst [vmem:[%s221 + $0x44] sm:$0xf] %v3684
      %3749 = vst [vmem:[%s221 + $0x48] sm:$0xf] %v3685
      %3750 = vst [vmem:[%s221 + $0x4c] sm:$0xf] %v3686
      %3751 = vst [vmem:[%s221 + $0x50] sm:$0xf] %v3687
      %3752 = vst [vmem:[%s221 + $0x54] sm:$0xf] %v3688
      %3753 = vst [vmem:[%s221 + $0x58] sm:$0xf] %v3689
      %3754 = vst [vmem:[%s221 + $0x5c] sm:$0xf] %v3690
      %3755 = vst [vmem:[%s221 + $0x60] sm:$0xf] %v3691
      %3756 = vst [vmem:[%s221 + $0x64] sm:$0xf] %v3692
      %3757 = vst [vmem:[%s221 + $0x68] sm:$0xf] %v3693
      %3758 = vst [vmem:[%s221 + $0x6c] sm:$0xf] %v3694
      %3759 = vst [vmem:[%s221 + $0x70] sm:$0xf] %v3695
      %3760 = vst [vmem:[%s221 + $0x74] sm:$0xf] %v3696
      %3761 = vst [vmem:[%s221 + $0x78] sm:$0xf] %v3697
      %3762 = vst [vmem:[%s221 + $0x7c] sm:$0xf] %v3698
      %p3763 = scmp.lt.s32.totalorder %s18, 1
      %s3764 = scalar_select %p3763, %s18, 1
      %p3765 = scmp.lt.s32.totalorder %s19, 0
      %s3766 = scalar_select %p3765, %s19, 0
      %s3767 = smul.addr %s3764, 32
      %s3768 = sadd.s32 %s3766, %s3767
      %s3769 = smul.addr %s3768, 4
      %s3770 = scalar_lea.vmem %s3, %s3769
      // Predicated region
      $region33: #{bottleneck_forward.4} parent=31 // pred_check
        %p3771 = pneg %p124
      $region34: #{bottleneck_forward.4} parent=31 // pred_check_branch
        %3773 = sbr.rel (%p3771) target = $region36
      $region35: #{bottleneck_forward.4} parent=31 // pred_region
        _
      $region36: #{bottleneck_forward.4} parent=31 // pred_fallthru
        _
    $region32: #{bottleneck_forward.4} parent=5 // pred_fallthru
      _
    %p3774 = scmp.le.s32.totalorder 2, %s9
    // Predicated region
    $region37: #{bottleneck_forward.4} parent=5 // pred_check
      %p3775 = pneg %p3774
    $region38: #{bottleneck_forward.4} parent=5 // pred_check_branch
      %3777 = sbr.rel (%p3775) target = $region40
    $region39: #{bottleneck_forward.4} parent=5 // pred_region
      %s3778 = ssub.s32 %s9, 2
      // Predicated region
      $region41: #{bottleneck_forward.4} parent=39 // pred_check
        %p3779 = pneg %p130
      $region42: #{bottleneck_forward.4} parent=39 // pred_check_branch
        %3781 = sbr.rel (%p3779) target = $region44
      $region43: #{bottleneck_forward.4} parent=39 // pred_region
        %p3782 = scmp.lt.s32.totalorder %s20, 1
        %s3783 = scalar_select %p3782, %s20, 1
        %p3784 = scmp.lt.s32.totalorder %s21, 0
        %s3785 = scalar_select %p3784, %s21, 0
        %s3786 = smul.addr %s3783, 32
        %s3787 = sadd.s32 %s3785, %s3786
        %s3788 = smul.addr %s3787, 4
        %s3789 = scalar_lea.vmem %s3, %s3788
      $region44: #{bottleneck_forward.4} parent=39 // pred_fallthru
        _
    $region40: #{bottleneck_forward.4} parent=5 // pred_fallthru
      _
  $region6: #{bottleneck_forward.4} parent=0 // loop_footer
    %s13 = sadd.s32 1, %s9
  $region7: #{bottleneck_forward.4} parent=0 // loop_footer_branch
    %8 = sbr.rel target = $region3
  $region8: #{bottleneck_forward.4} parent=0 // loop_exit
    _

</llo_original>
